<compile_context>
chip_gen: v7x
topology: tpu7x:2x2x1
jax: 0.10.0
libtpu: 0.0.40
codegen_flags: <defaults>
</compile_context>

<pallas_src>
import jax
import jax.numpy as jnp
from jax import lax
from jax.experimental import pallas as pl
from jax.experimental.pallas import tpu as pltpu


def _round_up(n, m):
    return (n + m - 1) // m * m


# --------------------------------------------------------------------------
# Kernel
# --------------------------------------------------------------------------
def _bilstm_kernel(xf_ref,   # (TC, BT, D)  bf16  forward time chunk
                   xb_ref,   # (TC, BT, D)  bf16  backward time chunk (chunk n-1-t)
                   wif_ref,  # (D, G)       bf16  input weights, fwd gate columns
                   wib_ref,  # (D, G)       bf16  input weights, bwd gate columns
                   whh_ref,  # (2*Hp, G)    bf16  block-diag recurrent weights
                   b_ref,    # (1, G)       f32   folded biases (both dirs)
                   out_ref,  # (BT, 2*Hp)   f32   [h_fwd final | h_bwd final]
                   xpf_ref,  # (TC*BT, G)   f32   scratch: fwd gate inputs
                   xpb_ref,  # (TC*BT, G)   f32   scratch: bwd gate inputs
                   h_ref,    # (BT, 2*Hp)   f32   scratch: persistent h state
                   c_ref):   # (BT, 2*Hp)   f32   scratch: persistent c state
    t_chunk = pl.program_id(1)
    n_chunks = pl.num_programs(1)
    TC, BT, D = xf_ref.shape
    H2p = out_ref.shape[1]                       # 2*Hp, multiple of 128 lanes

    # ---- per-batch-tile state init at the first time chunk ---------------
    @pl.when(t_chunk == 0)
    def _():
        h_ref[...] = jnp.zeros_like(h_ref)
        c_ref[...] = jnp.zeros_like(c_ref)

    # ---- chunk-level input projection (one MXU matmul per direction) -----
    # Row block s of xpf holds the forward gate inputs of local step s for
    # all BT batch rows; xpb row block s holds the *un-reversed* backward
    # chunk, read at row block (TC-1-s) inside the loop.
    xf2 = xf_ref[...].reshape(TC * BT, D)
    xb2 = xb_ref[...].reshape(TC * BT, D)
    xpf_ref[...] = (jnp.dot(xf2, wif_ref[...],
                            preferred_element_type=jnp.float32) + b_ref[...])
    xpb_ref[...] = jnp.dot(xb2, wib_ref[...],
                           preferred_element_type=jnp.float32)

    w_hh = whh_ref[...]                          # chunk-resident bf16 weights

    # ---- serial recurrence over the chunk, state carried in vregs --------
    def step(s, carry):
        h, c = carry
        frow = pl.multiple_of(s * BT, BT)
        brow = pl.multiple_of((TC - 1 - s) * BT, BT)
        gates = (xpf_ref[pl.ds(frow, BT), :]
                 + xpb_ref[pl.ds(brow, BT), :]
                 + jnp.dot(h.astype(w_hh.dtype), w_hh,
                           preferred_element_type=jnp.float32))   # (BT, G)
        sig = jax.nn.sigmoid(gates[:, :3 * H2p])     # [i | f | o], 128-aligned
        g = jnp.tanh(gates[:, 3 * H2p:])             # [g],        128-aligned
        i = sig[:, 0:H2p]
        f = sig[:, H2p:2 * H2p]
        o = sig[:, 2 * H2p:3 * H2p]
        c = f * c + i * g
        h = o * jnp.tanh(c)
        return h, c

    h, c = lax.fori_loop(0, TC, step, (h_ref[...], c_ref[...]),
                         unroll=min(TC, 8))
    h_ref[...] = h
    c_ref[...] = c

    # ---- emit the concatenated final hidden states ------------------------
    @pl.when(t_chunk == n_chunks - 1)
    def _():
        out_ref[...] = h           # already [h_fwd_final | h_bwd_final]


# --------------------------------------------------------------------------
# Weight repacking (one-time layout plumbing on tiny tensors)
# --------------------------------------------------------------------------
def _pack_fused_weights(params, h_pad):
    D = params["wih_f"].shape[0]
    H = params["whh_f"].shape[0]
    G = 8 * h_pad
    # fused gate order (i, f, o, g) -> PyTorch column block (i, f, g, o)
    torch_block = (0, 1, 3, 2)

    def place(dst, w, direction, row_off):
        rows = w.shape[0]
        for k, tb in enumerate(torch_block):
            col = (2 * k + direction) * h_pad
            dst = dst.at[row_off:row_off + rows, col:col + H].set(
                w[:, tb * H:(tb + 1) * H])
        return dst

    w_in_f = place(jnp.zeros((D, G), jnp.float32), params["wih_f"], 0, 0)
    w_in_b = place(jnp.zeros((D, G), jnp.float32), params["wih_b"], 1, 0)
    w_hh = jnp.zeros((2 * h_pad, G), jnp.float32)
    w_hh = place(w_hh, params["whh_f"], 0, 0)
    w_hh = place(w_hh, params["whh_b"], 1, h_pad)
    bias = jnp.zeros((1, G), jnp.float32)
    bias = place(bias, params["b_f"], 0, 0)
    bias = place(bias, params["b_b"], 1, 0)
    return (w_in_f.astype(jnp.bfloat16), w_in_b.astype(jnp.bfloat16),
            w_hh.astype(jnp.bfloat16), bias)


# --------------------------------------------------------------------------
# Wrapper
# --------------------------------------------------------------------------
def churn_predict_rnn(x, params, *, b_tile=16, t_chunk=8):
    """x: (B, T, D) float32 (batch_first). Returns (B, 2*H)."""
    B, T, D = x.shape
    H = params["whh_f"].shape[0]
    h_pad = _round_up(H, 64)          # 2*h_pad is a multiple of 128 lanes
    G = 8 * h_pad
    H2p = 2 * h_pad

    # Largest time-chunk length that divides T (no masked remainder).
    # TODO(synk): support ragged tails with an in-kernel step mask.
    tc = min(t_chunk, T)
    while T % tc:
        tc -= 1
    n_t = T // tc

    b_pad = _round_up(B, b_tile)
    n_b = b_pad // b_tile

    w_in_f, w_in_b, w_hh, bias = _pack_fused_weights(params, h_pad)

    # Time-major bf16 input (cheap, same-size transform).  No reversed or
    # width-doubled copy is materialized: the backward stream re-reads the
    # same array through its own index_map.
    x_tm = jnp.transpose(x, (1, 0, 2)).astype(jnp.bfloat16)      # (T, B, D)
    x_tm = jnp.pad(x_tm, ((0, 0), (0, b_pad - B), (0, 0)))       # (T, Bp, D)

    x_block = (tc, b_tile, D)
    grid = (n_b, n_t)

    cost = pl.CostEstimate(
        flops=4 * T * b_pad * G * (D + h_pad),
        transcendentals=10 * T * b_pad * h_pad,
        bytes_accessed=(2 * T * b_pad * D * 2                 # two bf16 x streams
                        + (2 * D + 2 * h_pad) * G * 2 + G * 4  # weights + bias
                        + b_pad * H2p * 4))                    # output

    out = pl.pallas_call(
        _bilstm_kernel,
        out_shape=jax.ShapeDtypeStruct((b_pad, H2p), jnp.float32),
        grid=grid,
        in_specs=[
            pl.BlockSpec(x_block, lambda b, t: (t, b, 0)),             # fwd stream
            pl.BlockSpec(x_block, lambda b, t: (n_t - 1 - t, b, 0)),   # bwd stream
            pl.BlockSpec((D, G), lambda b, t: (0, 0)),                 # w_in_f
            pl.BlockSpec((D, G), lambda b, t: (0, 0)),                 # w_in_b
            pl.BlockSpec((H2p, G), lambda b, t: (0, 0)),               # w_hh
            pl.BlockSpec((1, G), lambda b, t: (0, 0)),                 # bias
        ],
        out_specs=pl.BlockSpec((b_tile, H2p), lambda b, t: (b, 0)),
        scratch_shapes=[
            pltpu.VMEM((tc * b_tile, G), jnp.float32),   # fwd gate inputs
            pltpu.VMEM((tc * b_tile, G), jnp.float32),   # bwd gate inputs
            pltpu.VMEM((b_tile, H2p), jnp.float32),      # persistent h
            pltpu.VMEM((b_tile, H2p), jnp.float32),      # persistent c
        ],
        compiler_params=pltpu.CompilerParams(
            dimension_semantics=("parallel", "arbitrary")),
        cost_estimate=cost,
    )(x_tm, x_tm, w_in_f, w_in_b, w_hh, bias)

    # Drop batch / hidden padding: [h_fwd[:H] | h_bwd[:H]].
    return jnp.concatenate([out[:B, 0:H], out[:B, h_pad:h_pad + H]], axis=1)


# --------------------------------------------------------------------------
# Deterministic params + pure-JAX reference (same math as nn.LSTM forward)
# --------------------------------------------------------------------------
def _make_params(key, input_size, hidden_size):
    """PyTorch-style LSTM init: U(-1/sqrt(H), 1/sqrt(H)); gate order i,f,g,o."""
    H, D = hidden_size, input_size
    bound = 1.0 / (H ** 0.5)
    ks = jax.random.split(key, 8)
    u = lambda k, shp: jax.random.uniform(k, shp, jnp.float32, -bound, bound)
    wih_f = u(ks[0], (D, 4 * H))
    whh_f = u(ks[1], (H, 4 * H))
    b_f = u(ks[2], (1, 4 * H)) + u(ks[3], (1, 4 * H))     # b_ih + b_hh
    wih_b = u(ks[4], (D, 4 * H))
    whh_b = u(ks[5], (H, 4 * H))
    b_b = u(ks[6], (1, 4 * H)) + u(ks[7], (1, 4 * H))
    return dict(wih_f=wih_f, whh_f=whh_f, b_f=b_f,
                wih_b=wih_b, whh_b=whh_b, b_b=b_b)


def _reference(x, params, bf16_matmuls):
    """Bidirectional LSTM reference; optionally bf16 matmul operands like the kernel."""
    B, T, D = x.shape
    H = params["whh_f"].shape[0]

    def mm(a, w):
        if bf16_matmuls:
            return jnp.dot(a.astype(jnp.bfloat16), w.astype(jnp.bfloat16),
                           preferred_element_type=jnp.float32)
        return jnp.dot(a, w)

    def run(wih, whh, b, reverse):
        def step(carry, xt):
            h, c = carry
            gates = mm(xt, wih) + mm(h, whh) + b
            i = jax.nn.sigmoid(gates[:, 0 * H:1 * H])
            f = jax.nn.sigmoid(gates[:, 1 * H:2 * H])
            g = jnp.tanh(gates[:, 2 * H:3 * H])
            o = jax.nn.sigmoid(gates[:, 3 * H:4 * H])
            c = f * c + i * g
            h = o * jnp.tanh(c)
            return (h, c), None

        xs = jnp.transpose(x, (1, 0, 2))
        if reverse:
            xs = xs[::-1]
        init = (jnp.zeros((B, H), jnp.float32), jnp.zeros((B, H), jnp.float32))
        (h, _), _ = lax.scan(step, init, xs)
        return h

    h_f = run(params["wih_f"], params["whh_f"], params["b_f"], reverse=False)
    h_b = run(params["wih_b"], params["whh_b"], params["b_b"], reverse=True)
    return jnp.concatenate([h_f, h_b], axis=1)


if __name__ == "__main__":
    # Small demo shapes that still exercise 2 batch tiles x 2 time chunks
    # (plus batch padding: 20 -> 32 with b_tile=16).
    B, T, D, H = 20, 16, 8, 32
    key = jax.random.PRNGKey(0)
    kx, kp = jax.random.split(key)
    x = jax.random.normal(kx, (B, T, D), jnp.float32)
    params = _make_params(kp, D, H)

    out = jax.block_until_ready(churn_predict_rnn(x, params))
    assert out.shape == (B, 2 * H), out.shape

    # Tight check vs. a reference using the same bf16 matmul operands.
    ref_bf16 = jax.block_until_ready(_reference(x, params, bf16_matmuls=True))
    err_bf16 = float(jnp.max(jnp.abs(out - ref_bf16)))
    assert jnp.allclose(out, ref_bf16, rtol=2e-3, atol=2e-3), err_bf16

    # Loose sanity check vs. the full-f32 reference (expected bf16-level gap).
    ref_f32 = jax.block_until_ready(_reference(x, params, bf16_matmuls=False))
    err_f32 = float(jnp.max(jnp.abs(out - ref_f32)))
    assert jnp.allclose(out, ref_f32, rtol=0.0, atol=5e-2), err_f32

    print("KERNEL_OK")
</pallas_src>

<mosaic_0001>
module attributes {stable_mosaic.version = 11 : i64} {
  func.func @_bilstm_kernel(%arg0: i32, %arg1: i32, %arg2: memref<8x16x8xbf16, #tpu.memory_space<vmem>>, %arg3: memref<8x16x8xbf16, #tpu.memory_space<vmem>>, %arg4: memref<8x512xbf16, #tpu.memory_space<vmem>>, %arg5: memref<8x512xbf16, #tpu.memory_space<vmem>>, %arg6: memref<128x512xbf16, #tpu.memory_space<vmem>>, %arg7: memref<1x512xf32, #tpu.memory_space<vmem>>, %arg8: memref<16x128xf32, #tpu.memory_space<vmem>>, %arg9: memref<128x512xf32, #tpu.memory_space<vmem>>, %arg10: memref<128x512xf32, #tpu.memory_space<vmem>>, %arg11: memref<16x128xf32, #tpu.memory_space<vmem>>, %arg12: memref<16x128xf32, #tpu.memory_space<vmem>>) attributes {dimension_semantics = [#tpu.dimension_semantics<parallel>, #tpu.dimension_semantics<arbitrary>], iteration_bounds = array<i64: 2, 2>, scalar_prefetch = 0 : i64, scratch_operands = 4 : i64, tpu.core_type = #tpu.core_type<tc>, window_params = [{transform_indices = @transform_0, window_bounds = array<i64: 8, 16, 8>}, {transform_indices = @transform_1, window_bounds = array<i64: 8, 16, 8>}, {pipeline_mode = #tpu.pipeline_mode<synchronous>, transform_indices = @transform_2, window_bounds = array<i64: 8, 512>}, {pipeline_mode = #tpu.pipeline_mode<synchronous>, transform_indices = @transform_3, window_bounds = array<i64: 8, 512>}, {pipeline_mode = #tpu.pipeline_mode<synchronous>, transform_indices = @transform_4, window_bounds = array<i64: 128, 512>}, {pipeline_mode = #tpu.pipeline_mode<synchronous>, transform_indices = @transform_5, window_bounds = array<i64: 1, 512>}, {transform_indices = @transform_6, window_bounds = array<i64: 16, 128>}]} {
    %c0_i32 = arith.constant 0 : i32
    %0 = arith.cmpi eq, %arg1, %c0_i32 : i32
    %1 = arith.extui %0 : i1 to i32
    %c0_i32_0 = arith.constant 0 : i32
    %2 = arith.cmpi ne, %1, %c0_i32_0 : i32
    scf.if %2 {
      %cst_85 = arith.constant 0.000000e+00 : f32
      %256 = vector.broadcast %cst_85 : f32 to vector<16x128xf32>
      %c0_86 = arith.constant 0 : index
      %c0_87 = arith.constant 0 : index
      %257 = vector.load %arg11[%c0_86, %c0_87] : memref<16x128xf32, #tpu.memory_space<vmem>>, vector<16x128xf32>
      tpu.vector_store %arg11[%c0_86, %c0_87], %256 {strides = array<i32>} : memref<16x128xf32, #tpu.memory_space<vmem>>, vector<16x128xf32>,
      %cst_88 = arith.constant 0.000000e+00 : f32
      %258 = vector.broadcast %cst_88 : f32 to vector<16x128xf32>
      %c0_89 = arith.constant 0 : index
      %c0_90 = arith.constant 0 : index
      %259 = vector.load %arg12[%c0_89, %c0_90] : memref<16x128xf32, #tpu.memory_space<vmem>>, vector<16x128xf32>
      tpu.vector_store %arg12[%c0_89, %c0_90], %258 {strides = array<i32>} : memref<16x128xf32, #tpu.memory_space<vmem>>, vector<16x128xf32>,
    } else {
    }
    %c0 = arith.constant 0 : index
    %c0_1 = arith.constant 0 : index
    %c0_2 = arith.constant 0 : index
    %3 = vector.load %arg2[%c0, %c0_1, %c0_2] : memref<8x16x8xbf16, #tpu.memory_space<vmem>>, vector<8x16x8xbf16>
    %4 = vector.shape_cast %3 : vector<8x16x8xbf16> to vector<128x8xbf16>
    %c0_3 = arith.constant 0 : index
    %c0_4 = arith.constant 0 : index
    %c0_5 = arith.constant 0 : index
    %5 = vector.load %arg3[%c0_3, %c0_4, %c0_5] : memref<8x16x8xbf16, #tpu.memory_space<vmem>>, vector<8x16x8xbf16>
    %6 = vector.shape_cast %5 : vector<8x16x8xbf16> to vector<128x8xbf16>
    %c0_6 = arith.constant 0 : index
    %c0_7 = arith.constant 0 : index
    %7 = vector.load %arg4[%c0_6, %c0_7] : memref<8x512xbf16, #tpu.memory_space<vmem>>, vector<8x512xbf16>
    %cst = arith.constant dense<0.000000e+00> : vector<128x512xf32>
    %8 = tpu.matmul %4, %7, %cst {dimension_numbers = #tpu.dot_dimension_numbers<[1], [0], [0], [1], [0, 0, 1, 1], [], []>} : vector<128x8xbf16>, vector<8x512xbf16>, vector<128x512xf32> -> vector<128x512xf32>
    %c0_8 = arith.constant 0 : index
    %c0_9 = arith.constant 0 : index
    %9 = vector.load %arg7[%c0_8, %c0_9] : memref<1x512xf32, #tpu.memory_space<vmem>>, vector<1x512xf32>
    %10 = vector.broadcast %9 : vector<1x512xf32> to vector<128x512xf32>
    %11 = arith.addf %8, %10 : vector<128x512xf32>
    %c0_10 = arith.constant 0 : index
    %c0_11 = arith.constant 0 : index
    %12 = vector.load %arg9[%c0_10, %c0_11] : memref<128x512xf32, #tpu.memory_space<vmem>>, vector<128x512xf32>
    tpu.vector_store %arg9[%c0_10, %c0_11], %11 {strides = array<i32>} : memref<128x512xf32, #tpu.memory_space<vmem>>, vector<128x512xf32>,
    %c0_12 = arith.constant 0 : index
    %c0_13 = arith.constant 0 : index
    %13 = vector.load %arg5[%c0_12, %c0_13] : memref<8x512xbf16, #tpu.memory_space<vmem>>, vector<8x512xbf16>
    %cst_14 = arith.constant dense<0.000000e+00> : vector<128x512xf32>
    %14 = tpu.matmul %6, %13, %cst_14 {dimension_numbers = #tpu.dot_dimension_numbers<[1], [0], [0], [1], [0, 0, 1, 1], [], []>} : vector<128x8xbf16>, vector<8x512xbf16>, vector<128x512xf32> -> vector<128x512xf32>
    %c0_15 = arith.constant 0 : index
    %c0_16 = arith.constant 0 : index
    %15 = vector.load %arg10[%c0_15, %c0_16] : memref<128x512xf32, #tpu.memory_space<vmem>>, vector<128x512xf32>
    tpu.vector_store %arg10[%c0_15, %c0_16], %14 {strides = array<i32>} : memref<128x512xf32, #tpu.memory_space<vmem>>, vector<128x512xf32>,
    %c0_17 = arith.constant 0 : index
    %c0_18 = arith.constant 0 : index
    %16 = vector.load %arg6[%c0_17, %c0_18] : memref<128x512xbf16, #tpu.memory_space<vmem>>, vector<128x512xbf16>
    %c0_19 = arith.constant 0 : index
    %c0_20 = arith.constant 0 : index
    %17 = vector.load %arg11[%c0_19, %c0_20] : memref<16x128xf32, #tpu.memory_space<vmem>>, vector<16x128xf32>
    %c0_21 = arith.constant 0 : index
    %c0_22 = arith.constant 0 : index
    %18 = vector.load %arg12[%c0_21, %c0_22] : memref<16x128xf32, #tpu.memory_space<vmem>>, vector<16x128xf32>
    %c0_i32_23 = arith.constant 0 : i32
    %c16_i32 = arith.constant 16 : i32
    %19 = arith.muli %c0_i32_23, %c16_i32 : i32
    %20 = tpu.assume_multiple %19, 16 : i32
    %c7_i32 = arith.constant 7 : i32
    %21 = arith.subi %c7_i32, %c0_i32_23 : i32
    %c16_i32_24 = arith.constant 16 : i32
    %22 = arith.muli %21, %c16_i32_24 : i32
    %23 = tpu.assume_multiple %22, 16 : i32
    %24 = arith.index_cast %20 : i32 to index
    %c0_25 = arith.constant 0 : index
    %25 = vector.load %arg9[%24, %c0_25] : memref<128x512xf32, #tpu.memory_space<vmem>>, vector<16x512xf32>
    %26 = arith.index_cast %23 : i32 to index
    %c0_26 = arith.constant 0 : index
    %27 = vector.load %arg10[%26, %c0_26] : memref<128x512xf32, #tpu.memory_space<vmem>>, vector<16x512xf32>
    %28 = arith.addf %25, %27 : vector<16x512xf32>
    %29 = arith.truncf %17 : vector<16x128xf32> to vector<16x128xbf16>
    %cst_27 = arith.constant dense<0.000000e+00> : vector<16x512xf32>
    %30 = tpu.matmul %29, %16, %cst_27 {dimension_numbers = #tpu.dot_dimension_numbers<[1], [0], [0], [1], [0, 0, 1, 1], [], []>} : vector<16x128xbf16>, vector<128x512xbf16>, vector<16x512xf32> -> vector<16x512xf32>
    %31 = arith.addf %28, %30 : vector<16x512xf32>
    %32 = vector.extract_strided_slice %31 {offsets = [0, 0], sizes = [16, 384], strides = [1, 1]} : vector<16x512xf32> to vector<16x384xf32>
    %33 = arith.negf %32 : vector<16x384xf32>
    %34 = math.exp %33 : vector<16x384xf32>
    %cst_28 = arith.constant 1.000000e+00 : f32
    %35 = vector.broadcast %cst_28 : f32 to vector<16x384xf32>
    %36 = arith.addf %35, %34 : vector<16x384xf32>
    %37 = arith.divf %35, %36 : vector<16x384xf32>
    %38 = vector.extract_strided_slice %31 {offsets = [0, 384], sizes = [16, 128], strides = [1, 1]} : vector<16x512xf32> to vector<16x128xf32>
    %39 = math.tanh %38 : vector<16x128xf32>
    %40 = vector.extract_strided_slice %37 {offsets = [0, 0], sizes = [16, 128], strides = [1, 1]} : vector<16x384xf32> to vector<16x128xf32>
    %41 = vector.extract_strided_slice %37 {offsets = [0, 128], sizes = [16, 128], strides = [1, 1]} : vector<16x384xf32> to vector<16x128xf32>
    %42 = vector.extract_strided_slice %37 {offsets = [0, 256], sizes = [16, 128], strides = [1, 1]} : vector<16x384xf32> to vector<16x128xf32>
    %43 = arith.mulf %41, %18 : vector<16x128xf32>
    %44 = arith.mulf %40, %39 : vector<16x128xf32>
    %45 = arith.addf %43, %44 : vector<16x128xf32>
    %46 = math.tanh %45 : vector<16x128xf32>
    %47 = arith.mulf %42, %46 : vector<16x128xf32>
    %c1_i32 = arith.constant 1 : i32
    %c16_i32_29 = arith.constant 16 : i32
    %48 = arith.muli %c1_i32, %c16_i32_29 : i32
    %49 = tpu.assume_multiple %48, 16 : i32
    %c7_i32_30 = arith.constant 7 : i32
    %50 = arith.subi %c7_i32_30, %c1_i32 : i32
    %c16_i32_31 = arith.constant 16 : i32
    %51 = arith.muli %50, %c16_i32_31 : i32
    %52 = tpu.assume_multiple %51, 16 : i32
    %53 = arith.index_cast %49 : i32 to index
    %c0_32 = arith.constant 0 : index
    %54 = vector.load %arg9[%53, %c0_32] : memref<128x512xf32, #tpu.memory_space<vmem>>, vector<16x512xf32>
    %55 = arith.index_cast %52 : i32 to index
    %c0_33 = arith.constant 0 : index
    %56 = vector.load %arg10[%55, %c0_33] : memref<128x512xf32, #tpu.memory_space<vmem>>, vector<16x512xf32>
    %57 = arith.addf %54, %56 : vector<16x512xf32>
    %58 = arith.truncf %47 : vector<16x128xf32> to vector<16x128xbf16>
    %cst_34 = arith.constant dense<0.000000e+00> : vector<16x512xf32>
    %59 = tpu.matmul %58, %16, %cst_34 {dimension_numbers = #tpu.dot_dimension_numbers<[1], [0], [0], [1], [0, 0, 1, 1], [], []>} : vector<16x128xbf16>, vector<128x512xbf16>, vector<16x512xf32> -> vector<16x512xf32>
    %60 = arith.addf %57, %59 : vector<16x512xf32>
    %61 = vector.extract_strided_slice %60 {offsets = [0, 0], sizes = [16, 384], strides = [1, 1]} : vector<16x512xf32> to vector<16x384xf32>
    %62 = arith.negf %61 : vector<16x384xf32>
    %63 = math.exp %62 : vector<16x384xf32>
    %cst_35 = arith.constant 1.000000e+00 : f32
    %64 = vector.broadcast %cst_35 : f32 to vector<16x384xf32>
    %65 = arith.addf %64, %63 : vector<16x384xf32>
    %66 = arith.divf %64, %65 : vector<16x384xf32>
    %67 = vector.extract_strided_slice %60 {offsets = [0, 384], sizes = [16, 128], strides = [1, 1]} : vector<16x512xf32> to vector<16x128xf32>
    %68 = math.tanh %67 : vector<16x128xf32>
    %69 = vector.extract_strided_slice %66 {offsets = [0, 0], sizes = [16, 128], strides = [1, 1]} : vector<16x384xf32> to vector<16x128xf32>
    %70 = vector.extract_strided_slice %66 {offsets = [0, 128], sizes = [16, 128], strides = [1, 1]} : vector<16x384xf32> to vector<16x128xf32>
    %71 = vector.extract_strided_slice %66 {offsets = [0, 256], sizes = [16, 128], strides = [1, 1]} : vector<16x384xf32> to vector<16x128xf32>
    %72 = arith.mulf %70, %45 : vector<16x128xf32>
    %73 = arith.mulf %69, %68 : vector<16x128xf32>
    %74 = arith.addf %72, %73 : vector<16x128xf32>
    %75 = math.tanh %74 : vector<16x128xf32>
    %76 = arith.mulf %71, %75 : vector<16x128xf32>
    %c2_i32 = arith.constant 2 : i32
    %c16_i32_36 = arith.constant 16 : i32
    %77 = arith.muli %c2_i32, %c16_i32_36 : i32
    %78 = tpu.assume_multiple %77, 16 : i32
    %c7_i32_37 = arith.constant 7 : i32
    %79 = arith.subi %c7_i32_37, %c2_i32 : i32
    %c16_i32_38 = arith.constant 16 : i32
    %80 = arith.muli %79, %c16_i32_38 : i32
    %81 = tpu.assume_multiple %80, 16 : i32
    %82 = arith.index_cast %78 : i32 to index
    %c0_39 = arith.constant 0 : index
    %83 = vector.load %arg9[%82, %c0_39] : memref<128x512xf32, #tpu.memory_space<vmem>>, vector<16x512xf32>
    %84 = arith.index_cast %81 : i32 to index
    %c0_40 = arith.constant 0 : index
    %85 = vector.load %arg10[%84, %c0_40] : memref<128x512xf32, #tpu.memory_space<vmem>>, vector<16x512xf32>
    %86 = arith.addf %83, %85 : vector<16x512xf32>
    %87 = arith.truncf %76 : vector<16x128xf32> to vector<16x128xbf16>
    %cst_41 = arith.constant dense<0.000000e+00> : vector<16x512xf32>
    %88 = tpu.matmul %87, %16, %cst_41 {dimension_numbers = #tpu.dot_dimension_numbers<[1], [0], [0], [1], [0, 0, 1, 1], [], []>} : vector<16x128xbf16>, vector<128x512xbf16>, vector<16x512xf32> -> vector<16x512xf32>
    %89 = arith.addf %86, %88 : vector<16x512xf32>
    %90 = vector.extract_strided_slice %89 {offsets = [0, 0], sizes = [16, 384], strides = [1, 1]} : vector<16x512xf32> to vector<16x384xf32>
    %91 = arith.negf %90 : vector<16x384xf32>
    %92 = math.exp %91 : vector<16x384xf32>
    %cst_42 = arith.constant 1.000000e+00 : f32
    %93 = vector.broadcast %cst_42 : f32 to vector<16x384xf32>
    %94 = arith.addf %93, %92 : vector<16x384xf32>
    %95 = arith.divf %93, %94 : vector<16x384xf32>
    %96 = vector.extract_strided_slice %89 {offsets = [0, 384], sizes = [16, 128], strides = [1, 1]} : vector<16x512xf32> to vector<16x128xf32>
    %97 = math.tanh %96 : vector<16x128xf32>
    %98 = vector.extract_strided_slice %95 {offsets = [0, 0], sizes = [16, 128], strides = [1, 1]} : vector<16x384xf32> to vector<16x128xf32>
    %99 = vector.extract_strided_slice %95 {offsets = [0, 128], sizes = [16, 128], strides = [1, 1]} : vector<16x384xf32> to vector<16x128xf32>
    %100 = vector.extract_strided_slice %95 {offsets = [0, 256], sizes = [16, 128], strides = [1, 1]} : vector<16x384xf32> to vector<16x128xf32>
    %101 = arith.mulf %99, %74 : vector<16x128xf32>
    %102 = arith.mulf %98, %97 : vector<16x128xf32>
    %103 = arith.addf %101, %102 : vector<16x128xf32>
    %104 = math.tanh %103 : vector<16x128xf32>
    %105 = arith.mulf %100, %104 : vector<16x128xf32>
    %c3_i32 = arith.constant 3 : i32
    %c16_i32_43 = arith.constant 16 : i32
    %106 = arith.muli %c3_i32, %c16_i32_43 : i32
    %107 = tpu.assume_multiple %106, 16 : i32
    %c7_i32_44 = arith.constant 7 : i32
    %108 = arith.subi %c7_i32_44, %c3_i32 : i32
    %c16_i32_45 = arith.constant 16 : i32
    %109 = arith.muli %108, %c16_i32_45 : i32
    %110 = tpu.assume_multiple %109, 16 : i32
    %111 = arith.index_cast %107 : i32 to index
    %c0_46 = arith.constant 0 : index
    %112 = vector.load %arg9[%111, %c0_46] : memref<128x512xf32, #tpu.memory_space<vmem>>, vector<16x512xf32>
    %113 = arith.index_cast %110 : i32 to index
    %c0_47 = arith.constant 0 : index
    %114 = vector.load %arg10[%113, %c0_47] : memref<128x512xf32, #tpu.memory_space<vmem>>, vector<16x512xf32>
    %115 = arith.addf %112, %114 : vector<16x512xf32>
    %116 = arith.truncf %105 : vector<16x128xf32> to vector<16x128xbf16>
    %cst_48 = arith.constant dense<0.000000e+00> : vector<16x512xf32>
    %117 = tpu.matmul %116, %16, %cst_48 {dimension_numbers = #tpu.dot_dimension_numbers<[1], [0], [0], [1], [0, 0, 1, 1], [], []>} : vector<16x128xbf16>, vector<128x512xbf16>, vector<16x512xf32> -> vector<16x512xf32>
    %118 = arith.addf %115, %117 : vector<16x512xf32>
    %119 = vector.extract_strided_slice %118 {offsets = [0, 0], sizes = [16, 384], strides = [1, 1]} : vector<16x512xf32> to vector<16x384xf32>
    %120 = arith.negf %119 : vector<16x384xf32>
    %121 = math.exp %120 : vector<16x384xf32>
    %cst_49 = arith.constant 1.000000e+00 : f32
    %122 = vector.broadcast %cst_49 : f32 to vector<16x384xf32>
    %123 = arith.addf %122, %121 : vector<16x384xf32>
    %124 = arith.divf %122, %123 : vector<16x384xf32>
    %125 = vector.extract_strided_slice %118 {offsets = [0, 384], sizes = [16, 128], strides = [1, 1]} : vector<16x512xf32> to vector<16x128xf32>
    %126 = math.tanh %125 : vector<16x128xf32>
    %127 = vector.extract_strided_slice %124 {offsets = [0, 0], sizes = [16, 128], strides = [1, 1]} : vector<16x384xf32> to vector<16x128xf32>
    %128 = vector.extract_strided_slice %124 {offsets = [0, 128], sizes = [16, 128], strides = [1, 1]} : vector<16x384xf32> to vector<16x128xf32>
    %129 = vector.extract_strided_slice %124 {offsets = [0, 256], sizes = [16, 128], strides = [1, 1]} : vector<16x384xf32> to vector<16x128xf32>
    %130 = arith.mulf %128, %103 : vector<16x128xf32>
    %131 = arith.mulf %127, %126 : vector<16x128xf32>
    %132 = arith.addf %130, %131 : vector<16x128xf32>
    %133 = math.tanh %132 : vector<16x128xf32>
    %134 = arith.mulf %129, %133 : vector<16x128xf32>
    %c4_i32 = arith.constant 4 : i32
    %c16_i32_50 = arith.constant 16 : i32
    %135 = arith.muli %c4_i32, %c16_i32_50 : i32
    %136 = tpu.assume_multiple %135, 16 : i32
    %c7_i32_51 = arith.constant 7 : i32
    %137 = arith.subi %c7_i32_51, %c4_i32 : i32
    %c16_i32_52 = arith.constant 16 : i32
    %138 = arith.muli %137, %c16_i32_52 : i32
    %139 = tpu.assume_multiple %138, 16 : i32
    %140 = arith.index_cast %136 : i32 to index
    %c0_53 = arith.constant 0 : index
    %141 = vector.load %arg9[%140, %c0_53] : memref<128x512xf32, #tpu.memory_space<vmem>>, vector<16x512xf32>
    %142 = arith.index_cast %139 : i32 to index
    %c0_54 = arith.constant 0 : index
    %143 = vector.load %arg10[%142, %c0_54] : memref<128x512xf32, #tpu.memory_space<vmem>>, vector<16x512xf32>
    %144 = arith.addf %141, %143 : vector<16x512xf32>
    %145 = arith.truncf %134 : vector<16x128xf32> to vector<16x128xbf16>
    %cst_55 = arith.constant dense<0.000000e+00> : vector<16x512xf32>
    %146 = tpu.matmul %145, %16, %cst_55 {dimension_numbers = #tpu.dot_dimension_numbers<[1], [0], [0], [1], [0, 0, 1, 1], [], []>} : vector<16x128xbf16>, vector<128x512xbf16>, vector<16x512xf32> -> vector<16x512xf32>
    %147 = arith.addf %144, %146 : vector<16x512xf32>
    %148 = vector.extract_strided_slice %147 {offsets = [0, 0], sizes = [16, 384], strides = [1, 1]} : vector<16x512xf32> to vector<16x384xf32>
    %149 = arith.negf %148 : vector<16x384xf32>
    %150 = math.exp %149 : vector<16x384xf32>
    %cst_56 = arith.constant 1.000000e+00 : f32
    %151 = vector.broadcast %cst_56 : f32 to vector<16x384xf32>
    %152 = arith.addf %151, %150 : vector<16x384xf32>
    %153 = arith.divf %151, %152 : vector<16x384xf32>
    %154 = vector.extract_strided_slice %147 {offsets = [0, 384], sizes = [16, 128], strides = [1, 1]} : vector<16x512xf32> to vector<16x128xf32>
    %155 = math.tanh %154 : vector<16x128xf32>
    %156 = vector.extract_strided_slice %153 {offsets = [0, 0], sizes = [16, 128], strides = [1, 1]} : vector<16x384xf32> to vector<16x128xf32>
    %157 = vector.extract_strided_slice %153 {offsets = [0, 128], sizes = [16, 128], strides = [1, 1]} : vector<16x384xf32> to vector<16x128xf32>
    %158 = vector.extract_strided_slice %153 {offsets = [0, 256], sizes = [16, 128], strides = [1, 1]} : vector<16x384xf32> to vector<16x128xf32>
    %159 = arith.mulf %157, %132 : vector<16x128xf32>
    %160 = arith.mulf %156, %155 : vector<16x128xf32>
    %161 = arith.addf %159, %160 : vector<16x128xf32>
    %162 = math.tanh %161 : vector<16x128xf32>
    %163 = arith.mulf %158, %162 : vector<16x128xf32>
    %c5_i32 = arith.constant 5 : i32
    %c16_i32_57 = arith.constant 16 : i32
    %164 = arith.muli %c5_i32, %c16_i32_57 : i32
    %165 = tpu.assume_multiple %164, 16 : i32
    %c7_i32_58 = arith.constant 7 : i32
    %166 = arith.subi %c7_i32_58, %c5_i32 : i32
    %c16_i32_59 = arith.constant 16 : i32
    %167 = arith.muli %166, %c16_i32_59 : i32
    %168 = tpu.assume_multiple %167, 16 : i32
    %169 = arith.index_cast %165 : i32 to index
    %c0_60 = arith.constant 0 : index
    %170 = vector.load %arg9[%169, %c0_60] : memref<128x512xf32, #tpu.memory_space<vmem>>, vector<16x512xf32>
    %171 = arith.index_cast %168 : i32 to index
    %c0_61 = arith.constant 0 : index
    %172 = vector.load %arg10[%171, %c0_61] : memref<128x512xf32, #tpu.memory_space<vmem>>, vector<16x512xf32>
    %173 = arith.addf %170, %172 : vector<16x512xf32>
    %174 = arith.truncf %163 : vector<16x128xf32> to vector<16x128xbf16>
    %cst_62 = arith.constant dense<0.000000e+00> : vector<16x512xf32>
    %175 = tpu.matmul %174, %16, %cst_62 {dimension_numbers = #tpu.dot_dimension_numbers<[1], [0], [0], [1], [0, 0, 1, 1], [], []>} : vector<16x128xbf16>, vector<128x512xbf16>, vector<16x512xf32> -> vector<16x512xf32>
    %176 = arith.addf %173, %175 : vector<16x512xf32>
    %177 = vector.extract_strided_slice %176 {offsets = [0, 0], sizes = [16, 384], strides = [1, 1]} : vector<16x512xf32> to vector<16x384xf32>
    %178 = arith.negf %177 : vector<16x384xf32>
    %179 = math.exp %178 : vector<16x384xf32>
    %cst_63 = arith.constant 1.000000e+00 : f32
    %180 = vector.broadcast %cst_63 : f32 to vector<16x384xf32>
    %181 = arith.addf %180, %179 : vector<16x384xf32>
    %182 = arith.divf %180, %181 : vector<16x384xf32>
    %183 = vector.extract_strided_slice %176 {offsets = [0, 384], sizes = [16, 128], strides = [1, 1]} : vector<16x512xf32> to vector<16x128xf32>
    %184 = math.tanh %183 : vector<16x128xf32>
    %185 = vector.extract_strided_slice %182 {offsets = [0, 0], sizes = [16, 128], strides = [1, 1]} : vector<16x384xf32> to vector<16x128xf32>
    %186 = vector.extract_strided_slice %182 {offsets = [0, 128], sizes = [16, 128], strides = [1, 1]} : vector<16x384xf32> to vector<16x128xf32>
    %187 = vector.extract_strided_slice %182 {offsets = [0, 256], sizes = [16, 128], strides = [1, 1]} : vector<16x384xf32> to vector<16x128xf32>
    %188 = arith.mulf %186, %161 : vector<16x128xf32>
    %189 = arith.mulf %185, %184 : vector<16x128xf32>
    %190 = arith.addf %188, %189 : vector<16x128xf32>
    %191 = math.tanh %190 : vector<16x128xf32>
    %192 = arith.mulf %187, %191 : vector<16x128xf32>
    %c6_i32 = arith.constant 6 : i32
    %c16_i32_64 = arith.constant 16 : i32
    %193 = arith.muli %c6_i32, %c16_i32_64 : i32
    %194 = tpu.assume_multiple %193, 16 : i32
    %c7_i32_65 = arith.constant 7 : i32
    %195 = arith.subi %c7_i32_65, %c6_i32 : i32
    %c16_i32_66 = arith.constant 16 : i32
    %196 = arith.muli %195, %c16_i32_66 : i32
    %197 = tpu.assume_multiple %196, 16 : i32
    %198 = arith.index_cast %194 : i32 to index
    %c0_67 = arith.constant 0 : index
    %199 = vector.load %arg9[%198, %c0_67] : memref<128x512xf32, #tpu.memory_space<vmem>>, vector<16x512xf32>
    %200 = arith.index_cast %197 : i32 to index
    %c0_68 = arith.constant 0 : index
    %201 = vector.load %arg10[%200, %c0_68] : memref<128x512xf32, #tpu.memory_space<vmem>>, vector<16x512xf32>
    %202 = arith.addf %199, %201 : vector<16x512xf32>
    %203 = arith.truncf %192 : vector<16x128xf32> to vector<16x128xbf16>
    %cst_69 = arith.constant dense<0.000000e+00> : vector<16x512xf32>
    %204 = tpu.matmul %203, %16, %cst_69 {dimension_numbers = #tpu.dot_dimension_numbers<[1], [0], [0], [1], [0, 0, 1, 1], [], []>} : vector<16x128xbf16>, vector<128x512xbf16>, vector<16x512xf32> -> vector<16x512xf32>
    %205 = arith.addf %202, %204 : vector<16x512xf32>
    %206 = vector.extract_strided_slice %205 {offsets = [0, 0], sizes = [16, 384], strides = [1, 1]} : vector<16x512xf32> to vector<16x384xf32>
    %207 = arith.negf %206 : vector<16x384xf32>
    %208 = math.exp %207 : vector<16x384xf32>
    %cst_70 = arith.constant 1.000000e+00 : f32
    %209 = vector.broadcast %cst_70 : f32 to vector<16x384xf32>
    %210 = arith.addf %209, %208 : vector<16x384xf32>
    %211 = arith.divf %209, %210 : vector<16x384xf32>
    %212 = vector.extract_strided_slice %205 {offsets = [0, 384], sizes = [16, 128], strides = [1, 1]} : vector<16x512xf32> to vector<16x128xf32>
    %213 = math.tanh %212 : vector<16x128xf32>
    %214 = vector.extract_strided_slice %211 {offsets = [0, 0], sizes = [16, 128], strides = [1, 1]} : vector<16x384xf32> to vector<16x128xf32>
    %215 = vector.extract_strided_slice %211 {offsets = [0, 128], sizes = [16, 128], strides = [1, 1]} : vector<16x384xf32> to vector<16x128xf32>
    %216 = vector.extract_strided_slice %211 {offsets = [0, 256], sizes = [16, 128], strides = [1, 1]} : vector<16x384xf32> to vector<16x128xf32>
    %217 = arith.mulf %215, %190 : vector<16x128xf32>
    %218 = arith.mulf %214, %213 : vector<16x128xf32>
    %219 = arith.addf %217, %218 : vector<16x128xf32>
    %220 = math.tanh %219 : vector<16x128xf32>
    %221 = arith.mulf %216, %220 : vector<16x128xf32>
    %c7_i32_71 = arith.constant 7 : i32
    %c16_i32_72 = arith.constant 16 : i32
    %222 = arith.muli %c7_i32_71, %c16_i32_72 : i32
    %223 = tpu.assume_multiple %222, 16 : i32
    %c7_i32_73 = arith.constant 7 : i32
    %224 = arith.subi %c7_i32_73, %c7_i32_71 : i32
    %c16_i32_74 = arith.constant 16 : i32
    %225 = arith.muli %224, %c16_i32_74 : i32
    %226 = tpu.assume_multiple %225, 16 : i32
    %227 = arith.index_cast %223 : i32 to index
    %c0_75 = arith.constant 0 : index
    %228 = vector.load %arg9[%227, %c0_75] : memref<128x512xf32, #tpu.memory_space<vmem>>, vector<16x512xf32>
    %229 = arith.index_cast %226 : i32 to index
    %c0_76 = arith.constant 0 : index
    %230 = vector.load %arg10[%229, %c0_76] : memref<128x512xf32, #tpu.memory_space<vmem>>, vector<16x512xf32>
    %231 = arith.addf %228, %230 : vector<16x512xf32>
    %232 = arith.truncf %221 : vector<16x128xf32> to vector<16x128xbf16>
    %cst_77 = arith.constant dense<0.000000e+00> : vector<16x512xf32>
    %233 = tpu.matmul %232, %16, %cst_77 {dimension_numbers = #tpu.dot_dimension_numbers<[1], [0], [0], [1], [0, 0, 1, 1], [], []>} : vector<16x128xbf16>, vector<128x512xbf16>, vector<16x512xf32> -> vector<16x512xf32>
    %234 = arith.addf %231, %233 : vector<16x512xf32>
    %235 = vector.extract_strided_slice %234 {offsets = [0, 0], sizes = [16, 384], strides = [1, 1]} : vector<16x512xf32> to vector<16x384xf32>
    %236 = arith.negf %235 : vector<16x384xf32>
    %237 = math.exp %236 : vector<16x384xf32>
    %cst_78 = arith.constant 1.000000e+00 : f32
    %238 = vector.broadcast %cst_78 : f32 to vector<16x384xf32>
    %239 = arith.addf %238, %237 : vector<16x384xf32>
    %240 = arith.divf %238, %239 : vector<16x384xf32>
    %241 = vector.extract_strided_slice %234 {offsets = [0, 384], sizes = [16, 128], strides = [1, 1]} : vector<16x512xf32> to vector<16x128xf32>
    %242 = math.tanh %241 : vector<16x128xf32>
    %243 = vector.extract_strided_slice %240 {offsets = [0, 0], sizes = [16, 128], strides = [1, 1]} : vector<16x384xf32> to vector<16x128xf32>
    %244 = vector.extract_strided_slice %240 {offsets = [0, 128], sizes = [16, 128], strides = [1, 1]} : vector<16x384xf32> to vector<16x128xf32>
    %245 = vector.extract_strided_slice %240 {offsets = [0, 256], sizes = [16, 128], strides = [1, 1]} : vector<16x384xf32> to vector<16x128xf32>
    %246 = arith.mulf %244, %219 : vector<16x128xf32>
    %247 = arith.mulf %243, %242 : vector<16x128xf32>
    %248 = arith.addf %246, %247 : vector<16x128xf32>
    %249 = math.tanh %248 : vector<16x128xf32>
    %250 = arith.mulf %245, %249 : vector<16x128xf32>
    %c8_i32 = arith.constant 8 : i32
    %c0_79 = arith.constant 0 : index
    %c0_80 = arith.constant 0 : index
    %251 = vector.load %arg11[%c0_79, %c0_80] : memref<16x128xf32, #tpu.memory_space<vmem>>, vector<16x128xf32>
    tpu.vector_store %arg11[%c0_79, %c0_80], %250 {strides = array<i32>} : memref<16x128xf32, #tpu.memory_space<vmem>>, vector<16x128xf32>,
    %c0_81 = arith.constant 0 : index
    %c0_82 = arith.constant 0 : index
    %252 = vector.load %arg12[%c0_81, %c0_82] : memref<16x128xf32, #tpu.memory_space<vmem>>, vector<16x128xf32>
    tpu.vector_store %arg12[%c0_81, %c0_82], %248 {strides = array<i32>} : memref<16x128xf32, #tpu.memory_space<vmem>>, vector<16x128xf32>,
    %c1_i32_83 = arith.constant 1 : i32
    %253 = arith.cmpi eq, %arg1, %c1_i32_83 : i32
    %254 = arith.extui %253 : i1 to i32
    %c0_i32_84 = arith.constant 0 : i32
    %255 = arith.cmpi ne, %254, %c0_i32_84 : i32
    scf.if %255 {
      %c0_85 = arith.constant 0 : index
      %c0_86 = arith.constant 0 : index
      %256 = vector.load %arg8[%c0_85, %c0_86] : memref<16x128xf32, #tpu.memory_space<vmem>>, vector<16x128xf32>
      tpu.vector_store %arg8[%c0_85, %c0_86], %250 {strides = array<i32>} : memref<16x128xf32, #tpu.memory_space<vmem>>, vector<16x128xf32>,
    } else {
    }
    return
  }
  func.func @transform_0(%arg0: i32, %arg1: i32) -> (i32, i32, i32) {
    %c0_i32 = arith.constant 0 : i32
    %c0_i32_0 = arith.constant 0 : i32
    return %arg1, %arg0, %c0_i32 : i32, i32, i32
  }
  func.func @transform_1(%arg0: i32, %arg1: i32) -> (i32, i32, i32) {
    %c1_i32 = arith.constant 1 : i32
    %0 = arith.subi %c1_i32, %arg1 : i32
    %c0_i32 = arith.constant 0 : i32
    %c0_i32_0 = arith.constant 0 : i32
    return %0, %arg0, %c0_i32 : i32, i32, i32
  }
  func.func @transform_2(%arg0: i32, %arg1: i32) -> (i32, i32) {
    %c0_i32 = arith.constant 0 : i32
    %c0_i32_0 = arith.constant 0 : i32
    %c0_i32_1 = arith.constant 0 : i32
    return %c0_i32, %c0_i32_0 : i32, i32
  }
  func.func @transform_3(%arg0: i32, %arg1: i32) -> (i32, i32) {
    %c0_i32 = arith.constant 0 : i32
    %c0_i32_0 = arith.constant 0 : i32
    %c0_i32_1 = arith.constant 0 : i32
    return %c0_i32, %c0_i32_0 : i32, i32
  }
  func.func @transform_4(%arg0: i32, %arg1: i32) -> (i32, i32) {
    %c0_i32 = arith.constant 0 : i32
    %c0_i32_0 = arith.constant 0 : i32
    %c0_i32_1 = arith.constant 0 : i32
    return %c0_i32, %c0_i32_0 : i32, i32
  }
  func.func @transform_5(%arg0: i32, %arg1: i32) -> (i32, i32) {
    %c0_i32 = arith.constant 0 : i32
    %c0_i32_0 = arith.constant 0 : i32
    %c0_i32_1 = arith.constant 0 : i32
    return %c0_i32, %c0_i32_0 : i32, i32
  }
  func.func @transform_6(%arg0: i32, %arg1: i32) -> (i32, i32) {
    %c0_i32 = arith.constant 0 : i32
    %c0_i32_0 = arith.constant 0 : i32
    return %arg0, %c0_i32 : i32, i32
  }
}

</mosaic_0001>

<llo_original>
// kernel: tpu_custom_call.1
$region0: #{tpu_custom_call.1}
  #allocation0 [shape = 'u32[]', space=smem, size = 0x4, offset = 0x4, fixed_abs, tag = 'smem constant byte address 0x4 - core index']
  #allocation1 [shape = 'u32[144,128]{1,0:T(1,128)}', space=vmem, size = 0x12000, scoped, tag = 'internal scratch']
  #allocation2 [shape = 'f32[128,512]{1,0:T(8,128)}', space=vmem, size = 0x40000, scoped, tag = 'scratch operand']
  #allocation3 [shape = 'f32[128,512]{1,0:T(8,128)}', space=vmem, size = 0x40000, scoped, tag = 'scratch operand']
  #allocation4 [shape = 'f32[16,128]{1,0:T(8,128)}', space=vmem, size = 0x2000, scoped, tag = 'scratch operand']
  #allocation5 [shape = 'f32[16,128]{1,0:T(8,128)}', space=vmem, size = 0x2000, scoped, tag = 'scratch operand']
  %s0 = inlined_call_operand.vmem [shape: bf16[16,32,8], index: 0, kind: input, shape index: {}]
  %s1 = inlined_call_operand.vmem [shape: bf16[16,32,8], index: 1, kind: input, shape index: {}]
  %s2 = inlined_call_operand.vmem [shape: bf16[8,512], index: 2, kind: input, shape index: {}]
  %s3 = inlined_call_operand.vmem [shape: bf16[8,512], index: 3, kind: input, shape index: {}]
  %s4 = inlined_call_operand.vmem [shape: bf16[128,512], index: 4, kind: input, shape index: {}]
  %s5 = inlined_call_operand.vmem [shape: f32[1,512], index: 5, kind: input, shape index: {}]
  %s6 = inlined_call_operand.hbm [shape: f32[32,128], index: 6, kind: output, shape index: {}]
  %s7 = sld [smem:[#allocation0]]
  $region147: #{tpu_custom_call.1} parent=0
    _
  %s9 = ssub.s32 1, %s7
  %s10 = scalar_select 0, %s9, %s7
  $region1: #{tpu_custom_call.1} parent=0
    #allocation6 [shape = 'u8[65536]{0}', space=vmem, size = 0x10000, scoped, tag = 'input window, operand 0']
    #allocation7 [shape = 'u8[65536]{0}', space=vmem, size = 0x10000, scoped, tag = 'input window, operand 1']
    #allocation8 [shape = 'u8[16384]{0}', space=vmem, size = 0x4000, scoped, tag = 'output window, operand 0']
    #allocation9 [shape = 's32[2]{0}', space=sflag, size = 0x8, scoped, tag = 'scoped memory for tpu_custom_call.1']
    %11 = vsyncpa [#allocation9], 0
    %s12 = scalar_lea.sflag [#allocation9], 1
    %13 = vsyncpa %s12, 0
    loop: start=0, step=1, limit=6
    $region2: #{tpu_custom_call.1} parent=1 // loop_pre_header
      _
    $region3: #{tpu_custom_call.1} parent=1 // loop_header
      %s15 = sphi 0, %s19
      %p16 = scmp.ge.s32.totalorder %s15, 6
      %s22 = sphi 0, %s34
      %s23 = sphi 0, %s30
      %s24 = sphi 0, %s22
      %s25 = sphi 0, %s23
      %s26 = sphi 0, %s24
      %s27 = sphi 0, %s25
      %s39 = sphi 0, %s41
      %s42 = sphi 0, %s39
      %s43 = sphi 0, %s42
      %s59 = sphi 0, %s43
      %s69 = sphi 0, %s71
      %s72 = sphi 0, %s69
      %s73 = sphi 0, %s72
      %s89 = sphi 0, %s73
      %s93 = sphi 0, %s93
      %s95 = sphi 0, %s93
      %s96 = sphi 0, %s95
      %s110 = sphi 0, %s96
      %s114 = sphi 0, %s114
      %s116 = sphi 0, %s114
      %s117 = sphi 0, %s116
      %s131 = sphi 0, %s117
      %s135 = sphi 0, %s135
      %s137 = sphi 0, %s135
      %s138 = sphi 0, %s137
      %s152 = sphi 0, %s138
      %s156 = sphi 0, %s156
      %s158 = sphi 0, %s156
      %s159 = sphi 0, %s158
      %s173 = sphi 0, %s159
      %s179 = sphi 0, %s181
      %s182 = sphi 0, %s179
      %s183 = sphi 0, %s182
      %s199 = sphi 0, %s183
    $region4: #{tpu_custom_call.1} parent=1 // loop_header_branch
      %18 = sbr.rel (%p16) target = $region8
    $region5: #{tpu_custom_call.1} parent=1 // loop_body
      %s20 = ssub.s32 %s15, 1
      %s21 = ssub.s32 %s15, 2
      %s28 = sadd.s32 1, %s23
      %p29 = scmp.ge.s32.totalorder %s28, 2
      %s30 = scalar_select %p29, 0, %s28
      %s31 = sadd.s32 1, %s22
      %s32 = scalar_select %p29, %s31, %s22
      %p33 = scmp.ge.s32.totalorder %s32, 2
      %s34 = scalar_select %p33, 0, %s32
      %s35 = ssub.s32 %s23, %s30
      %s36 = ssub.s32 %s22, %s34
      %s37 = sor.u32 %s35, %s36
      %p38 = scmp.eq.s32.totalorder %s37, 0
      %s40 = sadd.s32 %s39, 1
      %s41 = scalar_select %p38, %s39, %s40
      %p44 = pneg %p38
      %p45 = scmp.eq.s32.totalorder %s15, 3
      %p46 = por %p44, %p45
      %p47 = scmp.ne.s32.totalorder %s39, %s42
      %p48 = scmp.eq.s32.totalorder %s15, 0
      %p49 = por %p47, %p48
      %p50 = scmp.ne.s32.totalorder %s39, %s42
      %p51 = scmp.eq.s32.totalorder %s20, 3
      %p52 = por %p50, %p51
      %p53 = scmp.ne.s32.totalorder %s42, %s43
      %p54 = scmp.eq.s32.totalorder %s20, 0
      %p55 = por %p53, %p54
      %p56 = scmp.ne.s32.totalorder %s42, %s43
      %p57 = scmp.eq.s32.totalorder %s21, 3
      %p58 = por %p56, %p57
      %p60 = scmp.ne.s32.totalorder %s43, %s59
      %p61 = scmp.eq.s32.totalorder %s21, 0
      %p62 = por %p60, %p61
      %s63 = ssub.s32 1, %s23
      %s64 = ssub.s32 1, %s30
      %s65 = ssub.s32 %s63, %s64
      %s66 = ssub.s32 %s22, %s34
      %s67 = sor.u32 %s65, %s66
      %p68 = scmp.eq.s32.totalorder %s67, 0
      %s70 = sadd.s32 %s69, 1
      %s71 = scalar_select %p68, %s69, %s70
      %p74 = pneg %p68
      %p75 = scmp.eq.s32.totalorder %s15, 3
      %p76 = por %p74, %p75
      %p77 = scmp.ne.s32.totalorder %s69, %s72
      %p78 = scmp.eq.s32.totalorder %s15, 0
      %p79 = por %p77, %p78
      %p80 = scmp.ne.s32.totalorder %s69, %s72
      %p81 = scmp.eq.s32.totalorder %s20, 3
      %p82 = por %p80, %p81
      %p83 = scmp.ne.s32.totalorder %s72, %s73
      %p84 = scmp.eq.s32.totalorder %s20, 0
      %p85 = por %p83, %p84
      %p86 = scmp.ne.s32.totalorder %s72, %s73
      %p87 = scmp.eq.s32.totalorder %s21, 3
      %p88 = por %p86, %p87
      %p90 = scmp.ne.s32.totalorder %s73, %s89
      %p91 = scmp.eq.s32.totalorder %s21, 0
      %p92 = por %p90, %p91
      %s94 = sadd.s32 %s93, 1
      %p97 = scmp.eq.s32.totalorder %s15, 3
      %p98 = scmp.ne.s32.totalorder %s93, %s95
      %p99 = scmp.eq.s32.totalorder %s15, 0
      %p100 = por %p98, %p99
      %p101 = scmp.ne.s32.totalorder %s93, %s95
      %p102 = scmp.eq.s32.totalorder %s20, 3
      %p103 = por %p101, %p102
      %p104 = scmp.ne.s32.totalorder %s95, %s96
      %p105 = scmp.eq.s32.totalorder %s20, 0
      %p106 = por %p104, %p105
      %p107 = scmp.ne.s32.totalorder %s95, %s96
      %p108 = scmp.eq.s32.totalorder %s21, 3
      %p109 = por %p107, %p108
      %p111 = scmp.ne.s32.totalorder %s96, %s110
      %p112 = scmp.eq.s32.totalorder %s21, 0
      %p113 = por %p111, %p112
      %s115 = sadd.s32 %s114, 1
      %p118 = scmp.eq.s32.totalorder %s15, 3
      %p119 = scmp.ne.s32.totalorder %s114, %s116
      %p120 = scmp.eq.s32.totalorder %s15, 0
      %p121 = por %p119, %p120
      %p122 = scmp.ne.s32.totalorder %s114, %s116
      %p123 = scmp.eq.s32.totalorder %s20, 3
      %p124 = por %p122, %p123
      %p125 = scmp.ne.s32.totalorder %s116, %s117
      %p126 = scmp.eq.s32.totalorder %s20, 0
      %p127 = por %p125, %p126
      %p128 = scmp.ne.s32.totalorder %s116, %s117
      %p129 = scmp.eq.s32.totalorder %s21, 3
      %p130 = por %p128, %p129
      %p132 = scmp.ne.s32.totalorder %s117, %s131
      %p133 = scmp.eq.s32.totalorder %s21, 0
      %p134 = por %p132, %p133
      %s136 = sadd.s32 %s135, 1
      %p139 = scmp.eq.s32.totalorder %s15, 3
      %p140 = scmp.ne.s32.totalorder %s135, %s137
      %p141 = scmp.eq.s32.totalorder %s15, 0
      %p142 = por %p140, %p141
      %p143 = scmp.ne.s32.totalorder %s135, %s137
      %p144 = scmp.eq.s32.totalorder %s20, 3
      %p145 = por %p143, %p144
      %p146 = scmp.ne.s32.totalorder %s137, %s138
      %p147 = scmp.eq.s32.totalorder %s20, 0
      %p148 = por %p146, %p147
      %p149 = scmp.ne.s32.totalorder %s137, %s138
      %p150 = scmp.eq.s32.totalorder %s21, 3
      %p151 = por %p149, %p150
      %p153 = scmp.ne.s32.totalorder %s138, %s152
      %p154 = scmp.eq.s32.totalorder %s21, 0
      %p155 = por %p153, %p154
      %s157 = sadd.s32 %s156, 1
      %p160 = scmp.eq.s32.totalorder %s15, 3
      %p161 = scmp.ne.s32.totalorder %s156, %s158
      %p162 = scmp.eq.s32.totalorder %s15, 0
      %p163 = por %p161, %p162
      %p164 = scmp.ne.s32.totalorder %s156, %s158
      %p165 = scmp.eq.s32.totalorder %s20, 3
      %p166 = por %p164, %p165
      %p167 = scmp.ne.s32.totalorder %s158, %s159
      %p168 = scmp.eq.s32.totalorder %s20, 0
      %p169 = por %p167, %p168
      %p170 = scmp.ne.s32.totalorder %s158, %s159
      %p171 = scmp.eq.s32.totalorder %s21, 3
      %p172 = por %p170, %p171
      %p174 = scmp.ne.s32.totalorder %s159, %s173
      %p175 = scmp.eq.s32.totalorder %s21, 0
      %p176 = por %p174, %p175
      %s177 = ssub.s32 %s22, %s34
      %p178 = scmp.eq.s32.totalorder %s177, 0
      %s180 = sadd.s32 %s179, 1
      %s181 = scalar_select %p178, %s179, %s180
      %p184 = pneg %p178
      %p185 = scmp.eq.s32.totalorder %s15, 3
      %p186 = por %p184, %p185
      %p187 = scmp.ne.s32.totalorder %s179, %s182
      %p188 = scmp.eq.s32.totalorder %s15, 0
      %p189 = por %p187, %p188
      %p190 = scmp.ne.s32.totalorder %s179, %s182
      %p191 = scmp.eq.s32.totalorder %s20, 3
      %p192 = por %p190, %p191
      %p193 = scmp.ne.s32.totalorder %s182, %s183
      %p194 = scmp.eq.s32.totalorder %s20, 0
      %p195 = por %p193, %p194
      %p196 = scmp.ne.s32.totalorder %s182, %s183
      %p197 = scmp.eq.s32.totalorder %s21, 3
      %p198 = por %p196, %p197
      %p200 = scmp.ne.s32.totalorder %s183, %s199
      %p201 = scmp.eq.s32.totalorder %s21, 0
      %p202 = por %p200, %p201
      %p203 = scmp.le.s32.totalorder 1, %s15
      %p204 = scmp.lt.s32.totalorder %s15, 5
      %p205 = pnand %p203, %p204
      %p206 = pneg %p205
      // Predicated region
      $region9: #{tpu_custom_call.1} parent=5 // pred_check
        _
      $region10: #{tpu_custom_call.1} parent=5 // pred_check_branch
        %208 = sbr.rel (%p205) target = $region12
      $region11: #{tpu_custom_call.1} parent=5 // pred_region
        %s209 = ssub.s32 %s15, 1
        // Predicated region
        $region13: #{tpu_custom_call.1} parent=11 // pred_check
          %p210 = pneg %p106
        $region14: #{tpu_custom_call.1} parent=11 // pred_check_branch
          %212 = sbr.rel (%p210) target = $region16
        $region15: #{tpu_custom_call.1} parent=11 // pred_region
          _
        $region16: #{tpu_custom_call.1} parent=11 // pred_fallthru
          _
        // Predicated region
        $region17: #{tpu_custom_call.1} parent=11 // pred_check
          %p213 = pneg %p127
        $region18: #{tpu_custom_call.1} parent=11 // pred_check_branch
          %215 = sbr.rel (%p213) target = $region20
        $region19: #{tpu_custom_call.1} parent=11 // pred_region
          _
        $region20: #{tpu_custom_call.1} parent=11 // pred_fallthru
          _
        // Predicated region
        $region21: #{tpu_custom_call.1} parent=11 // pred_check
          %p216 = pneg %p148
        $region22: #{tpu_custom_call.1} parent=11 // pred_check_branch
          %218 = sbr.rel (%p216) target = $region24
        $region23: #{tpu_custom_call.1} parent=11 // pred_region
          _
        $region24: #{tpu_custom_call.1} parent=11 // pred_fallthru
          _
        // Predicated region
        $region25: #{tpu_custom_call.1} parent=11 // pred_check
          %p219 = pneg %p169
        $region26: #{tpu_custom_call.1} parent=11 // pred_check_branch
          %221 = sbr.rel (%p219) target = $region28
        $region27: #{tpu_custom_call.1} parent=11 // pred_region
          _
        $region28: #{tpu_custom_call.1} parent=11 // pred_fallthru
          _
      $region12: #{tpu_custom_call.1} parent=5 // pred_fallthru
        _
      %p222 = scmp.lt.s32.totalorder %s15, 4
      // Predicated region
      $region29: #{tpu_custom_call.1} parent=5 // pred_check
        %p223 = pneg %p222
      $region30: #{tpu_custom_call.1} parent=5 // pred_check_branch
        %225 = sbr.rel (%p223) target = $region32
      $region31: #{tpu_custom_call.1} parent=5 // pred_region
        // Predicated region
        $region33: #{tpu_custom_call.1} parent=31 // pred_check
          %p226 = pneg %p49
        $region34: #{tpu_custom_call.1} parent=31 // pred_check_branch
          %228 = sbr.rel (%p226) target = $region36
        $region35: #{tpu_custom_call.1} parent=31 // pred_region
          %s229 = sand.u32 %s39, 1
          %s230 = sand.u32 %s39, 1
          %s231 = smul.addr %s230, 64
          %s232 = scalar_lea.vmem [#allocation6], %s231
          %s233 = smul.u32 8, %s23
          %s234 = smul.u32 2, %s22
          %s235 = smul.addr %s233, 4
          %s236 = sadd.s32 %s234, %s235
          %s237 = smul.addr %s236, 4
          %s238 = scalar_lea.vmem %s0, %s237
          // Predicated region
          $region37: #{tpu_custom_call.1} parent=35 // pred_check
            _
          $region38: #{tpu_custom_call.1} parent=35 // pred_check_branch
            %240 = sbr.rel (0) target = $region40
          $region39: #{tpu_custom_call.1} parent=35 // pred_region
            // Predicated region
            $region41: #{tpu_custom_call.1} parent=39 // pred_check
              _
            $region42: #{tpu_custom_call.1} parent=39 // pred_check_branch
              %242 = sbr.rel target = $region44
            $region43: #{tpu_custom_call.1} parent=39 // pred_region
              // Predicated region
              $region56: #{tpu_custom_call.1} parent=43 // pred_check
                _
              $region57: #{tpu_custom_call.1} parent=43 // pred_check_branch
                %287 = sbr.rel (0) target = $region59
              $region58: #{tpu_custom_call.1} parent=43 // pred_region
                loop: start=0, step=1, limit=1
                $region60: #{tpu_custom_call.1} parent=58 // loop_pre_header
                  _
                $region61: #{tpu_custom_call.1} parent=58 // loop_header
                  %s289 = sphi 0, %s293
                  %p290 = scmp.ge.s32.totalorder %s289, 1
                  %s294 = sphi %s238, %s238
                  %s295 = sphi %s232, %s232
                $region62: #{tpu_custom_call.1} parent=58 // loop_header_branch
                  %292 = sbr.rel (%p290) target = $region66
                $region63: #{tpu_custom_call.1} parent=58 // loop_body
                  _
                $region64: #{tpu_custom_call.1} parent=58 // loop_footer
                  %s293 = sadd.s32 1, %s289
                $region65: #{tpu_custom_call.1} parent=58 // loop_footer_branch
                  %288 = sbr.rel target = $region61
                $region66: #{tpu_custom_call.1} parent=58 // loop_exit
                  _
                loop: start=0, step=1, limit=1
                $region67: #{tpu_custom_call.1} parent=58 // loop_pre_header
                  _
                $region68: #{tpu_custom_call.1} parent=58 // loop_header
                  %s298 = sphi 0, %s302
                  %p299 = scmp.ge.s32.totalorder %s298, 1
                  %s303 = sphi %s238, %s238
                  %s304 = sphi %s232, %s232
                $region69: #{tpu_custom_call.1} parent=58 // loop_header_branch
                  %301 = sbr.rel (%p299) target = $region73
                $region70: #{tpu_custom_call.1} parent=58 // loop_body
                  %v305 = vld [vmem:[%s303] sm:$0xf]
                  %306 = vst [vmem:[%s304] sm:$0xf] %v305
                  %v307 = vld [vmem:[%s303 + $0x4] sm:$0xf]
                  %308 = vst [vmem:[%s304 + $0x4] sm:$0xf] %v307
                  %v309 = vld [vmem:[%s303 + $0x10] sm:$0xf]
                  %310 = vst [vmem:[%s304 + $0x8] sm:$0xf] %v309
                  %v311 = vld [vmem:[%s303 + $0x14] sm:$0xf]
                  %312 = vst [vmem:[%s304 + $0xc] sm:$0xf] %v311
                  %v313 = vld [vmem:[%s303 + $0x20] sm:$0xf]
                  %314 = vst [vmem:[%s304 + $0x10] sm:$0xf] %v313
                  %v315 = vld [vmem:[%s303 + $0x24] sm:$0xf]
                  %316 = vst [vmem:[%s304 + $0x14] sm:$0xf] %v315
                  %v317 = vld [vmem:[%s303 + $0x30] sm:$0xf]
                  %318 = vst [vmem:[%s304 + $0x18] sm:$0xf] %v317
                  %v319 = vld [vmem:[%s303 + $0x34] sm:$0xf]
                  %320 = vst [vmem:[%s304 + $0x1c] sm:$0xf] %v319
                  %v321 = vld [vmem:[%s303 + $0x40] sm:$0xf]
                  %322 = vst [vmem:[%s304 + $0x20] sm:$0xf] %v321
                  %v323 = vld [vmem:[%s303 + $0x44] sm:$0xf]
                  %324 = vst [vmem:[%s304 + $0x24] sm:$0xf] %v323
                  %v325 = vld [vmem:[%s303 + $0x50] sm:$0xf]
                  %326 = vst [vmem:[%s304 + $0x28] sm:$0xf] %v325
                  %v327 = vld [vmem:[%s303 + $0x54] sm:$0xf]
                  %328 = vst [vmem:[%s304 + $0x2c] sm:$0xf] %v327
                  %v329 = vld [vmem:[%s303 + $0x60] sm:$0xf]
                  %330 = vst [vmem:[%s304 + $0x30] sm:$0xf] %v329
                  %v331 = vld [vmem:[%s303 + $0x64] sm:$0xf]
                  %332 = vst [vmem:[%s304 + $0x34] sm:$0xf] %v331
                  %v333 = vld [vmem:[%s303 + $0x70] sm:$0xf]
                  %334 = vst [vmem:[%s304 + $0x38] sm:$0xf] %v333
                  %v335 = vld [vmem:[%s303 + $0x74] sm:$0xf]
                  %336 = vst [vmem:[%s304 + $0x3c] sm:$0xf] %v335
                $region71: #{tpu_custom_call.1} parent=58 // loop_footer
                  %s302 = sadd.s32 1, %s298
                $region72: #{tpu_custom_call.1} parent=58 // loop_footer_branch
                  %297 = sbr.rel target = $region68
                $region73: #{tpu_custom_call.1} parent=58 // loop_exit
                  _
              $region59: #{tpu_custom_call.1} parent=43 // pred_fallthru
                _
            $region44: #{tpu_custom_call.1} parent=39 // pred_fallthru
              _
            // Predicated region
            $region45: #{tpu_custom_call.1} parent=39 // pred_check
              _
            $region46: #{tpu_custom_call.1} parent=39 // pred_check_branch
              %244 = sbr.rel (0) target = $region48
            $region47: #{tpu_custom_call.1} parent=39 // pred_region
              loop: start=0, step=1, limit=1
              $region49: #{tpu_custom_call.1} parent=47 // loop_pre_header
                _
              $region50: #{tpu_custom_call.1} parent=47 // loop_header
                %s247 = sphi 0, %s251
                %p248 = scmp.ge.s32.totalorder %s247, 1
                %s252 = sphi %s238, %s238
                %s253 = sphi %s232, %s232
              $region51: #{tpu_custom_call.1} parent=47 // loop_header_branch
                %250 = sbr.rel (%p248) target = $region55
              $region52: #{tpu_custom_call.1} parent=47 // loop_body
                %v254 = vld [vmem:[%s252] sm:$0xf]
                %255 = vst [vmem:[%s253] sm:$0xf] %v254
                %v256 = vld [vmem:[%s252 + $0x4] sm:$0xf]
                %257 = vst [vmem:[%s253 + $0x4] sm:$0xf] %v256
                %v258 = vld [vmem:[%s252 + $0x10] sm:$0xf]
                %259 = vst [vmem:[%s253 + $0x8] sm:$0xf] %v258
                %v260 = vld [vmem:[%s252 + $0x14] sm:$0xf]
                %261 = vst [vmem:[%s253 + $0xc] sm:$0xf] %v260
                %v262 = vld [vmem:[%s252 + $0x20] sm:$0xf]
                %263 = vst [vmem:[%s253 + $0x10] sm:$0xf] %v262
                %v264 = vld [vmem:[%s252 + $0x24] sm:$0xf]
                %265 = vst [vmem:[%s253 + $0x14] sm:$0xf] %v264
                %v266 = vld [vmem:[%s252 + $0x30] sm:$0xf]
                %267 = vst [vmem:[%s253 + $0x18] sm:$0xf] %v266
                %v268 = vld [vmem:[%s252 + $0x34] sm:$0xf]
                %269 = vst [vmem:[%s253 + $0x1c] sm:$0xf] %v268
                %v270 = vld [vmem:[%s252 + $0x40] sm:$0xf]
                %271 = vst [vmem:[%s253 + $0x20] sm:$0xf] %v270
                %v272 = vld [vmem:[%s252 + $0x44] sm:$0xf]
                %273 = vst [vmem:[%s253 + $0x24] sm:$0xf] %v272
                %v274 = vld [vmem:[%s252 + $0x50] sm:$0xf]
                %275 = vst [vmem:[%s253 + $0x28] sm:$0xf] %v274
                %v276 = vld [vmem:[%s252 + $0x54] sm:$0xf]
                %277 = vst [vmem:[%s253 + $0x2c] sm:$0xf] %v276
                %v278 = vld [vmem:[%s252 + $0x60] sm:$0xf]
                %279 = vst [vmem:[%s253 + $0x30] sm:$0xf] %v278
                %v280 = vld [vmem:[%s252 + $0x64] sm:$0xf]
                %281 = vst [vmem:[%s253 + $0x34] sm:$0xf] %v280
                %v282 = vld [vmem:[%s252 + $0x70] sm:$0xf]
                %283 = vst [vmem:[%s253 + $0x38] sm:$0xf] %v282
                %v284 = vld [vmem:[%s252 + $0x74] sm:$0xf]
                %285 = vst [vmem:[%s253 + $0x3c] sm:$0xf] %v284
              $region53: #{tpu_custom_call.1} parent=47 // loop_footer
                %s251 = sadd.s32 1, %s247
              $region54: #{tpu_custom_call.1} parent=47 // loop_footer_branch
                %246 = sbr.rel target = $region50
              $region55: #{tpu_custom_call.1} parent=47 // loop_exit
                _
            $region48: #{tpu_custom_call.1} parent=39 // pred_fallthru
              _
          $region40: #{tpu_custom_call.1} parent=35 // pred_fallthru
            _
          %337 = vnop
        $region36: #{tpu_custom_call.1} parent=31 // pred_fallthru
          _
        // Predicated region
        $region74: #{tpu_custom_call.1} parent=31 // pred_check
          %p338 = pneg %p79
        $region75: #{tpu_custom_call.1} parent=31 // pred_check_branch
          %340 = sbr.rel (%p338) target = $region77
        $region76: #{tpu_custom_call.1} parent=31 // pred_region
          %s341 = sand.u32 %s69, 1
          %s342 = sand.u32 %s69, 1
          %s343 = smul.addr %s342, 64
          %s344 = scalar_lea.vmem [#allocation7], %s343
          %s345 = ssub.s32 1, %s23
          %s346 = smul.u32 8, %s345
          %s347 = smul.u32 2, %s22
          %s348 = smul.addr %s346, 4
          %s349 = sadd.s32 %s347, %s348
          %s350 = smul.addr %s349, 4
          %s351 = scalar_lea.vmem %s1, %s350
          // Predicated region
          $region78: #{tpu_custom_call.1} parent=76 // pred_check
            _
          $region79: #{tpu_custom_call.1} parent=76 // pred_check_branch
            %353 = sbr.rel (0) target = $region81
          $region80: #{tpu_custom_call.1} parent=76 // pred_region
            // Predicated region
            $region82: #{tpu_custom_call.1} parent=80 // pred_check
              _
            $region83: #{tpu_custom_call.1} parent=80 // pred_check_branch
              %355 = sbr.rel target = $region85
            $region84: #{tpu_custom_call.1} parent=80 // pred_region
              // Predicated region
              $region97: #{tpu_custom_call.1} parent=84 // pred_check
                _
              $region98: #{tpu_custom_call.1} parent=84 // pred_check_branch
                %400 = sbr.rel (0) target = $region100
              $region99: #{tpu_custom_call.1} parent=84 // pred_region
                loop: start=0, step=1, limit=1
                $region101: #{tpu_custom_call.1} parent=99 // loop_pre_header
                  _
                $region102: #{tpu_custom_call.1} parent=99 // loop_header
                  %s402 = sphi 0, %s406
                  %p403 = scmp.ge.s32.totalorder %s402, 1
                  %s407 = sphi %s351, %s351
                  %s408 = sphi %s344, %s344
                $region103: #{tpu_custom_call.1} parent=99 // loop_header_branch
                  %405 = sbr.rel (%p403) target = $region107
                $region104: #{tpu_custom_call.1} parent=99 // loop_body
                  _
                $region105: #{tpu_custom_call.1} parent=99 // loop_footer
                  %s406 = sadd.s32 1, %s402
                $region106: #{tpu_custom_call.1} parent=99 // loop_footer_branch
                  %401 = sbr.rel target = $region102
                $region107: #{tpu_custom_call.1} parent=99 // loop_exit
                  _
                loop: start=0, step=1, limit=1
                $region108: #{tpu_custom_call.1} parent=99 // loop_pre_header
                  _
                $region109: #{tpu_custom_call.1} parent=99 // loop_header
                  %s411 = sphi 0, %s415
                  %p412 = scmp.ge.s32.totalorder %s411, 1
                  %s416 = sphi %s351, %s351
                  %s417 = sphi %s344, %s344
                $region110: #{tpu_custom_call.1} parent=99 // loop_header_branch
                  %414 = sbr.rel (%p412) target = $region114
                $region111: #{tpu_custom_call.1} parent=99 // loop_body
                  %v418 = vld [vmem:[%s416] sm:$0xf]
                  %419 = vst [vmem:[%s417] sm:$0xf] %v418
                  %v420 = vld [vmem:[%s416 + $0x4] sm:$0xf]
                  %421 = vst [vmem:[%s417 + $0x4] sm:$0xf] %v420
                  %v422 = vld [vmem:[%s416 + $0x10] sm:$0xf]
                  %423 = vst [vmem:[%s417 + $0x8] sm:$0xf] %v422
                  %v424 = vld [vmem:[%s416 + $0x14] sm:$0xf]
                  %425 = vst [vmem:[%s417 + $0xc] sm:$0xf] %v424
                  %v426 = vld [vmem:[%s416 + $0x20] sm:$0xf]
                  %427 = vst [vmem:[%s417 + $0x10] sm:$0xf] %v426
                  %v428 = vld [vmem:[%s416 + $0x24] sm:$0xf]
                  %429 = vst [vmem:[%s417 + $0x14] sm:$0xf] %v428
                  %v430 = vld [vmem:[%s416 + $0x30] sm:$0xf]
                  %431 = vst [vmem:[%s417 + $0x18] sm:$0xf] %v430
                  %v432 = vld [vmem:[%s416 + $0x34] sm:$0xf]
                  %433 = vst [vmem:[%s417 + $0x1c] sm:$0xf] %v432
                  %v434 = vld [vmem:[%s416 + $0x40] sm:$0xf]
                  %435 = vst [vmem:[%s417 + $0x20] sm:$0xf] %v434
                  %v436 = vld [vmem:[%s416 + $0x44] sm:$0xf]
                  %437 = vst [vmem:[%s417 + $0x24] sm:$0xf] %v436
                  %v438 = vld [vmem:[%s416 + $0x50] sm:$0xf]
                  %439 = vst [vmem:[%s417 + $0x28] sm:$0xf] %v438
                  %v440 = vld [vmem:[%s416 + $0x54] sm:$0xf]
                  %441 = vst [vmem:[%s417 + $0x2c] sm:$0xf] %v440
                  %v442 = vld [vmem:[%s416 + $0x60] sm:$0xf]
                  %443 = vst [vmem:[%s417 + $0x30] sm:$0xf] %v442
                  %v444 = vld [vmem:[%s416 + $0x64] sm:$0xf]
                  %445 = vst [vmem:[%s417 + $0x34] sm:$0xf] %v444
                  %v446 = vld [vmem:[%s416 + $0x70] sm:$0xf]
                  %447 = vst [vmem:[%s417 + $0x38] sm:$0xf] %v446
                  %v448 = vld [vmem:[%s416 + $0x74] sm:$0xf]
                  %449 = vst [vmem:[%s417 + $0x3c] sm:$0xf] %v448
                $region112: #{tpu_custom_call.1} parent=99 // loop_footer
                  %s415 = sadd.s32 1, %s411
                $region113: #{tpu_custom_call.1} parent=99 // loop_footer_branch
                  %410 = sbr.rel target = $region109
                $region114: #{tpu_custom_call.1} parent=99 // loop_exit
                  _
              $region100: #{tpu_custom_call.1} parent=84 // pred_fallthru
                _
            $region85: #{tpu_custom_call.1} parent=80 // pred_fallthru
              _
            // Predicated region
            $region86: #{tpu_custom_call.1} parent=80 // pred_check
              _
            $region87: #{tpu_custom_call.1} parent=80 // pred_check_branch
              %357 = sbr.rel (0) target = $region89
            $region88: #{tpu_custom_call.1} parent=80 // pred_region
              loop: start=0, step=1, limit=1
              $region90: #{tpu_custom_call.1} parent=88 // loop_pre_header
                _
              $region91: #{tpu_custom_call.1} parent=88 // loop_header
                %s360 = sphi 0, %s364
                %p361 = scmp.ge.s32.totalorder %s360, 1
                %s365 = sphi %s351, %s351
                %s366 = sphi %s344, %s344
              $region92: #{tpu_custom_call.1} parent=88 // loop_header_branch
                %363 = sbr.rel (%p361) target = $region96
              $region93: #{tpu_custom_call.1} parent=88 // loop_body
                %v367 = vld [vmem:[%s365] sm:$0xf]
                %368 = vst [vmem:[%s366] sm:$0xf] %v367
                %v369 = vld [vmem:[%s365 + $0x4] sm:$0xf]
                %370 = vst [vmem:[%s366 + $0x4] sm:$0xf] %v369
                %v371 = vld [vmem:[%s365 + $0x10] sm:$0xf]
                %372 = vst [vmem:[%s366 + $0x8] sm:$0xf] %v371
                %v373 = vld [vmem:[%s365 + $0x14] sm:$0xf]
                %374 = vst [vmem:[%s366 + $0xc] sm:$0xf] %v373
                %v375 = vld [vmem:[%s365 + $0x20] sm:$0xf]
                %376 = vst [vmem:[%s366 + $0x10] sm:$0xf] %v375
                %v377 = vld [vmem:[%s365 + $0x24] sm:$0xf]
                %378 = vst [vmem:[%s366 + $0x14] sm:$0xf] %v377
                %v379 = vld [vmem:[%s365 + $0x30] sm:$0xf]
                %380 = vst [vmem:[%s366 + $0x18] sm:$0xf] %v379
                %v381 = vld [vmem:[%s365 + $0x34] sm:$0xf]
                %382 = vst [vmem:[%s366 + $0x1c] sm:$0xf] %v381
                %v383 = vld [vmem:[%s365 + $0x40] sm:$0xf]
                %384 = vst [vmem:[%s366 + $0x20] sm:$0xf] %v383
                %v385 = vld [vmem:[%s365 + $0x44] sm:$0xf]
                %386 = vst [vmem:[%s366 + $0x24] sm:$0xf] %v385
                %v387 = vld [vmem:[%s365 + $0x50] sm:$0xf]
                %388 = vst [vmem:[%s366 + $0x28] sm:$0xf] %v387
                %v389 = vld [vmem:[%s365 + $0x54] sm:$0xf]
                %390 = vst [vmem:[%s366 + $0x2c] sm:$0xf] %v389
                %v391 = vld [vmem:[%s365 + $0x60] sm:$0xf]
                %392 = vst [vmem:[%s366 + $0x30] sm:$0xf] %v391
                %v393 = vld [vmem:[%s365 + $0x64] sm:$0xf]
                %394 = vst [vmem:[%s366 + $0x34] sm:$0xf] %v393
                %v395 = vld [vmem:[%s365 + $0x70] sm:$0xf]
                %396 = vst [vmem:[%s366 + $0x38] sm:$0xf] %v395
                %v397 = vld [vmem:[%s365 + $0x74] sm:$0xf]
                %398 = vst [vmem:[%s366 + $0x3c] sm:$0xf] %v397
              $region94: #{tpu_custom_call.1} parent=88 // loop_footer
                %s364 = sadd.s32 1, %s360
              $region95: #{tpu_custom_call.1} parent=88 // loop_footer_branch
                %359 = sbr.rel target = $region91
              $region96: #{tpu_custom_call.1} parent=88 // loop_exit
                _
            $region89: #{tpu_custom_call.1} parent=80 // pred_fallthru
              _
          $region81: #{tpu_custom_call.1} parent=76 // pred_fallthru
            _
          %450 = vnop
        $region77: #{tpu_custom_call.1} parent=31 // pred_fallthru
          _
      $region32: #{tpu_custom_call.1} parent=5 // pred_fallthru
        _
      %p451 = scmp.le.s32.totalorder 1, %s15
      %p452 = scmp.lt.s32.totalorder %s15, 5
      %p453 = pnand %p451, %p452
      %p454 = pneg %p453
      // Predicated region
      $region115: #{tpu_custom_call.1} parent=5 // pred_check
        _
      $region116: #{tpu_custom_call.1} parent=5 // pred_check_branch
        %456 = sbr.rel (%p453) target = $region118
      $region117: #{tpu_custom_call.1} parent=5 // pred_region
        %s457 = ssub.s32 %s15, 1
        %s458 = sand.u32 %s42, 1
        %s459 = sand.u32 %s42, 1
        %s460 = smul.addr %s459, 64
        %s461 = scalar_lea.vmem [#allocation6], %s460
        // Predicated region
        $region119: #{tpu_custom_call.1} parent=117 // pred_check
          %p462 = pneg %p55
        $region120: #{tpu_custom_call.1} parent=117 // pred_check_branch
          %464 = sbr.rel (%p462) target = $region122
        $region121: #{tpu_custom_call.1} parent=117 // pred_region
          _
        $region122: #{tpu_custom_call.1} parent=117 // pred_fallthru
          _
        %s465 = sand.u32 %s72, 1
        %s466 = sand.u32 %s72, 1
        %s467 = smul.addr %s466, 64
        %s468 = scalar_lea.vmem [#allocation7], %s467
        // Predicated region
        $region123: #{tpu_custom_call.1} parent=117 // pred_check
          %p469 = pneg %p85
        $region124: #{tpu_custom_call.1} parent=117 // pred_check_branch
          %471 = sbr.rel (%p469) target = $region126
        $region125: #{tpu_custom_call.1} parent=117 // pred_region
          _
        $region126: #{tpu_custom_call.1} parent=117 // pred_fallthru
          _
        %s472 = sand.u32 %s42, 1
        %s473 = sand.u32 %s42, 1
        %s474 = smul.addr %s473, 64
        %s475 = scalar_lea.vmem [#allocation6], %s474
        %p476 = pneg %p55
        %p477 = pneg %p52
        %s478 = sand.u32 %s72, 1
        %s479 = sand.u32 %s72, 1
        %s480 = smul.addr %s479, 64
        %s481 = scalar_lea.vmem [#allocation7], %s480
        %p482 = pneg %p85
        %p483 = pneg %p82
        %p484 = pneg %p106
        %p485 = pneg %p103
        %p486 = pneg %p127
        %p487 = pneg %p124
        %p488 = pneg %p148
        %p489 = pneg %p145
        %p490 = pneg %p169
        %p491 = pneg %p166
        %p492 = pneg %p195
        %p493 = pneg %p192
        %s494 = sand.u32 %s182, 1
        %s495 = scalar_lea.sflag [#allocation9], %s494
        %s496 = sand.u32 %s182, 1
        %s497 = smul.addr %s496, 16
        %s498 = scalar_lea.vmem [#allocation8], %s497
        %s499 = smul.u32 8, %s25
        %s500 = smul.u32 2, %s24
        %s501 = ssub.s32 1, %s25
        %s502 = smul.u32 8, %s501
        %s503 = smul.u32 2, %s24
        %s504 = smul.u32 2, %s24
        %p506 = scmp.eq.s32.totalorder %s25, 0
        // Predicated region
        $region127: #{tpu_custom_call.1} parent=117 // pred_check
          %p507 = pneg %p506
        $region128: #{tpu_custom_call.1} parent=117 // pred_check_branch
          %509 = sbr.rel (%p507) target = $region130
        $region129: #{tpu_custom_call.1} parent=117 // pred_region
          %510 = vst [vmem:[#allocation4] sm:$0xff] 0.0
          %511 = vst [vmem:[#allocation4 + $0x8] sm:$0xff] 0.0
          %512 = vst [vmem:[#allocation5] sm:$0xff] 0.0
          %513 = vst [vmem:[#allocation5 + $0x8] sm:$0xff] 0.0
        $region130: #{tpu_custom_call.1} parent=117 // pred_fallthru
          _
        %v514 = vld [vmem:[%s461] sm:$0xf]
        %v515 = vld [vmem:[%s461 + $0x4] sm:$0xf]
        %v516 = vld [vmem:[%s461 + $0x8] sm:$0xf]
        %v517 = vld [vmem:[%s461 + $0xc] sm:$0xf]
        %v518 = vld [vmem:[%s461 + $0x10] sm:$0xf]
        %v519 = vld [vmem:[%s461 + $0x14] sm:$0xf]
        %v520 = vld [vmem:[%s461 + $0x18] sm:$0xf]
        %v521 = vld [vmem:[%s461 + $0x1c] sm:$0xf]
        %v522 = vld [vmem:[%s461 + $0x20] sm:$0xf]
        %v523 = vld [vmem:[%s461 + $0x24] sm:$0xf]
        %v524 = vld [vmem:[%s461 + $0x28] sm:$0xf]
        %v525 = vld [vmem:[%s461 + $0x2c] sm:$0xf]
        %v526 = vld [vmem:[%s461 + $0x30] sm:$0xf]
        %v527 = vld [vmem:[%s461 + $0x34] sm:$0xf]
        %v528 = vld [vmem:[%s461 + $0x38] sm:$0xf]
        %v529 = vld [vmem:[%s461 + $0x3c] sm:$0xf]
        %v530 = vld [vmem:[%s468] sm:$0xf]
        %v531 = vld [vmem:[%s468 + $0x4] sm:$0xf]
        %v532 = vld [vmem:[%s468 + $0x8] sm:$0xf]
        %v533 = vld [vmem:[%s468 + $0xc] sm:$0xf]
        %v534 = vld [vmem:[%s468 + $0x10] sm:$0xf]
        %v535 = vld [vmem:[%s468 + $0x14] sm:$0xf]
        %v536 = vld [vmem:[%s468 + $0x18] sm:$0xf]
        %v537 = vld [vmem:[%s468 + $0x1c] sm:$0xf]
        %v538 = vld [vmem:[%s468 + $0x20] sm:$0xf]
        %v539 = vld [vmem:[%s468 + $0x24] sm:$0xf]
        %v540 = vld [vmem:[%s468 + $0x28] sm:$0xf]
        %v541 = vld [vmem:[%s468 + $0x2c] sm:$0xf]
        %v542 = vld [vmem:[%s468 + $0x30] sm:$0xf]
        %v543 = vld [vmem:[%s468 + $0x34] sm:$0xf]
        %v544 = vld [vmem:[%s468 + $0x38] sm:$0xf]
        %v545 = vld [vmem:[%s468 + $0x3c] sm:$0xf]
        %v546 = vld [vmem:[%s2] sm:$0xff]
        %v547 = vld [vmem:[%s2 + $0x8] sm:$0xff]
        %v548 = vld [vmem:[%s5] sm:$0xf]
        %v550 = vlaneseq
        %v551 = vshrl.u32 %v550, 7
        %v552 = vsub.s32 0, %v551
        %v553 = vrot.slane %v548, %v552
        %v554 = vlaneseq
        %v555 = vshrl.u32 %v554, 7
        %v556 = vsub.s32 1, %v555
        %v557 = vrot.slane %v548, %v556
        %v558 = vlaneseq
        %v559 = vshrl.u32 %v558, 7
        %v560 = vsub.s32 2, %v559
        %v561 = vrot.slane %v548, %v560
        %v562 = vlaneseq
        %v563 = vshrl.u32 %v562, 7
        %v564 = vsub.s32 3, %v563
        %v565 = vrot.slane %v548, %v564
        %v586 = vunpack.c.l.b16 %v514
        %v587 = vunpack.c.l.b16 %v515
        %v588 = vunpack.c.l.b16 %v516
        %v589 = vunpack.c.l.b16 %v517
        %v590 = vunpack.c.l.b16 %v518
        %v591 = vunpack.c.l.b16 %v519
        %v592 = vunpack.c.l.b16 %v520
        %v593 = vunpack.c.l.b16 %v521
        %v594 = vunpack.c.l.b16 %v522
        %v595 = vunpack.c.l.b16 %v523
        %v596 = vunpack.c.l.b16 %v524
        %v597 = vunpack.c.l.b16 %v525
        %v598 = vunpack.c.l.b16 %v526
        %v599 = vunpack.c.l.b16 %v527
        %v600 = vunpack.c.l.b16 %v528
        %v601 = vunpack.c.l.b16 %v529
        %v602 = vpack.c.b16 %v587, %v586
        %v603 = vpack.c.b16 %v589, %v588
        %v604 = vpack.c.b16 %v591, %v590
        %v605 = vpack.c.b16 %v593, %v592
        %v606 = vpack.c.b16 %v595, %v594
        %v607 = vpack.c.b16 %v597, %v596
        %v608 = vpack.c.b16 %v599, %v598
        %v609 = vpack.c.b16 %v601, %v600
        %v612 = vunpack.c.l.b16 %v546
        %v613 = vunpack.c.h.b16 %v546
        %v614 = vunpack.c.l.b16 %v547
        %v615 = vunpack.c.h.b16 %v547
        %v616 = vpack.c.b16 %v612, %v612
        %v617 = vpack.c.b16 %v613, %v613
        %v618 = vpack.c.b16 %v614, %v614
        %v619 = vpack.c.b16 %v615, %v615
        %vm620 = vcmask 64512
        %v622 = vsel %vm620, %v602, 0
        %v625 = vsel %vm620, %v603, 0
        %v628 = vsel %vm620, %v604, 0
        %v631 = vsel %vm620, %v605, 0
        %v634 = vsel %vm620, %v606, 0
        %v637 = vsel %vm620, %v607, 0
        %v640 = vsel %vm620, %v608, 0
        %v643 = vsel %vm620, %v609, 0
        %vm645 = vcmask 1043456
        %v647 = vsel %vm645, %v616, 0
        %v650 = vsel %vm645, %v617, 0
        %v653 = vsel %vm645, %v618, 0
        %v656 = vsel %vm645, %v619, 0
        %658 = vmatprep.subr.bf16.mxu0 %v650
        %659 = vmatpush1.bf16.msra.mxu0 %v647
        %660 = vmatprep.subr.bf16.mxu0 0
        %661 = vmatpush1.bf16.msra.mxu0 0
        %662 = vmatprep.subr.bf16.mxu0 0
        %663 = vmatpush1.bf16.msra.mxu0 0
        %664 = vmatprep.subr.bf16.mxu0 0
        %665 = vmatpush1.bf16.msra.mxu0 0
        %666 = vmatprep.subr.bf16.mxu0 0
        %667 = vmatpush1.bf16.msra.mxu0 0
        %668 = vmatprep.subr.bf16.mxu0 0
        %669 = vmatpush1.bf16.msra.mxu0 0
        %670 = vmatprep.subr.bf16.mxu0 0
        %671 = vmatpush1.bf16.msra.mxu0 0
        %672 = vmatprep.subr.bf16.mxu0 0
        %673 = vmatpush1.bf16.msra.mxu0 0
        %674 = vmatprep.subr.bf16.mxu0 0
        %675 = vmatpush1.bf16.msra.mxu0 0
        %676 = vmatprep.subr.bf16.mxu0 0
        %677 = vmatpush1.bf16.msra.mxu0 0
        %678 = vmatprep.subr.bf16.mxu0 0
        %679 = vmatpush1.bf16.msra.mxu0 0
        %680 = vmatprep.subr.bf16.mxu0 0
        %681 = vmatpush1.bf16.msra.mxu0 0
        %682 = vmatprep.subr.bf16.mxu0 0
        %683 = vmatpush1.bf16.msra.mxu0 0
        %684 = vmatprep.subr.bf16.mxu0 0
        %685 = vmatpush1.bf16.msra.mxu0 0
        %686 = vmatprep.subr.bf16.mxu0 0
        %687 = vmatpush1.bf16.msra.mxu0 0
        %688 = vmatprep.subr.bf16.mxu0 0
        %689 = vmatpush1.bf16.msra.mxu0 0
        %690 = vmatprep.mubr.bf16.mxu0 0
        %691 = vmatmul.mubr.bf16.gmra.mrb[0].mxu0 %v622
        %v692 = vpop.f32.mrb[0].mxu0
        %v693 = vadd.f32 %v553, %v692
        %v694 = vpop.f32.mrb[0].mxu0
        %v695 = vadd.f32 %v557, %v694
        %v696 = vpop.f32.mrb[0].mxu0
        %v697 = vadd.f32 %v553, %v696
        %v698 = vpop.f32.mrb[0].mxu0
        %v699 = vadd.f32 %v557, %v698
        %700 = vmatprep.mubr.bf16.mxu0 0
        %701 = vmatmul.mubr.bf16.gmra.mrb[0].mxu0 %v625
        %v702 = vpop.f32.mrb[0].mxu0
        %v703 = vadd.f32 %v553, %v702
        %v704 = vpop.f32.mrb[0].mxu0
        %v705 = vadd.f32 %v557, %v704
        %v706 = vpop.f32.mrb[0].mxu0
        %v707 = vadd.f32 %v553, %v706
        %v708 = vpop.f32.mrb[0].mxu0
        %v709 = vadd.f32 %v557, %v708
        %710 = vmatprep.mubr.bf16.mxu0 0
        %711 = vmatmul.mubr.bf16.gmra.mrb[0].mxu0 %v628
        %v712 = vpop.f32.mrb[0].mxu0
        %v713 = vadd.f32 %v553, %v712
        %v714 = vpop.f32.mrb[0].mxu0
        %v715 = vadd.f32 %v557, %v714
        %v716 = vpop.f32.mrb[0].mxu0
        %v717 = vadd.f32 %v553, %v716
        %v718 = vpop.f32.mrb[0].mxu0
        %v719 = vadd.f32 %v557, %v718
        %720 = vmatprep.mubr.bf16.mxu0 0
        %721 = vmatmul.mubr.bf16.gmra.mrb[0].mxu0 %v631
        %v722 = vpop.f32.mrb[0].mxu0
        %v723 = vadd.f32 %v553, %v722
        %v724 = vpop.f32.mrb[0].mxu0
        %v725 = vadd.f32 %v557, %v724
        %v726 = vpop.f32.mrb[0].mxu0
        %v727 = vadd.f32 %v553, %v726
        %v728 = vpop.f32.mrb[0].mxu0
        %v729 = vadd.f32 %v557, %v728
        %730 = vmatprep.mubr.bf16.mxu0 0
        %731 = vmatmul.mubr.bf16.gmra.mrb[0].mxu0 %v634
        %v732 = vpop.f32.mrb[0].mxu0
        %v733 = vadd.f32 %v553, %v732
        %v734 = vpop.f32.mrb[0].mxu0
        %v735 = vadd.f32 %v557, %v734
        %v736 = vpop.f32.mrb[0].mxu0
        %v737 = vadd.f32 %v553, %v736
        %v738 = vpop.f32.mrb[0].mxu0
        %v739 = vadd.f32 %v557, %v738
        %740 = vmatprep.mubr.bf16.mxu0 0
        %741 = vmatmul.mubr.bf16.gmra.mrb[0].mxu0 %v637
        %v742 = vpop.f32.mrb[0].mxu0
        %v743 = vadd.f32 %v553, %v742
        %v744 = vpop.f32.mrb[0].mxu0
        %v745 = vadd.f32 %v557, %v744
        %v746 = vpop.f32.mrb[0].mxu0
        %v747 = vadd.f32 %v553, %v746
        %v748 = vpop.f32.mrb[0].mxu0
        %v749 = vadd.f32 %v557, %v748
        %750 = vmatprep.mubr.bf16.mxu0 0
        %751 = vmatmul.mubr.bf16.gmra.mrb[0].mxu0 %v640
        %v752 = vpop.f32.mrb[0].mxu0
        %v753 = vadd.f32 %v553, %v752
        %v754 = vpop.f32.mrb[0].mxu0
        %v755 = vadd.f32 %v557, %v754
        %v756 = vpop.f32.mrb[0].mxu0
        %v757 = vadd.f32 %v553, %v756
        %v758 = vpop.f32.mrb[0].mxu0
        %v759 = vadd.f32 %v557, %v758
        %760 = vmatprep.mubr.bf16.mxu0 0
        %761 = vmatmul.mubr.bf16.gmra.mrb[0].mxu0 %v643
        %v762 = vpop.f32.mrb[0].mxu0
        %v763 = vadd.f32 %v553, %v762
        %v764 = vpop.f32.mrb[0].mxu0
        %v765 = vadd.f32 %v557, %v764
        %v766 = vpop.f32.mrb[0].mxu0
        %v767 = vadd.f32 %v553, %v766
        %v768 = vpop.f32.mrb[0].mxu0
        %v769 = vadd.f32 %v557, %v768
        %770 = vdwg.mxu0
        %771 = vmatprep.subr.bf16.mxu0 %v656
        %772 = vmatpush1.bf16.msra.mxu0 %v653
        %773 = vmatprep.subr.bf16.mxu0 0
        %774 = vmatpush1.bf16.msra.mxu0 0
        %775 = vmatprep.subr.bf16.mxu0 0
        %776 = vmatpush1.bf16.msra.mxu0 0
        %777 = vmatprep.subr.bf16.mxu0 0
        %778 = vmatpush1.bf16.msra.mxu0 0
        %779 = vmatprep.subr.bf16.mxu0 0
        %780 = vmatpush1.bf16.msra.mxu0 0
        %781 = vmatprep.subr.bf16.mxu0 0
        %782 = vmatpush1.bf16.msra.mxu0 0
        %783 = vmatprep.subr.bf16.mxu0 0
        %784 = vmatpush1.bf16.msra.mxu0 0
        %785 = vmatprep.subr.bf16.mxu0 0
        %786 = vmatpush1.bf16.msra.mxu0 0
        %787 = vmatprep.subr.bf16.mxu0 0
        %788 = vmatpush1.bf16.msra.mxu0 0
        %789 = vmatprep.subr.bf16.mxu0 0
        %790 = vmatpush1.bf16.msra.mxu0 0
        %791 = vmatprep.subr.bf16.mxu0 0
        %792 = vmatpush1.bf16.msra.mxu0 0
        %793 = vmatprep.subr.bf16.mxu0 0
        %794 = vmatpush1.bf16.msra.mxu0 0
        %795 = vmatprep.subr.bf16.mxu0 0
        %796 = vmatpush1.bf16.msra.mxu0 0
        %797 = vmatprep.subr.bf16.mxu0 0
        %798 = vmatpush1.bf16.msra.mxu0 0
        %799 = vmatprep.subr.bf16.mxu0 0
        %800 = vmatpush1.bf16.msra.mxu0 0
        %801 = vmatprep.subr.bf16.mxu0 0
        %802 = vmatpush1.bf16.msra.mxu0 0
        %803 = vmatprep.mubr.bf16.mxu0 0
        %804 = vmatmul.mubr.bf16.gmra.mrb[0].mxu0 %v622
        %v805 = vpop.f32.mrb[0].mxu0
        %v806 = vadd.f32 %v561, %v805
        %v807 = vpop.f32.mrb[0].mxu0
        %v808 = vadd.f32 %v565, %v807
        %v809 = vpop.f32.mrb[0].mxu0
        %v810 = vadd.f32 %v561, %v809
        %v811 = vpop.f32.mrb[0].mxu0
        %v812 = vadd.f32 %v565, %v811
        %813 = vmatprep.mubr.bf16.mxu0 0
        %814 = vmatmul.mubr.bf16.gmra.mrb[0].mxu0 %v625
        %v815 = vpop.f32.mrb[0].mxu0
        %v816 = vadd.f32 %v561, %v815
        %v817 = vpop.f32.mrb[0].mxu0
        %v818 = vadd.f32 %v565, %v817
        %v819 = vpop.f32.mrb[0].mxu0
        %v820 = vadd.f32 %v561, %v819
        %v821 = vpop.f32.mrb[0].mxu0
        %v822 = vadd.f32 %v565, %v821
        %823 = vmatprep.mubr.bf16.mxu0 0
        %824 = vmatmul.mubr.bf16.gmra.mrb[0].mxu0 %v628
        %v825 = vpop.f32.mrb[0].mxu0
        %v826 = vadd.f32 %v561, %v825
        %v827 = vpop.f32.mrb[0].mxu0
        %v828 = vadd.f32 %v565, %v827
        %v829 = vpop.f32.mrb[0].mxu0
        %v830 = vadd.f32 %v561, %v829
        %v831 = vpop.f32.mrb[0].mxu0
        %v832 = vadd.f32 %v565, %v831
        %833 = vmatprep.mubr.bf16.mxu0 0
        %834 = vmatmul.mubr.bf16.gmra.mrb[0].mxu0 %v631
        %v835 = vpop.f32.mrb[0].mxu0
        %v836 = vadd.f32 %v561, %v835
        %v837 = vpop.f32.mrb[0].mxu0
        %v838 = vadd.f32 %v565, %v837
        %v839 = vpop.f32.mrb[0].mxu0
        %v840 = vadd.f32 %v561, %v839
        %v841 = vpop.f32.mrb[0].mxu0
        %v842 = vadd.f32 %v565, %v841
        %843 = vmatprep.mubr.bf16.mxu0 0
        %844 = vmatmul.mubr.bf16.gmra.mrb[0].mxu0 %v634
        %v845 = vpop.f32.mrb[0].mxu0
        %v846 = vadd.f32 %v561, %v845
        %v847 = vpop.f32.mrb[0].mxu0
        %v848 = vadd.f32 %v565, %v847
        %v849 = vpop.f32.mrb[0].mxu0
        %v850 = vadd.f32 %v561, %v849
        %v851 = vpop.f32.mrb[0].mxu0
        %v852 = vadd.f32 %v565, %v851
        %853 = vmatprep.mubr.bf16.mxu0 0
        %854 = vmatmul.mubr.bf16.gmra.mrb[0].mxu0 %v637
        %v855 = vpop.f32.mrb[0].mxu0
        %v856 = vadd.f32 %v561, %v855
        %v857 = vpop.f32.mrb[0].mxu0
        %v858 = vadd.f32 %v565, %v857
        %v859 = vpop.f32.mrb[0].mxu0
        %v860 = vadd.f32 %v561, %v859
        %v861 = vpop.f32.mrb[0].mxu0
        %v862 = vadd.f32 %v565, %v861
        %863 = vmatprep.mubr.bf16.mxu0 0
        %864 = vmatmul.mubr.bf16.gmra.mrb[0].mxu0 %v640
        %v865 = vpop.f32.mrb[0].mxu0
        %v866 = vadd.f32 %v561, %v865
        %v867 = vpop.f32.mrb[0].mxu0
        %v868 = vadd.f32 %v565, %v867
        %v869 = vpop.f32.mrb[0].mxu0
        %v870 = vadd.f32 %v561, %v869
        %v871 = vpop.f32.mrb[0].mxu0
        %v872 = vadd.f32 %v565, %v871
        %873 = vmatprep.mubr.bf16.mxu0 0
        %874 = vmatmul.mubr.bf16.gmra.mrb[0].mxu0 %v643
        %v875 = vpop.f32.mrb[0].mxu0
        %v876 = vadd.f32 %v561, %v875
        %v877 = vpop.f32.mrb[0].mxu0
        %v878 = vadd.f32 %v565, %v877
        %v879 = vpop.f32.mrb[0].mxu0
        %v880 = vadd.f32 %v561, %v879
        %v881 = vpop.f32.mrb[0].mxu0
        %v882 = vadd.f32 %v565, %v881
        %883 = vdwg.mxu0
        %884 = vst [vmem:[#allocation2] sm:$0xff] %v693
        %885 = vst [vmem:[#allocation2 + $0x8] sm:$0xff] %v695
        %886 = vst [vmem:[#allocation2 + $0x10] sm:$0xff] %v806
        %887 = vst [vmem:[#allocation2 + $0x18] sm:$0xff] %v808
        %888 = vst [vmem:[#allocation2 + $0x20] sm:$0xff] %v697
        %889 = vst [vmem:[#allocation2 + $0x28] sm:$0xff] %v699
        %890 = vst [vmem:[#allocation2 + $0x30] sm:$0xff] %v810
        %891 = vst [vmem:[#allocation2 + $0x38] sm:$0xff] %v812
        %892 = vst [vmem:[#allocation2 + $0x40] sm:$0xff] %v703
        %893 = vst [vmem:[#allocation2 + $0x48] sm:$0xff] %v705
        %894 = vst [vmem:[#allocation2 + $0x50] sm:$0xff] %v816
        %895 = vst [vmem:[#allocation2 + $0x58] sm:$0xff] %v818
        %896 = vst [vmem:[#allocation2 + $0x60] sm:$0xff] %v707
        %897 = vst [vmem:[#allocation2 + $0x68] sm:$0xff] %v709
        %898 = vst [vmem:[#allocation2 + $0x70] sm:$0xff] %v820
        %899 = vst [vmem:[#allocation2 + $0x78] sm:$0xff] %v822
        %900 = vst [vmem:[#allocation2 + $0x80] sm:$0xff] %v713
        %901 = vst [vmem:[#allocation2 + $0x88] sm:$0xff] %v715
        %902 = vst [vmem:[#allocation2 + $0x90] sm:$0xff] %v826
        %903 = vst [vmem:[#allocation2 + $0x98] sm:$0xff] %v828
        %904 = vst [vmem:[#allocation2 + $0xa0] sm:$0xff] %v717
        %905 = vst [vmem:[#allocation2 + $0xa8] sm:$0xff] %v719
        %906 = vst [vmem:[#allocation2 + $0xb0] sm:$0xff] %v830
        %907 = vst [vmem:[#allocation2 + $0xb8] sm:$0xff] %v832
        %908 = vst [vmem:[#allocation2 + $0xc0] sm:$0xff] %v723
        %909 = vst [vmem:[#allocation2 + $0xc8] sm:$0xff] %v725
        %910 = vst [vmem:[#allocation2 + $0xd0] sm:$0xff] %v836
        %911 = vst [vmem:[#allocation2 + $0xd8] sm:$0xff] %v838
        %912 = vst [vmem:[#allocation2 + $0xe0] sm:$0xff] %v727
        %913 = vst [vmem:[#allocation2 + $0xe8] sm:$0xff] %v729
        %914 = vst [vmem:[#allocation2 + $0xf0] sm:$0xff] %v840
        %915 = vst [vmem:[#allocation2 + $0xf8] sm:$0xff] %v842
        %916 = vst [vmem:[#allocation2 + $0x100] sm:$0xff] %v733
        %917 = vst [vmem:[#allocation2 + $0x108] sm:$0xff] %v735
        %918 = vst [vmem:[#allocation2 + $0x110] sm:$0xff] %v846
        %919 = vst [vmem:[#allocation2 + $0x118] sm:$0xff] %v848
        %920 = vst [vmem:[#allocation2 + $0x120] sm:$0xff] %v737
        %921 = vst [vmem:[#allocation2 + $0x128] sm:$0xff] %v739
        %922 = vst [vmem:[#allocation2 + $0x130] sm:$0xff] %v850
        %923 = vst [vmem:[#allocation2 + $0x138] sm:$0xff] %v852
        %924 = vst [vmem:[#allocation2 + $0x140] sm:$0xff] %v743
        %925 = vst [vmem:[#allocation2 + $0x148] sm:$0xff] %v745
        %926 = vst [vmem:[#allocation2 + $0x150] sm:$0xff] %v856
        %927 = vst [vmem:[#allocation2 + $0x158] sm:$0xff] %v858
        %928 = vst [vmem:[#allocation2 + $0x160] sm:$0xff] %v747
        %929 = vst [vmem:[#allocation2 + $0x168] sm:$0xff] %v749
        %930 = vst [vmem:[#allocation2 + $0x170] sm:$0xff] %v860
        %931 = vst [vmem:[#allocation2 + $0x178] sm:$0xff] %v862
        %932 = vst [vmem:[#allocation2 + $0x180] sm:$0xff] %v753
        %933 = vst [vmem:[#allocation2 + $0x188] sm:$0xff] %v755
        %934 = vst [vmem:[#allocation2 + $0x190] sm:$0xff] %v866
        %935 = vst [vmem:[#allocation2 + $0x198] sm:$0xff] %v868
        %936 = vst [vmem:[#allocation2 + $0x1a0] sm:$0xff] %v757
        %937 = vst [vmem:[#allocation2 + $0x1a8] sm:$0xff] %v759
        %938 = vst [vmem:[#allocation2 + $0x1b0] sm:$0xff] %v870
        %939 = vst [vmem:[#allocation2 + $0x1b8] sm:$0xff] %v872
        %940 = vst [vmem:[#allocation2 + $0x1c0] sm:$0xff] %v763
        %941 = vst [vmem:[#allocation2 + $0x1c8] sm:$0xff] %v765
        %942 = vst [vmem:[#allocation2 + $0x1d0] sm:$0xff] %v876
        %943 = vst [vmem:[#allocation2 + $0x1d8] sm:$0xff] %v878
        %944 = vst [vmem:[#allocation2 + $0x1e0] sm:$0xff] %v767
        %945 = vst [vmem:[#allocation2 + $0x1e8] sm:$0xff] %v769
        %946 = vst [vmem:[#allocation2 + $0x1f0] sm:$0xff] %v880
        %947 = vst [vmem:[#allocation2 + $0x1f8] sm:$0xff] %v882
        %v948 = vld [vmem:[%s3] sm:$0xff]
        %v949 = vld [vmem:[%s3 + $0x8] sm:$0xff]
        %v966 = vunpack.c.l.b16 %v530
        %v967 = vunpack.c.l.b16 %v531
        %v968 = vunpack.c.l.b16 %v532
        %v969 = vunpack.c.l.b16 %v533
        %v970 = vunpack.c.l.b16 %v534
        %v971 = vunpack.c.l.b16 %v535
        %v972 = vunpack.c.l.b16 %v536
        %v973 = vunpack.c.l.b16 %v537
        %v974 = vunpack.c.l.b16 %v538
        %v975 = vunpack.c.l.b16 %v539
        %v976 = vunpack.c.l.b16 %v540
        %v977 = vunpack.c.l.b16 %v541
        %v978 = vunpack.c.l.b16 %v542
        %v979 = vunpack.c.l.b16 %v543
        %v980 = vunpack.c.l.b16 %v544
        %v981 = vunpack.c.l.b16 %v545
        %v982 = vpack.c.b16 %v967, %v966
        %v983 = vpack.c.b16 %v969, %v968
        %v984 = vpack.c.b16 %v971, %v970
        %v985 = vpack.c.b16 %v973, %v972
        %v986 = vpack.c.b16 %v975, %v974
        %v987 = vpack.c.b16 %v977, %v976
        %v988 = vpack.c.b16 %v979, %v978
        %v989 = vpack.c.b16 %v981, %v980
        %v992 = vunpack.c.l.b16 %v948
        %v993 = vunpack.c.h.b16 %v948
        %v994 = vunpack.c.l.b16 %v949
        %v995 = vunpack.c.h.b16 %v949
        %v996 = vpack.c.b16 %v992, %v992
        %v997 = vpack.c.b16 %v993, %v993
        %v998 = vpack.c.b16 %v994, %v994
        %v999 = vpack.c.b16 %v995, %v995
        %v1001 = vsel %vm620, %v982, 0
        %v1004 = vsel %vm620, %v983, 0
        %v1007 = vsel %vm620, %v984, 0
        %v1010 = vsel %vm620, %v985, 0
        %v1013 = vsel %vm620, %v986, 0
        %v1016 = vsel %vm620, %v987, 0
        %v1019 = vsel %vm620, %v988, 0
        %v1022 = vsel %vm620, %v989, 0
        %v1025 = vsel %vm645, %v996, 0
        %v1028 = vsel %vm645, %v997, 0
        %v1031 = vsel %vm645, %v998, 0
        %v1034 = vsel %vm645, %v999, 0
        %1036 = vmatprep.subr.bf16.mxu0 %v1028
        %1037 = vmatpush1.bf16.msra.mxu0 %v1025
        %1038 = vmatprep.subr.bf16.mxu0 0
        %1039 = vmatpush1.bf16.msra.mxu0 0
        %1040 = vmatprep.subr.bf16.mxu0 0
        %1041 = vmatpush1.bf16.msra.mxu0 0
        %1042 = vmatprep.subr.bf16.mxu0 0
        %1043 = vmatpush1.bf16.msra.mxu0 0
        %1044 = vmatprep.subr.bf16.mxu0 0
        %1045 = vmatpush1.bf16.msra.mxu0 0
        %1046 = vmatprep.subr.bf16.mxu0 0
        %1047 = vmatpush1.bf16.msra.mxu0 0
        %1048 = vmatprep.subr.bf16.mxu0 0
        %1049 = vmatpush1.bf16.msra.mxu0 0
        %1050 = vmatprep.subr.bf16.mxu0 0
        %1051 = vmatpush1.bf16.msra.mxu0 0
        %1052 = vmatprep.subr.bf16.mxu0 0
        %1053 = vmatpush1.bf16.msra.mxu0 0
        %1054 = vmatprep.subr.bf16.mxu0 0
        %1055 = vmatpush1.bf16.msra.mxu0 0
        %1056 = vmatprep.subr.bf16.mxu0 0
        %1057 = vmatpush1.bf16.msra.mxu0 0
        %1058 = vmatprep.subr.bf16.mxu0 0
        %1059 = vmatpush1.bf16.msra.mxu0 0
        %1060 = vmatprep.subr.bf16.mxu0 0
        %1061 = vmatpush1.bf16.msra.mxu0 0
        %1062 = vmatprep.subr.bf16.mxu0 0
        %1063 = vmatpush1.bf16.msra.mxu0 0
        %1064 = vmatprep.subr.bf16.mxu0 0
        %1065 = vmatpush1.bf16.msra.mxu0 0
        %1066 = vmatprep.subr.bf16.mxu0 0
        %1067 = vmatpush1.bf16.msra.mxu0 0
        %1068 = vmatprep.mubr.bf16.mxu0 0
        %1069 = vmatmul.mubr.bf16.gmra.mrb[0].mxu0 %v1001
        %v1070 = vpop.f32.mrb[0].mxu0
        %v1071 = vadd.f32 0.0, %v1070
        %v1072 = vpop.f32.mrb[0].mxu0
        %v1073 = vadd.f32 0.0, %v1072
        %v1074 = vpop.f32.mrb[0].mxu0
        %v1075 = vadd.f32 0.0, %v1074
        %v1076 = vpop.f32.mrb[0].mxu0
        %v1077 = vadd.f32 0.0, %v1076
        %1078 = vmatprep.mubr.bf16.mxu0 0
        %1079 = vmatmul.mubr.bf16.gmra.mrb[0].mxu0 %v1004
        %v1080 = vpop.f32.mrb[0].mxu0
        %v1081 = vadd.f32 0.0, %v1080
        %v1082 = vpop.f32.mrb[0].mxu0
        %v1083 = vadd.f32 0.0, %v1082
        %v1084 = vpop.f32.mrb[0].mxu0
        %v1085 = vadd.f32 0.0, %v1084
        %v1086 = vpop.f32.mrb[0].mxu0
        %v1087 = vadd.f32 0.0, %v1086
        %1088 = vmatprep.mubr.bf16.mxu0 0
        %1089 = vmatmul.mubr.bf16.gmra.mrb[0].mxu0 %v1007
        %v1090 = vpop.f32.mrb[0].mxu0
        %v1091 = vadd.f32 0.0, %v1090
        %v1092 = vpop.f32.mrb[0].mxu0
        %v1093 = vadd.f32 0.0, %v1092
        %v1094 = vpop.f32.mrb[0].mxu0
        %v1095 = vadd.f32 0.0, %v1094
        %v1096 = vpop.f32.mrb[0].mxu0
        %v1097 = vadd.f32 0.0, %v1096
        %1098 = vmatprep.mubr.bf16.mxu0 0
        %1099 = vmatmul.mubr.bf16.gmra.mrb[0].mxu0 %v1010
        %v1100 = vpop.f32.mrb[0].mxu0
        %v1101 = vadd.f32 0.0, %v1100
        %v1102 = vpop.f32.mrb[0].mxu0
        %v1103 = vadd.f32 0.0, %v1102
        %v1104 = vpop.f32.mrb[0].mxu0
        %v1105 = vadd.f32 0.0, %v1104
        %v1106 = vpop.f32.mrb[0].mxu0
        %v1107 = vadd.f32 0.0, %v1106
        %1108 = vmatprep.mubr.bf16.mxu0 0
        %1109 = vmatmul.mubr.bf16.gmra.mrb[0].mxu0 %v1013
        %v1110 = vpop.f32.mrb[0].mxu0
        %v1111 = vadd.f32 0.0, %v1110
        %v1112 = vpop.f32.mrb[0].mxu0
        %v1113 = vadd.f32 0.0, %v1112
        %v1114 = vpop.f32.mrb[0].mxu0
        %v1115 = vadd.f32 0.0, %v1114
        %v1116 = vpop.f32.mrb[0].mxu0
        %v1117 = vadd.f32 0.0, %v1116
        %1118 = vmatprep.mubr.bf16.mxu0 0
        %1119 = vmatmul.mubr.bf16.gmra.mrb[0].mxu0 %v1016
        %v1120 = vpop.f32.mrb[0].mxu0
        %v1121 = vadd.f32 0.0, %v1120
        %v1122 = vpop.f32.mrb[0].mxu0
        %v1123 = vadd.f32 0.0, %v1122
        %v1124 = vpop.f32.mrb[0].mxu0
        %v1125 = vadd.f32 0.0, %v1124
        %v1126 = vpop.f32.mrb[0].mxu0
        %v1127 = vadd.f32 0.0, %v1126
        %1128 = vmatprep.mubr.bf16.mxu0 0
        %1129 = vmatmul.mubr.bf16.gmra.mrb[0].mxu0 %v1019
        %v1130 = vpop.f32.mrb[0].mxu0
        %v1131 = vadd.f32 0.0, %v1130
        %v1132 = vpop.f32.mrb[0].mxu0
        %v1133 = vadd.f32 0.0, %v1132
        %v1134 = vpop.f32.mrb[0].mxu0
        %v1135 = vadd.f32 0.0, %v1134
        %v1136 = vpop.f32.mrb[0].mxu0
        %v1137 = vadd.f32 0.0, %v1136
        %1138 = vmatprep.mubr.bf16.mxu0 0
        %1139 = vmatmul.mubr.bf16.gmra.mrb[0].mxu0 %v1022
        %v1140 = vpop.f32.mrb[0].mxu0
        %v1141 = vadd.f32 0.0, %v1140
        %v1142 = vpop.f32.mrb[0].mxu0
        %v1143 = vadd.f32 0.0, %v1142
        %v1144 = vpop.f32.mrb[0].mxu0
        %v1145 = vadd.f32 0.0, %v1144
        %v1146 = vpop.f32.mrb[0].mxu0
        %v1147 = vadd.f32 0.0, %v1146
        %1148 = vdwg.mxu0
        %1149 = vmatprep.subr.bf16.mxu0 %v1034
        %1150 = vmatpush1.bf16.msra.mxu0 %v1031
        %1151 = vmatprep.subr.bf16.mxu0 0
        %1152 = vmatpush1.bf16.msra.mxu0 0
        %1153 = vmatprep.subr.bf16.mxu0 0
        %1154 = vmatpush1.bf16.msra.mxu0 0
        %1155 = vmatprep.subr.bf16.mxu0 0
        %1156 = vmatpush1.bf16.msra.mxu0 0
        %1157 = vmatprep.subr.bf16.mxu0 0
        %1158 = vmatpush1.bf16.msra.mxu0 0
        %1159 = vmatprep.subr.bf16.mxu0 0
        %1160 = vmatpush1.bf16.msra.mxu0 0
        %1161 = vmatprep.subr.bf16.mxu0 0
        %1162 = vmatpush1.bf16.msra.mxu0 0
        %1163 = vmatprep.subr.bf16.mxu0 0
        %1164 = vmatpush1.bf16.msra.mxu0 0
        %1165 = vmatprep.subr.bf16.mxu0 0
        %1166 = vmatpush1.bf16.msra.mxu0 0
        %1167 = vmatprep.subr.bf16.mxu0 0
        %1168 = vmatpush1.bf16.msra.mxu0 0
        %1169 = vmatprep.subr.bf16.mxu0 0
        %1170 = vmatpush1.bf16.msra.mxu0 0
        %1171 = vmatprep.subr.bf16.mxu0 0
        %1172 = vmatpush1.bf16.msra.mxu0 0
        %1173 = vmatprep.subr.bf16.mxu0 0
        %1174 = vmatpush1.bf16.msra.mxu0 0
        %1175 = vmatprep.subr.bf16.mxu0 0
        %1176 = vmatpush1.bf16.msra.mxu0 0
        %1177 = vmatprep.subr.bf16.mxu0 0
        %1178 = vmatpush1.bf16.msra.mxu0 0
        %1179 = vmatprep.subr.bf16.mxu0 0
        %1180 = vmatpush1.bf16.msra.mxu0 0
        %1181 = vmatprep.mubr.bf16.mxu0 0
        %1182 = vmatmul.mubr.bf16.gmra.mrb[0].mxu0 %v1001
        %v1183 = vpop.f32.mrb[0].mxu0
        %v1184 = vadd.f32 0.0, %v1183
        %v1185 = vpop.f32.mrb[0].mxu0
        %v1186 = vadd.f32 0.0, %v1185
        %v1187 = vpop.f32.mrb[0].mxu0
        %v1188 = vadd.f32 0.0, %v1187
        %v1189 = vpop.f32.mrb[0].mxu0
        %v1190 = vadd.f32 0.0, %v1189
        %1191 = vmatprep.mubr.bf16.mxu0 0
        %1192 = vmatmul.mubr.bf16.gmra.mrb[0].mxu0 %v1004
        %v1193 = vpop.f32.mrb[0].mxu0
        %v1194 = vadd.f32 0.0, %v1193
        %v1195 = vpop.f32.mrb[0].mxu0
        %v1196 = vadd.f32 0.0, %v1195
        %v1197 = vpop.f32.mrb[0].mxu0
        %v1198 = vadd.f32 0.0, %v1197
        %v1199 = vpop.f32.mrb[0].mxu0
        %v1200 = vadd.f32 0.0, %v1199
        %1201 = vmatprep.mubr.bf16.mxu0 0
        %1202 = vmatmul.mubr.bf16.gmra.mrb[0].mxu0 %v1007
        %v1203 = vpop.f32.mrb[0].mxu0
        %v1204 = vadd.f32 0.0, %v1203
        %v1205 = vpop.f32.mrb[0].mxu0
        %v1206 = vadd.f32 0.0, %v1205
        %v1207 = vpop.f32.mrb[0].mxu0
        %v1208 = vadd.f32 0.0, %v1207
        %v1209 = vpop.f32.mrb[0].mxu0
        %v1210 = vadd.f32 0.0, %v1209
        %1211 = vmatprep.mubr.bf16.mxu0 0
        %1212 = vmatmul.mubr.bf16.gmra.mrb[0].mxu0 %v1010
        %v1213 = vpop.f32.mrb[0].mxu0
        %v1214 = vadd.f32 0.0, %v1213
        %v1215 = vpop.f32.mrb[0].mxu0
        %v1216 = vadd.f32 0.0, %v1215
        %v1217 = vpop.f32.mrb[0].mxu0
        %v1218 = vadd.f32 0.0, %v1217
        %v1219 = vpop.f32.mrb[0].mxu0
        %v1220 = vadd.f32 0.0, %v1219
        %1221 = vmatprep.mubr.bf16.mxu0 0
        %1222 = vmatmul.mubr.bf16.gmra.mrb[0].mxu0 %v1013
        %v1223 = vpop.f32.mrb[0].mxu0
        %v1224 = vadd.f32 0.0, %v1223
        %v1225 = vpop.f32.mrb[0].mxu0
        %v1226 = vadd.f32 0.0, %v1225
        %v1227 = vpop.f32.mrb[0].mxu0
        %v1228 = vadd.f32 0.0, %v1227
        %v1229 = vpop.f32.mrb[0].mxu0
        %v1230 = vadd.f32 0.0, %v1229
        %1231 = vmatprep.mubr.bf16.mxu0 0
        %1232 = vmatmul.mubr.bf16.gmra.mrb[0].mxu0 %v1016
        %v1233 = vpop.f32.mrb[0].mxu0
        %v1234 = vadd.f32 0.0, %v1233
        %v1235 = vpop.f32.mrb[0].mxu0
        %v1236 = vadd.f32 0.0, %v1235
        %v1237 = vpop.f32.mrb[0].mxu0
        %v1238 = vadd.f32 0.0, %v1237
        %v1239 = vpop.f32.mrb[0].mxu0
        %v1240 = vadd.f32 0.0, %v1239
        %1241 = vmatprep.mubr.bf16.mxu0 0
        %1242 = vmatmul.mubr.bf16.gmra.mrb[0].mxu0 %v1019
        %v1243 = vpop.f32.mrb[0].mxu0
        %v1244 = vadd.f32 0.0, %v1243
        %v1245 = vpop.f32.mrb[0].mxu0
        %v1246 = vadd.f32 0.0, %v1245
        %v1247 = vpop.f32.mrb[0].mxu0
        %v1248 = vadd.f32 0.0, %v1247
        %v1249 = vpop.f32.mrb[0].mxu0
        %v1250 = vadd.f32 0.0, %v1249
        %1251 = vmatprep.mubr.bf16.mxu0 0
        %1252 = vmatmul.mubr.bf16.gmra.mrb[0].mxu0 %v1022
        %v1253 = vpop.f32.mrb[0].mxu0
        %v1254 = vadd.f32 0.0, %v1253
        %v1255 = vpop.f32.mrb[0].mxu0
        %v1256 = vadd.f32 0.0, %v1255
        %v1257 = vpop.f32.mrb[0].mxu0
        %v1258 = vadd.f32 0.0, %v1257
        %v1259 = vpop.f32.mrb[0].mxu0
        %v1260 = vadd.f32 0.0, %v1259
        %1261 = vdwg.mxu0
        %1262 = vst [vmem:[#allocation3] sm:$0xff] %v1071
        %1263 = vst [vmem:[#allocation3 + $0x8] sm:$0xff] %v1073
        %1264 = vst [vmem:[#allocation3 + $0x10] sm:$0xff] %v1184
        %1265 = vst [vmem:[#allocation3 + $0x18] sm:$0xff] %v1186
        %1266 = vst [vmem:[#allocation3 + $0x20] sm:$0xff] %v1075
        %1267 = vst [vmem:[#allocation3 + $0x28] sm:$0xff] %v1077
        %1268 = vst [vmem:[#allocation3 + $0x30] sm:$0xff] %v1188
        %1269 = vst [vmem:[#allocation3 + $0x38] sm:$0xff] %v1190
        %1270 = vst [vmem:[#allocation3 + $0x40] sm:$0xff] %v1081
        %1271 = vst [vmem:[#allocation3 + $0x48] sm:$0xff] %v1083
        %1272 = vst [vmem:[#allocation3 + $0x50] sm:$0xff] %v1194
        %1273 = vst [vmem:[#allocation3 + $0x58] sm:$0xff] %v1196
        %1274 = vst [vmem:[#allocation3 + $0x60] sm:$0xff] %v1085
        %1275 = vst [vmem:[#allocation3 + $0x68] sm:$0xff] %v1087
        %1276 = vst [vmem:[#allocation3 + $0x70] sm:$0xff] %v1198
        %1277 = vst [vmem:[#allocation3 + $0x78] sm:$0xff] %v1200
        %1278 = vst [vmem:[#allocation3 + $0x80] sm:$0xff] %v1091
        %1279 = vst [vmem:[#allocation3 + $0x88] sm:$0xff] %v1093
        %1280 = vst [vmem:[#allocation3 + $0x90] sm:$0xff] %v1204
        %1281 = vst [vmem:[#allocation3 + $0x98] sm:$0xff] %v1206
        %1282 = vst [vmem:[#allocation3 + $0xa0] sm:$0xff] %v1095
        %1283 = vst [vmem:[#allocation3 + $0xa8] sm:$0xff] %v1097
        %1284 = vst [vmem:[#allocation3 + $0xb0] sm:$0xff] %v1208
        %1285 = vst [vmem:[#allocation3 + $0xb8] sm:$0xff] %v1210
        %1286 = vst [vmem:[#allocation3 + $0xc0] sm:$0xff] %v1101
        %1287 = vst [vmem:[#allocation3 + $0xc8] sm:$0xff] %v1103
        %1288 = vst [vmem:[#allocation3 + $0xd0] sm:$0xff] %v1214
        %1289 = vst [vmem:[#allocation3 + $0xd8] sm:$0xff] %v1216
        %1290 = vst [vmem:[#allocation3 + $0xe0] sm:$0xff] %v1105
        %1291 = vst [vmem:[#allocation3 + $0xe8] sm:$0xff] %v1107
        %1292 = vst [vmem:[#allocation3 + $0xf0] sm:$0xff] %v1218
        %1293 = vst [vmem:[#allocation3 + $0xf8] sm:$0xff] %v1220
        %1294 = vst [vmem:[#allocation3 + $0x100] sm:$0xff] %v1111
        %1295 = vst [vmem:[#allocation3 + $0x108] sm:$0xff] %v1113
        %1296 = vst [vmem:[#allocation3 + $0x110] sm:$0xff] %v1224
        %1297 = vst [vmem:[#allocation3 + $0x118] sm:$0xff] %v1226
        %1298 = vst [vmem:[#allocation3 + $0x120] sm:$0xff] %v1115
        %1299 = vst [vmem:[#allocation3 + $0x128] sm:$0xff] %v1117
        %1300 = vst [vmem:[#allocation3 + $0x130] sm:$0xff] %v1228
        %1301 = vst [vmem:[#allocation3 + $0x138] sm:$0xff] %v1230
        %1302 = vst [vmem:[#allocation3 + $0x140] sm:$0xff] %v1121
        %1303 = vst [vmem:[#allocation3 + $0x148] sm:$0xff] %v1123
        %1304 = vst [vmem:[#allocation3 + $0x150] sm:$0xff] %v1234
        %1305 = vst [vmem:[#allocation3 + $0x158] sm:$0xff] %v1236
        %1306 = vst [vmem:[#allocation3 + $0x160] sm:$0xff] %v1125
        %1307 = vst [vmem:[#allocation3 + $0x168] sm:$0xff] %v1127
        %1308 = vst [vmem:[#allocation3 + $0x170] sm:$0xff] %v1238
        %1309 = vst [vmem:[#allocation3 + $0x178] sm:$0xff] %v1240
        %1310 = vst [vmem:[#allocation3 + $0x180] sm:$0xff] %v1131
        %1311 = vst [vmem:[#allocation3 + $0x188] sm:$0xff] %v1133
        %1312 = vst [vmem:[#allocation3 + $0x190] sm:$0xff] %v1244
        %1313 = vst [vmem:[#allocation3 + $0x198] sm:$0xff] %v1246
        %1314 = vst [vmem:[#allocation3 + $0x1a0] sm:$0xff] %v1135
        %1315 = vst [vmem:[#allocation3 + $0x1a8] sm:$0xff] %v1137
        %1316 = vst [vmem:[#allocation3 + $0x1b0] sm:$0xff] %v1248
        %1317 = vst [vmem:[#allocation3 + $0x1b8] sm:$0xff] %v1250
        %1318 = vst [vmem:[#allocation3 + $0x1c0] sm:$0xff] %v1141
        %1319 = vst [vmem:[#allocation3 + $0x1c8] sm:$0xff] %v1143
        %1320 = vst [vmem:[#allocation3 + $0x1d0] sm:$0xff] %v1254
        %1321 = vst [vmem:[#allocation3 + $0x1d8] sm:$0xff] %v1256
        %1322 = vst [vmem:[#allocation3 + $0x1e0] sm:$0xff] %v1145
        %1323 = vst [vmem:[#allocation3 + $0x1e8] sm:$0xff] %v1147
        %1324 = vst [vmem:[#allocation3 + $0x1f0] sm:$0xff] %v1258
        %1325 = vst [vmem:[#allocation3 + $0x1f8] sm:$0xff] %v1260
        %v1326 = vld [vmem:[%s4] sm:$0xff]
        %v1327 = vld [vmem:[%s4 + $0x8] sm:$0xff]
        %v1328 = vld [vmem:[%s4 + $0x10] sm:$0xff]
        %v1329 = vld [vmem:[%s4 + $0x18] sm:$0xff]
        %v1330 = vld [vmem:[%s4 + $0x20] sm:$0xff]
        %v1331 = vld [vmem:[%s4 + $0x28] sm:$0xff]
        %v1332 = vld [vmem:[%s4 + $0x30] sm:$0xff]
        %v1333 = vld [vmem:[%s4 + $0x38] sm:$0xff]
        %v1334 = vld [vmem:[%s4 + $0x40] sm:$0xff]
        %v1335 = vld [vmem:[%s4 + $0x48] sm:$0xff]
        %v1336 = vld [vmem:[%s4 + $0x50] sm:$0xff]
        %v1337 = vld [vmem:[%s4 + $0x58] sm:$0xff]
        %v1338 = vld [vmem:[%s4 + $0x60] sm:$0xff]
        %v1339 = vld [vmem:[%s4 + $0x68] sm:$0xff]
        %v1340 = vld [vmem:[%s4 + $0x70] sm:$0xff]
        %v1341 = vld [vmem:[%s4 + $0x78] sm:$0xff]
        %v1342 = vld [vmem:[%s4 + $0x80] sm:$0xff]
        %v1343 = vld [vmem:[%s4 + $0x88] sm:$0xff]
        %v1344 = vld [vmem:[%s4 + $0x90] sm:$0xff]
        %v1345 = vld [vmem:[%s4 + $0x98] sm:$0xff]
        %v1346 = vld [vmem:[%s4 + $0xa0] sm:$0xff]
        %v1347 = vld [vmem:[%s4 + $0xa8] sm:$0xff]
        %v1348 = vld [vmem:[%s4 + $0xb0] sm:$0xff]
        %v1349 = vld [vmem:[%s4 + $0xb8] sm:$0xff]
        %v1350 = vld [vmem:[%s4 + $0xc0] sm:$0xff]
        %v1351 = vld [vmem:[%s4 + $0xc8] sm:$0xff]
        %v1352 = vld [vmem:[%s4 + $0xd0] sm:$0xff]
        %v1353 = vld [vmem:[%s4 + $0xd8] sm:$0xff]
        %v1354 = vld [vmem:[%s4 + $0xe0] sm:$0xff]
        %v1355 = vld [vmem:[%s4 + $0xe8] sm:$0xff]
        %v1356 = vld [vmem:[%s4 + $0xf0] sm:$0xff]
        %v1357 = vld [vmem:[%s4 + $0xf8] sm:$0xff]
        %v1358 = vld [vmem:[#allocation4] sm:$0xff]
        %v1359 = vld [vmem:[#allocation4 + $0x8] sm:$0xff]
        %v1360 = vld [vmem:[#allocation5] sm:$0xff]
        %v1361 = vld [vmem:[#allocation5 + $0x8] sm:$0xff]
        %s1362 = smul.u32 0, 4
        %s1363 = smul.addr %s1362, 8
        %s1364 = scalar_lea.vmem [#allocation2], %s1363
        %v1365 = vld [vmem:[%s1364] sm:$0xff]
        %v1366 = vld [vmem:[%s1364 + $0x8] sm:$0xff]
        %v1367 = vld [vmem:[%s1364 + $0x10] sm:$0xff]
        %v1368 = vld [vmem:[%s1364 + $0x18] sm:$0xff]
        %v1369 = vld [vmem:[%s1364 + $0x20] sm:$0xff]
        %v1370 = vld [vmem:[%s1364 + $0x28] sm:$0xff]
        %v1371 = vld [vmem:[%s1364 + $0x30] sm:$0xff]
        %v1372 = vld [vmem:[%s1364 + $0x38] sm:$0xff]
        %s1373 = smul.u32 14, 4
        %s1374 = smul.addr %s1373, 8
        %s1375 = scalar_lea.vmem [#allocation3], %s1374
        %v1376 = vld [vmem:[%s1375] sm:$0xff]
        %v1377 = vld [vmem:[%s1375 + $0x8] sm:$0xff]
        %v1378 = vld [vmem:[%s1375 + $0x10] sm:$0xff]
        %v1379 = vld [vmem:[%s1375 + $0x18] sm:$0xff]
        %v1380 = vld [vmem:[%s1375 + $0x20] sm:$0xff]
        %v1381 = vld [vmem:[%s1375 + $0x28] sm:$0xff]
        %v1382 = vld [vmem:[%s1375 + $0x30] sm:$0xff]
        %v1383 = vld [vmem:[%s1375 + $0x38] sm:$0xff]
        %v1384 = vadd.f32 %v1365, %v1376
        %v1385 = vadd.f32 %v1366, %v1377
        %v1386 = vadd.f32 %v1367, %v1378
        %v1387 = vadd.f32 %v1368, %v1379
        %v1388 = vadd.f32 %v1369, %v1380
        %v1389 = vadd.f32 %v1370, %v1381
        %v1390 = vadd.f32 %v1371, %v1382
        %v1391 = vadd.f32 %v1372, %v1383
        %v1392 = vpack.c.bf16 %v1359, %v1358
        %v1425 = vunpack.c.l.b16 %v1326
        %v1426 = vunpack.c.h.b16 %v1326
        %v1427 = vunpack.c.l.b16 %v1327
        %v1428 = vunpack.c.h.b16 %v1327
        %v1429 = vunpack.c.l.b16 %v1328
        %v1430 = vunpack.c.h.b16 %v1328
        %v1431 = vunpack.c.l.b16 %v1329
        %v1432 = vunpack.c.h.b16 %v1329
        %v1433 = vunpack.c.l.b16 %v1330
        %v1434 = vunpack.c.h.b16 %v1330
        %v1435 = vunpack.c.l.b16 %v1331
        %v1436 = vunpack.c.h.b16 %v1331
        %v1437 = vunpack.c.l.b16 %v1332
        %v1438 = vunpack.c.h.b16 %v1332
        %v1439 = vunpack.c.l.b16 %v1333
        %v1440 = vunpack.c.h.b16 %v1333
        %v1441 = vunpack.c.l.b16 %v1334
        %v1442 = vunpack.c.h.b16 %v1334
        %v1443 = vunpack.c.l.b16 %v1335
        %v1444 = vunpack.c.h.b16 %v1335
        %v1445 = vunpack.c.l.b16 %v1336
        %v1446 = vunpack.c.h.b16 %v1336
        %v1447 = vunpack.c.l.b16 %v1337
        %v1448 = vunpack.c.h.b16 %v1337
        %v1449 = vunpack.c.l.b16 %v1338
        %v1450 = vunpack.c.h.b16 %v1338
        %v1451 = vunpack.c.l.b16 %v1339
        %v1452 = vunpack.c.h.b16 %v1339
        %v1453 = vunpack.c.l.b16 %v1340
        %v1454 = vunpack.c.h.b16 %v1340
        %v1455 = vunpack.c.l.b16 %v1341
        %v1456 = vunpack.c.h.b16 %v1341
        %v1457 = vunpack.c.l.b16 %v1342
        %v1458 = vunpack.c.h.b16 %v1342
        %v1459 = vunpack.c.l.b16 %v1343
        %v1460 = vunpack.c.h.b16 %v1343
        %v1461 = vunpack.c.l.b16 %v1344
        %v1462 = vunpack.c.h.b16 %v1344
        %v1463 = vunpack.c.l.b16 %v1345
        %v1464 = vunpack.c.h.b16 %v1345
        %v1465 = vunpack.c.l.b16 %v1346
        %v1466 = vunpack.c.h.b16 %v1346
        %v1467 = vunpack.c.l.b16 %v1347
        %v1468 = vunpack.c.h.b16 %v1347
        %v1469 = vunpack.c.l.b16 %v1348
        %v1470 = vunpack.c.h.b16 %v1348
        %v1471 = vunpack.c.l.b16 %v1349
        %v1472 = vunpack.c.h.b16 %v1349
        %v1473 = vunpack.c.l.b16 %v1350
        %v1474 = vunpack.c.h.b16 %v1350
        %v1475 = vunpack.c.l.b16 %v1351
        %v1476 = vunpack.c.h.b16 %v1351
        %v1477 = vunpack.c.l.b16 %v1352
        %v1478 = vunpack.c.h.b16 %v1352
        %v1479 = vunpack.c.l.b16 %v1353
        %v1480 = vunpack.c.h.b16 %v1353
        %v1481 = vunpack.c.l.b16 %v1354
        %v1482 = vunpack.c.h.b16 %v1354
        %v1483 = vunpack.c.l.b16 %v1355
        %v1484 = vunpack.c.h.b16 %v1355
        %v1485 = vunpack.c.l.b16 %v1356
        %v1486 = vunpack.c.h.b16 %v1356
        %v1487 = vunpack.c.l.b16 %v1357
        %v1488 = vunpack.c.h.b16 %v1357
        %v1489 = vpack.c.b16 %v1429, %v1425
        %v1490 = vpack.c.b16 %v1430, %v1426
        %v1491 = vpack.c.b16 %v1431, %v1427
        %v1492 = vpack.c.b16 %v1432, %v1428
        %v1493 = vpack.c.b16 %v1437, %v1433
        %v1494 = vpack.c.b16 %v1438, %v1434
        %v1495 = vpack.c.b16 %v1439, %v1435
        %v1496 = vpack.c.b16 %v1440, %v1436
        %v1497 = vpack.c.b16 %v1445, %v1441
        %v1498 = vpack.c.b16 %v1446, %v1442
        %v1499 = vpack.c.b16 %v1447, %v1443
        %v1500 = vpack.c.b16 %v1448, %v1444
        %v1501 = vpack.c.b16 %v1453, %v1449
        %v1502 = vpack.c.b16 %v1454, %v1450
        %v1503 = vpack.c.b16 %v1455, %v1451
        %v1504 = vpack.c.b16 %v1456, %v1452
        %v1505 = vpack.c.b16 %v1461, %v1457
        %v1506 = vpack.c.b16 %v1462, %v1458
        %v1507 = vpack.c.b16 %v1463, %v1459
        %v1508 = vpack.c.b16 %v1464, %v1460
        %v1509 = vpack.c.b16 %v1469, %v1465
        %v1510 = vpack.c.b16 %v1470, %v1466
        %v1511 = vpack.c.b16 %v1471, %v1467
        %v1512 = vpack.c.b16 %v1472, %v1468
        %v1513 = vpack.c.b16 %v1477, %v1473
        %v1514 = vpack.c.b16 %v1478, %v1474
        %v1515 = vpack.c.b16 %v1479, %v1475
        %v1516 = vpack.c.b16 %v1480, %v1476
        %v1517 = vpack.c.b16 %v1485, %v1481
        %v1518 = vpack.c.b16 %v1486, %v1482
        %v1519 = vpack.c.b16 %v1487, %v1483
        %v1520 = vpack.c.b16 %v1488, %v1484
        %1553 = vmatprep.subr.bf16.mxu0 %v1490
        %1554 = vmatpush1.bf16.msra.mxu0 %v1489
        %1555 = vmatprep.subr.bf16.mxu0 %v1494
        %1556 = vmatpush1.bf16.msra.mxu0 %v1493
        %1557 = vmatprep.subr.bf16.mxu0 %v1498
        %1558 = vmatpush1.bf16.msra.mxu0 %v1497
        %1559 = vmatprep.subr.bf16.mxu0 %v1502
        %1560 = vmatpush1.bf16.msra.mxu0 %v1501
        %1561 = vmatprep.subr.bf16.mxu0 %v1506
        %1562 = vmatpush1.bf16.msra.mxu0 %v1505
        %1563 = vmatprep.subr.bf16.mxu0 %v1510
        %1564 = vmatpush1.bf16.msra.mxu0 %v1509
        %1565 = vmatprep.subr.bf16.mxu0 %v1514
        %1566 = vmatpush1.bf16.msra.mxu0 %v1513
        %1567 = vmatprep.subr.bf16.mxu0 %v1518
        %1568 = vmatpush1.bf16.msra.mxu0 %v1517
        %1569 = vmatprep.subr.bf16.mxu0 0
        %1570 = vmatpush1.bf16.msra.mxu0 0
        %1571 = vmatprep.subr.bf16.mxu0 0
        %1572 = vmatpush1.bf16.msra.mxu0 0
        %1573 = vmatprep.subr.bf16.mxu0 0
        %1574 = vmatpush1.bf16.msra.mxu0 0
        %1575 = vmatprep.subr.bf16.mxu0 0
        %1576 = vmatpush1.bf16.msra.mxu0 0
        %1577 = vmatprep.subr.bf16.mxu0 0
        %1578 = vmatpush1.bf16.msra.mxu0 0
        %1579 = vmatprep.subr.bf16.mxu0 0
        %1580 = vmatpush1.bf16.msra.mxu0 0
        %1581 = vmatprep.subr.bf16.mxu0 0
        %1582 = vmatpush1.bf16.msra.mxu0 0
        %1583 = vmatprep.subr.bf16.mxu0 0
        %1584 = vmatpush1.bf16.msra.mxu0 0
        %1585 = vmatprep.mubr.bf16.mxu0 0
        %1586 = vmatmul.mubr.bf16.gmra.mrb[0].mxu0 %v1392
        %v1587 = vpop.f32.mrb[0].mxu0
        %v1588 = vadd.f32 0.0, %v1587
        %v1589 = vpop.f32.mrb[0].mxu0
        %v1590 = vadd.f32 0.0, %v1589
        %v1591 = vpop.f32.mrb[0].mxu0
        %v1592 = vadd.f32 0.0, %v1591
        %v1593 = vpop.f32.mrb[0].mxu0
        %v1594 = vadd.f32 0.0, %v1593
        %1595 = vdwg.mxu0
        %1596 = vmatprep.subr.bf16.mxu0 %v1492
        %1597 = vmatpush1.bf16.msra.mxu0 %v1491
        %1598 = vmatprep.subr.bf16.mxu0 %v1496
        %1599 = vmatpush1.bf16.msra.mxu0 %v1495
        %1600 = vmatprep.subr.bf16.mxu0 %v1500
        %1601 = vmatpush1.bf16.msra.mxu0 %v1499
        %1602 = vmatprep.subr.bf16.mxu0 %v1504
        %1603 = vmatpush1.bf16.msra.mxu0 %v1503
        %1604 = vmatprep.subr.bf16.mxu0 %v1508
        %1605 = vmatpush1.bf16.msra.mxu0 %v1507
        %1606 = vmatprep.subr.bf16.mxu0 %v1512
        %1607 = vmatpush1.bf16.msra.mxu0 %v1511
        %1608 = vmatprep.subr.bf16.mxu0 %v1516
        %1609 = vmatpush1.bf16.msra.mxu0 %v1515
        %1610 = vmatprep.subr.bf16.mxu0 %v1520
        %1611 = vmatpush1.bf16.msra.mxu0 %v1519
        %1612 = vmatprep.subr.bf16.mxu0 0
        %1613 = vmatpush1.bf16.msra.mxu0 0
        %1614 = vmatprep.subr.bf16.mxu0 0
        %1615 = vmatpush1.bf16.msra.mxu0 0
        %1616 = vmatprep.subr.bf16.mxu0 0
        %1617 = vmatpush1.bf16.msra.mxu0 0
        %1618 = vmatprep.subr.bf16.mxu0 0
        %1619 = vmatpush1.bf16.msra.mxu0 0
        %1620 = vmatprep.subr.bf16.mxu0 0
        %1621 = vmatpush1.bf16.msra.mxu0 0
        %1622 = vmatprep.subr.bf16.mxu0 0
        %1623 = vmatpush1.bf16.msra.mxu0 0
        %1624 = vmatprep.subr.bf16.mxu0 0
        %1625 = vmatpush1.bf16.msra.mxu0 0
        %1626 = vmatprep.subr.bf16.mxu0 0
        %1627 = vmatpush1.bf16.msra.mxu0 0
        %1628 = vmatprep.mubr.bf16.mxu0 0
        %1629 = vmatmul.mubr.bf16.gmra.mrb[0].mxu0 %v1392
        %v1630 = vpop.f32.mrb[0].mxu0
        %v1631 = vadd.f32 0.0, %v1630
        %v1632 = vpop.f32.mrb[0].mxu0
        %v1633 = vadd.f32 0.0, %v1632
        %v1634 = vpop.f32.mrb[0].mxu0
        %v1635 = vadd.f32 0.0, %v1634
        %v1636 = vpop.f32.mrb[0].mxu0
        %v1637 = vadd.f32 0.0, %v1636
        %1638 = vdwg.mxu0
        %v1639 = vadd.f32 %v1384, %v1588
        %v1640 = vadd.f32 %v1385, %v1590
        %v1641 = vadd.f32 %v1386, %v1631
        %v1642 = vadd.f32 %v1387, %v1633
        %v1643 = vadd.f32 %v1388, %v1592
        %v1644 = vadd.f32 %v1389, %v1594
        %v1645 = vadd.f32 %v1390, %v1635
        %v1646 = vadd.f32 %v1391, %v1637
        %v1647 = vxor.u32 %v1639, 2147483648
        %v1648 = vxor.u32 %v1640, 2147483648
        %v1649 = vxor.u32 %v1641, 2147483648
        %v1650 = vxor.u32 %v1643, 2147483648
        %v1651 = vxor.u32 %v1644, 2147483648
        %v1652 = vxor.u32 %v1645, 2147483648
        %v1653 = vmul.f32 %v1647, 1.442695
        %v1654 = vpow.pop %v1653
        %v1655 = vmul.f32 %v1648, 1.442695
        %v1656 = vpow.pop %v1655
        %v1657 = vmul.f32 %v1649, 1.442695
        %v1658 = vpow.pop %v1657
        %v1659 = vmul.f32 %v1650, 1.442695
        %v1660 = vpow.pop %v1659
        %v1661 = vmul.f32 %v1651, 1.442695
        %v1662 = vpow.pop %v1661
        %v1663 = vmul.f32 %v1652, 1.442695
        %v1664 = vpow.pop %v1663
        %v1665 = vadd.f32 %v1654, 1.0
        %v1666 = vadd.f32 %v1656, 1.0
        %v1667 = vadd.f32 %v1658, 1.0
        %v1668 = vadd.f32 %v1660, 1.0
        %v1669 = vadd.f32 %v1662, 1.0
        %v1670 = vadd.f32 %v1664, 1.0
        %v1671 = vrcp.pop %v1665
        %v1672 = vmul.f32 1.0, %v1671
        %v1673 = vrcp.pop %v1666
        %v1674 = vmul.f32 1.0, %v1673
        %v1675 = vrcp.pop %v1667
        %v1676 = vmul.f32 1.0, %v1675
        %v1677 = vrcp.pop %v1668
        %v1678 = vmul.f32 1.0, %v1677
        %v1679 = vrcp.pop %v1669
        %v1680 = vmul.f32 1.0, %v1679
        %v1681 = vrcp.pop %v1670
        %v1682 = vmul.f32 1.0, %v1681
        %v1683 = vtanh.pop %v1642
        %v1684 = vtanh.pop %v1646
        %v1685 = vmul.f32 %v1674, %v1360
        %v1686 = vmul.f32 %v1680, %v1361
        %v1687 = vmul.f32 %v1672, %v1683
        %v1688 = vmul.f32 %v1678, %v1684
        %v1689 = vadd.f32 %v1685, %v1687
        %v1690 = vadd.f32 %v1686, %v1688
        %v1691 = vtanh.pop %v1689
        %v1692 = vtanh.pop %v1690
        %v1693 = vmul.f32 %v1676, %v1691
        %v1694 = vmul.f32 %v1682, %v1692
        %s1695 = smul.u32 2, 4
        %s1696 = smul.addr %s1695, 8
        %s1697 = scalar_lea.vmem [#allocation2], %s1696
        %v1698 = vld [vmem:[%s1697] sm:$0xff]
        %v1699 = vld [vmem:[%s1697 + $0x8] sm:$0xff]
        %v1700 = vld [vmem:[%s1697 + $0x10] sm:$0xff]
        %v1701 = vld [vmem:[%s1697 + $0x18] sm:$0xff]
        %v1702 = vld [vmem:[%s1697 + $0x20] sm:$0xff]
        %v1703 = vld [vmem:[%s1697 + $0x28] sm:$0xff]
        %v1704 = vld [vmem:[%s1697 + $0x30] sm:$0xff]
        %v1705 = vld [vmem:[%s1697 + $0x38] sm:$0xff]
        %s1706 = smul.u32 12, 4
        %s1707 = smul.addr %s1706, 8
        %s1708 = scalar_lea.vmem [#allocation3], %s1707
        %v1709 = vld [vmem:[%s1708] sm:$0xff]
        %v1710 = vld [vmem:[%s1708 + $0x8] sm:$0xff]
        %v1711 = vld [vmem:[%s1708 + $0x10] sm:$0xff]
        %v1712 = vld [vmem:[%s1708 + $0x18] sm:$0xff]
        %v1713 = vld [vmem:[%s1708 + $0x20] sm:$0xff]
        %v1714 = vld [vmem:[%s1708 + $0x28] sm:$0xff]
        %v1715 = vld [vmem:[%s1708 + $0x30] sm:$0xff]
        %v1716 = vld [vmem:[%s1708 + $0x38] sm:$0xff]
        %v1717 = vadd.f32 %v1698, %v1709
        %v1718 = vadd.f32 %v1699, %v1710
        %v1719 = vadd.f32 %v1700, %v1711
        %v1720 = vadd.f32 %v1701, %v1712
        %v1721 = vadd.f32 %v1702, %v1713
        %v1722 = vadd.f32 %v1703, %v1714
        %v1723 = vadd.f32 %v1704, %v1715
        %v1724 = vadd.f32 %v1705, %v1716
        %v1725 = vpack.c.bf16 %v1694, %v1693
        %1726 = vmatprep.subr.bf16.mxu0 %v1490
        %1727 = vmatpush1.bf16.msra.mxu0 %v1489
        %1728 = vmatprep.subr.bf16.mxu0 %v1494
        %1729 = vmatpush1.bf16.msra.mxu0 %v1493
        %1730 = vmatprep.subr.bf16.mxu0 %v1498
        %1731 = vmatpush1.bf16.msra.mxu0 %v1497
        %1732 = vmatprep.subr.bf16.mxu0 %v1502
        %1733 = vmatpush1.bf16.msra.mxu0 %v1501
        %1734 = vmatprep.subr.bf16.mxu0 %v1506
        %1735 = vmatpush1.bf16.msra.mxu0 %v1505
        %1736 = vmatprep.subr.bf16.mxu0 %v1510
        %1737 = vmatpush1.bf16.msra.mxu0 %v1509
        %1738 = vmatprep.subr.bf16.mxu0 %v1514
        %1739 = vmatpush1.bf16.msra.mxu0 %v1513
        %1740 = vmatprep.subr.bf16.mxu0 %v1518
        %1741 = vmatpush1.bf16.msra.mxu0 %v1517
        %1742 = vmatprep.subr.bf16.mxu0 0
        %1743 = vmatpush1.bf16.msra.mxu0 0
        %1744 = vmatprep.subr.bf16.mxu0 0
        %1745 = vmatpush1.bf16.msra.mxu0 0
        %1746 = vmatprep.subr.bf16.mxu0 0
        %1747 = vmatpush1.bf16.msra.mxu0 0
        %1748 = vmatprep.subr.bf16.mxu0 0
        %1749 = vmatpush1.bf16.msra.mxu0 0
        %1750 = vmatprep.subr.bf16.mxu0 0
        %1751 = vmatpush1.bf16.msra.mxu0 0
        %1752 = vmatprep.subr.bf16.mxu0 0
        %1753 = vmatpush1.bf16.msra.mxu0 0
        %1754 = vmatprep.subr.bf16.mxu0 0
        %1755 = vmatpush1.bf16.msra.mxu0 0
        %1756 = vmatprep.subr.bf16.mxu0 0
        %1757 = vmatpush1.bf16.msra.mxu0 0
        %1758 = vmatprep.mubr.bf16.mxu0 0
        %1759 = vmatmul.mubr.bf16.gmra.mrb[0].mxu0 %v1725
        %v1760 = vpop.f32.mrb[0].mxu0
        %v1761 = vadd.f32 0.0, %v1760
        %v1762 = vpop.f32.mrb[0].mxu0
        %v1763 = vadd.f32 0.0, %v1762
        %v1764 = vpop.f32.mrb[0].mxu0
        %v1765 = vadd.f32 0.0, %v1764
        %v1766 = vpop.f32.mrb[0].mxu0
        %v1767 = vadd.f32 0.0, %v1766
        %1768 = vdwg.mxu0
        %1769 = vmatprep.subr.bf16.mxu0 %v1492
        %1770 = vmatpush1.bf16.msra.mxu0 %v1491
        %1771 = vmatprep.subr.bf16.mxu0 %v1496
        %1772 = vmatpush1.bf16.msra.mxu0 %v1495
        %1773 = vmatprep.subr.bf16.mxu0 %v1500
        %1774 = vmatpush1.bf16.msra.mxu0 %v1499
        %1775 = vmatprep.subr.bf16.mxu0 %v1504
        %1776 = vmatpush1.bf16.msra.mxu0 %v1503
        %1777 = vmatprep.subr.bf16.mxu0 %v1508
        %1778 = vmatpush1.bf16.msra.mxu0 %v1507
        %1779 = vmatprep.subr.bf16.mxu0 %v1512
        %1780 = vmatpush1.bf16.msra.mxu0 %v1511
        %1781 = vmatprep.subr.bf16.mxu0 %v1516
        %1782 = vmatpush1.bf16.msra.mxu0 %v1515
        %1783 = vmatprep.subr.bf16.mxu0 %v1520
        %1784 = vmatpush1.bf16.msra.mxu0 %v1519
        %1785 = vmatprep.subr.bf16.mxu0 0
        %1786 = vmatpush1.bf16.msra.mxu0 0
        %1787 = vmatprep.subr.bf16.mxu0 0
        %1788 = vmatpush1.bf16.msra.mxu0 0
        %1789 = vmatprep.subr.bf16.mxu0 0
        %1790 = vmatpush1.bf16.msra.mxu0 0
        %1791 = vmatprep.subr.bf16.mxu0 0
        %1792 = vmatpush1.bf16.msra.mxu0 0
        %1793 = vmatprep.subr.bf16.mxu0 0
        %1794 = vmatpush1.bf16.msra.mxu0 0
        %1795 = vmatprep.subr.bf16.mxu0 0
        %1796 = vmatpush1.bf16.msra.mxu0 0
        %1797 = vmatprep.subr.bf16.mxu0 0
        %1798 = vmatpush1.bf16.msra.mxu0 0
        %1799 = vmatprep.subr.bf16.mxu0 0
        %1800 = vmatpush1.bf16.msra.mxu0 0
        %1801 = vmatprep.mubr.bf16.mxu0 0
        %1802 = vmatmul.mubr.bf16.gmra.mrb[0].mxu0 %v1725
        %v1803 = vpop.f32.mrb[0].mxu0
        %v1804 = vadd.f32 0.0, %v1803
        %v1805 = vpop.f32.mrb[0].mxu0
        %v1806 = vadd.f32 0.0, %v1805
        %v1807 = vpop.f32.mrb[0].mxu0
        %v1808 = vadd.f32 0.0, %v1807
        %v1809 = vpop.f32.mrb[0].mxu0
        %v1810 = vadd.f32 0.0, %v1809
        %1811 = vdwg.mxu0
        %v1812 = vadd.f32 %v1717, %v1761
        %v1813 = vadd.f32 %v1718, %v1763
        %v1814 = vadd.f32 %v1719, %v1804
        %v1815 = vadd.f32 %v1720, %v1806
        %v1816 = vadd.f32 %v1721, %v1765
        %v1817 = vadd.f32 %v1722, %v1767
        %v1818 = vadd.f32 %v1723, %v1808
        %v1819 = vadd.f32 %v1724, %v1810
        %v1820 = vxor.u32 %v1812, 2147483648
        %v1821 = vxor.u32 %v1813, 2147483648
        %v1822 = vxor.u32 %v1814, 2147483648
        %v1823 = vxor.u32 %v1816, 2147483648
        %v1824 = vxor.u32 %v1817, 2147483648
        %v1825 = vxor.u32 %v1818, 2147483648
        %v1826 = vmul.f32 %v1820, 1.442695
        %v1827 = vpow.pop %v1826
        %v1828 = vmul.f32 %v1821, 1.442695
        %v1829 = vpow.pop %v1828
        %v1830 = vmul.f32 %v1822, 1.442695
        %v1831 = vpow.pop %v1830
        %v1832 = vmul.f32 %v1823, 1.442695
        %v1833 = vpow.pop %v1832
        %v1834 = vmul.f32 %v1824, 1.442695
        %v1835 = vpow.pop %v1834
        %v1836 = vmul.f32 %v1825, 1.442695
        %v1837 = vpow.pop %v1836
        %v1838 = vadd.f32 %v1827, 1.0
        %v1839 = vadd.f32 %v1829, 1.0
        %v1840 = vadd.f32 %v1831, 1.0
        %v1841 = vadd.f32 %v1833, 1.0
        %v1842 = vadd.f32 %v1835, 1.0
        %v1843 = vadd.f32 %v1837, 1.0
        %v1844 = vrcp.pop %v1838
        %v1845 = vmul.f32 1.0, %v1844
        %v1846 = vrcp.pop %v1839
        %v1847 = vmul.f32 1.0, %v1846
        %v1848 = vrcp.pop %v1840
        %v1849 = vmul.f32 1.0, %v1848
        %v1850 = vrcp.pop %v1841
        %v1851 = vmul.f32 1.0, %v1850
        %v1852 = vrcp.pop %v1842
        %v1853 = vmul.f32 1.0, %v1852
        %v1854 = vrcp.pop %v1843
        %v1855 = vmul.f32 1.0, %v1854
        %v1856 = vtanh.pop %v1815
        %v1857 = vtanh.pop %v1819
        %v1858 = vmul.f32 %v1847, %v1689
        %v1859 = vmul.f32 %v1853, %v1690
        %v1860 = vmul.f32 %v1845, %v1856
        %v1861 = vmul.f32 %v1851, %v1857
        %v1862 = vadd.f32 %v1858, %v1860
        %v1863 = vadd.f32 %v1859, %v1861
        %v1864 = vtanh.pop %v1862
        %v1865 = vtanh.pop %v1863
        %v1866 = vmul.f32 %v1849, %v1864
        %v1867 = vmul.f32 %v1855, %v1865
        %s1868 = smul.u32 4, 4
        %s1869 = smul.addr %s1868, 8
        %s1870 = scalar_lea.vmem [#allocation2], %s1869
        %v1871 = vld [vmem:[%s1870] sm:$0xff]
        %v1872 = vld [vmem:[%s1870 + $0x8] sm:$0xff]
        %v1873 = vld [vmem:[%s1870 + $0x10] sm:$0xff]
        %v1874 = vld [vmem:[%s1870 + $0x18] sm:$0xff]
        %v1875 = vld [vmem:[%s1870 + $0x20] sm:$0xff]
        %v1876 = vld [vmem:[%s1870 + $0x28] sm:$0xff]
        %v1877 = vld [vmem:[%s1870 + $0x30] sm:$0xff]
        %v1878 = vld [vmem:[%s1870 + $0x38] sm:$0xff]
        %s1879 = smul.u32 10, 4
        %s1880 = smul.addr %s1879, 8
        %s1881 = scalar_lea.vmem [#allocation3], %s1880
        %v1882 = vld [vmem:[%s1881] sm:$0xff]
        %v1883 = vld [vmem:[%s1881 + $0x8] sm:$0xff]
        %v1884 = vld [vmem:[%s1881 + $0x10] sm:$0xff]
        %v1885 = vld [vmem:[%s1881 + $0x18] sm:$0xff]
        %v1886 = vld [vmem:[%s1881 + $0x20] sm:$0xff]
        %v1887 = vld [vmem:[%s1881 + $0x28] sm:$0xff]
        %v1888 = vld [vmem:[%s1881 + $0x30] sm:$0xff]
        %v1889 = vld [vmem:[%s1881 + $0x38] sm:$0xff]
        %v1890 = vadd.f32 %v1871, %v1882
        %v1891 = vadd.f32 %v1872, %v1883
        %v1892 = vadd.f32 %v1873, %v1884
        %v1893 = vadd.f32 %v1874, %v1885
        %v1894 = vadd.f32 %v1875, %v1886
        %v1895 = vadd.f32 %v1876, %v1887
        %v1896 = vadd.f32 %v1877, %v1888
        %v1897 = vadd.f32 %v1878, %v1889
        %v1898 = vpack.c.bf16 %v1867, %v1866
        %1899 = vmatprep.subr.bf16.mxu0 %v1490
        %1900 = vmatpush1.bf16.msra.mxu0 %v1489
        %1901 = vmatprep.subr.bf16.mxu0 %v1494
        %1902 = vmatpush1.bf16.msra.mxu0 %v1493
        %1903 = vmatprep.subr.bf16.mxu0 %v1498
        %1904 = vmatpush1.bf16.msra.mxu0 %v1497
        %1905 = vmatprep.subr.bf16.mxu0 %v1502
        %1906 = vmatpush1.bf16.msra.mxu0 %v1501
        %1907 = vmatprep.subr.bf16.mxu0 %v1506
        %1908 = vmatpush1.bf16.msra.mxu0 %v1505
        %1909 = vmatprep.subr.bf16.mxu0 %v1510
        %1910 = vmatpush1.bf16.msra.mxu0 %v1509
        %1911 = vmatprep.subr.bf16.mxu0 %v1514
        %1912 = vmatpush1.bf16.msra.mxu0 %v1513
        %1913 = vmatprep.subr.bf16.mxu0 %v1518
        %1914 = vmatpush1.bf16.msra.mxu0 %v1517
        %1915 = vmatprep.subr.bf16.mxu0 0
        %1916 = vmatpush1.bf16.msra.mxu0 0
        %1917 = vmatprep.subr.bf16.mxu0 0
        %1918 = vmatpush1.bf16.msra.mxu0 0
        %1919 = vmatprep.subr.bf16.mxu0 0
        %1920 = vmatpush1.bf16.msra.mxu0 0
        %1921 = vmatprep.subr.bf16.mxu0 0
        %1922 = vmatpush1.bf16.msra.mxu0 0
        %1923 = vmatprep.subr.bf16.mxu0 0
        %1924 = vmatpush1.bf16.msra.mxu0 0
        %1925 = vmatprep.subr.bf16.mxu0 0
        %1926 = vmatpush1.bf16.msra.mxu0 0
        %1927 = vmatprep.subr.bf16.mxu0 0
        %1928 = vmatpush1.bf16.msra.mxu0 0
        %1929 = vmatprep.subr.bf16.mxu0 0
        %1930 = vmatpush1.bf16.msra.mxu0 0
        %1931 = vmatprep.mubr.bf16.mxu0 0
        %1932 = vmatmul.mubr.bf16.gmra.mrb[0].mxu0 %v1898
        %v1933 = vpop.f32.mrb[0].mxu0
        %v1934 = vadd.f32 0.0, %v1933
        %v1935 = vpop.f32.mrb[0].mxu0
        %v1936 = vadd.f32 0.0, %v1935
        %v1937 = vpop.f32.mrb[0].mxu0
        %v1938 = vadd.f32 0.0, %v1937
        %v1939 = vpop.f32.mrb[0].mxu0
        %v1940 = vadd.f32 0.0, %v1939
        %1941 = vdwg.mxu0
        %1942 = vmatprep.subr.bf16.mxu0 %v1492
        %1943 = vmatpush1.bf16.msra.mxu0 %v1491
        %1944 = vmatprep.subr.bf16.mxu0 %v1496
        %1945 = vmatpush1.bf16.msra.mxu0 %v1495
        %1946 = vmatprep.subr.bf16.mxu0 %v1500
        %1947 = vmatpush1.bf16.msra.mxu0 %v1499
        %1948 = vmatprep.subr.bf16.mxu0 %v1504
        %1949 = vmatpush1.bf16.msra.mxu0 %v1503
        %1950 = vmatprep.subr.bf16.mxu0 %v1508
        %1951 = vmatpush1.bf16.msra.mxu0 %v1507
        %1952 = vmatprep.subr.bf16.mxu0 %v1512
        %1953 = vmatpush1.bf16.msra.mxu0 %v1511
        %1954 = vmatprep.subr.bf16.mxu0 %v1516
        %1955 = vmatpush1.bf16.msra.mxu0 %v1515
        %1956 = vmatprep.subr.bf16.mxu0 %v1520
        %1957 = vmatpush1.bf16.msra.mxu0 %v1519
        %1958 = vmatprep.subr.bf16.mxu0 0
        %1959 = vmatpush1.bf16.msra.mxu0 0
        %1960 = vmatprep.subr.bf16.mxu0 0
        %1961 = vmatpush1.bf16.msra.mxu0 0
        %1962 = vmatprep.subr.bf16.mxu0 0
        %1963 = vmatpush1.bf16.msra.mxu0 0
        %1964 = vmatprep.subr.bf16.mxu0 0
        %1965 = vmatpush1.bf16.msra.mxu0 0
        %1966 = vmatprep.subr.bf16.mxu0 0
        %1967 = vmatpush1.bf16.msra.mxu0 0
        %1968 = vmatprep.subr.bf16.mxu0 0
        %1969 = vmatpush1.bf16.msra.mxu0 0
        %1970 = vmatprep.subr.bf16.mxu0 0
        %1971 = vmatpush1.bf16.msra.mxu0 0
        %1972 = vmatprep.subr.bf16.mxu0 0
        %1973 = vmatpush1.bf16.msra.mxu0 0
        %1974 = vmatprep.mubr.bf16.mxu0 0
        %1975 = vmatmul.mubr.bf16.gmra.mrb[0].mxu0 %v1898
        %v1976 = vpop.f32.mrb[0].mxu0
        %v1977 = vadd.f32 0.0, %v1976
        %v1978 = vpop.f32.mrb[0].mxu0
        %v1979 = vadd.f32 0.0, %v1978
        %v1980 = vpop.f32.mrb[0].mxu0
        %v1981 = vadd.f32 0.0, %v1980
        %v1982 = vpop.f32.mrb[0].mxu0
        %v1983 = vadd.f32 0.0, %v1982
        %1984 = vdwg.mxu0
        %v1985 = vadd.f32 %v1890, %v1934
        %v1986 = vadd.f32 %v1891, %v1936
        %v1987 = vadd.f32 %v1892, %v1977
        %v1988 = vadd.f32 %v1893, %v1979
        %v1989 = vadd.f32 %v1894, %v1938
        %v1990 = vadd.f32 %v1895, %v1940
        %v1991 = vadd.f32 %v1896, %v1981
        %v1992 = vadd.f32 %v1897, %v1983
        %v1993 = vxor.u32 %v1985, 2147483648
        %v1994 = vxor.u32 %v1986, 2147483648
        %v1995 = vxor.u32 %v1987, 2147483648
        %v1996 = vxor.u32 %v1989, 2147483648
        %v1997 = vxor.u32 %v1990, 2147483648
        %v1998 = vxor.u32 %v1991, 2147483648
        %v1999 = vmul.f32 %v1993, 1.442695
        %v2000 = vpow.pop %v1999
        %v2001 = vmul.f32 %v1994, 1.442695
        %v2002 = vpow.pop %v2001
        %v2003 = vmul.f32 %v1995, 1.442695
        %v2004 = vpow.pop %v2003
        %v2005 = vmul.f32 %v1996, 1.442695
        %v2006 = vpow.pop %v2005
        %v2007 = vmul.f32 %v1997, 1.442695
        %v2008 = vpow.pop %v2007
        %v2009 = vmul.f32 %v1998, 1.442695
        %v2010 = vpow.pop %v2009
        %v2011 = vadd.f32 %v2000, 1.0
        %v2012 = vadd.f32 %v2002, 1.0
        %v2013 = vadd.f32 %v2004, 1.0
        %v2014 = vadd.f32 %v2006, 1.0
        %v2015 = vadd.f32 %v2008, 1.0
        %v2016 = vadd.f32 %v2010, 1.0
        %v2017 = vrcp.pop %v2011
        %v2018 = vmul.f32 1.0, %v2017
        %v2019 = vrcp.pop %v2012
        %v2020 = vmul.f32 1.0, %v2019
        %v2021 = vrcp.pop %v2013
        %v2022 = vmul.f32 1.0, %v2021
        %v2023 = vrcp.pop %v2014
        %v2024 = vmul.f32 1.0, %v2023
        %v2025 = vrcp.pop %v2015
        %v2026 = vmul.f32 1.0, %v2025
        %v2027 = vrcp.pop %v2016
        %v2028 = vmul.f32 1.0, %v2027
        %v2029 = vtanh.pop %v1988
        %v2030 = vtanh.pop %v1992
        %v2031 = vmul.f32 %v2020, %v1862
        %v2032 = vmul.f32 %v2026, %v1863
        %v2033 = vmul.f32 %v2018, %v2029
        %v2034 = vmul.f32 %v2024, %v2030
        %v2035 = vadd.f32 %v2031, %v2033
        %v2036 = vadd.f32 %v2032, %v2034
        %v2037 = vtanh.pop %v2035
        %v2038 = vtanh.pop %v2036
        %v2039 = vmul.f32 %v2022, %v2037
        %v2040 = vmul.f32 %v2028, %v2038
        %s2041 = smul.u32 6, 4
        %s2042 = smul.addr %s2041, 8
        %s2043 = scalar_lea.vmem [#allocation2], %s2042
        %v2044 = vld [vmem:[%s2043] sm:$0xff]
        %v2045 = vld [vmem:[%s2043 + $0x8] sm:$0xff]
        %v2046 = vld [vmem:[%s2043 + $0x10] sm:$0xff]
        %v2047 = vld [vmem:[%s2043 + $0x18] sm:$0xff]
        %v2048 = vld [vmem:[%s2043 + $0x20] sm:$0xff]
        %v2049 = vld [vmem:[%s2043 + $0x28] sm:$0xff]
        %v2050 = vld [vmem:[%s2043 + $0x30] sm:$0xff]
        %v2051 = vld [vmem:[%s2043 + $0x38] sm:$0xff]
        %s2052 = smul.u32 8, 4
        %s2053 = smul.addr %s2052, 8
        %s2054 = scalar_lea.vmem [#allocation3], %s2053
        %v2055 = vld [vmem:[%s2054] sm:$0xff]
        %v2056 = vld [vmem:[%s2054 + $0x8] sm:$0xff]
        %v2057 = vld [vmem:[%s2054 + $0x10] sm:$0xff]
        %v2058 = vld [vmem:[%s2054 + $0x18] sm:$0xff]
        %v2059 = vld [vmem:[%s2054 + $0x20] sm:$0xff]
        %v2060 = vld [vmem:[%s2054 + $0x28] sm:$0xff]
        %v2061 = vld [vmem:[%s2054 + $0x30] sm:$0xff]
        %v2062 = vld [vmem:[%s2054 + $0x38] sm:$0xff]
        %v2063 = vadd.f32 %v2044, %v2055
        %v2064 = vadd.f32 %v2045, %v2056
        %v2065 = vadd.f32 %v2046, %v2057
        %v2066 = vadd.f32 %v2047, %v2058
        %v2067 = vadd.f32 %v2048, %v2059
        %v2068 = vadd.f32 %v2049, %v2060
        %v2069 = vadd.f32 %v2050, %v2061
        %v2070 = vadd.f32 %v2051, %v2062
        %v2071 = vpack.c.bf16 %v2040, %v2039
        %2072 = vmatprep.subr.bf16.mxu0 %v1490
        %2073 = vmatpush1.bf16.msra.mxu0 %v1489
        %2074 = vmatprep.subr.bf16.mxu0 %v1494
        %2075 = vmatpush1.bf16.msra.mxu0 %v1493
        %2076 = vmatprep.subr.bf16.mxu0 %v1498
        %2077 = vmatpush1.bf16.msra.mxu0 %v1497
        %2078 = vmatprep.subr.bf16.mxu0 %v1502
        %2079 = vmatpush1.bf16.msra.mxu0 %v1501
        %2080 = vmatprep.subr.bf16.mxu0 %v1506
        %2081 = vmatpush1.bf16.msra.mxu0 %v1505
        %2082 = vmatprep.subr.bf16.mxu0 %v1510
        %2083 = vmatpush1.bf16.msra.mxu0 %v1509
        %2084 = vmatprep.subr.bf16.mxu0 %v1514
        %2085 = vmatpush1.bf16.msra.mxu0 %v1513
        %2086 = vmatprep.subr.bf16.mxu0 %v1518
        %2087 = vmatpush1.bf16.msra.mxu0 %v1517
        %2088 = vmatprep.subr.bf16.mxu0 0
        %2089 = vmatpush1.bf16.msra.mxu0 0
        %2090 = vmatprep.subr.bf16.mxu0 0
        %2091 = vmatpush1.bf16.msra.mxu0 0
        %2092 = vmatprep.subr.bf16.mxu0 0
        %2093 = vmatpush1.bf16.msra.mxu0 0
        %2094 = vmatprep.subr.bf16.mxu0 0
        %2095 = vmatpush1.bf16.msra.mxu0 0
        %2096 = vmatprep.subr.bf16.mxu0 0
        %2097 = vmatpush1.bf16.msra.mxu0 0
        %2098 = vmatprep.subr.bf16.mxu0 0
        %2099 = vmatpush1.bf16.msra.mxu0 0
        %2100 = vmatprep.subr.bf16.mxu0 0
        %2101 = vmatpush1.bf16.msra.mxu0 0
        %2102 = vmatprep.subr.bf16.mxu0 0
        %2103 = vmatpush1.bf16.msra.mxu0 0
        %2104 = vmatprep.mubr.bf16.mxu0 0
        %2105 = vmatmul.mubr.bf16.gmra.mrb[0].mxu0 %v2071
        %v2106 = vpop.f32.mrb[0].mxu0
        %v2107 = vadd.f32 0.0, %v2106
        %v2108 = vpop.f32.mrb[0].mxu0
        %v2109 = vadd.f32 0.0, %v2108
        %v2110 = vpop.f32.mrb[0].mxu0
        %v2111 = vadd.f32 0.0, %v2110
        %v2112 = vpop.f32.mrb[0].mxu0
        %v2113 = vadd.f32 0.0, %v2112
        %2114 = vdwg.mxu0
        %2115 = vmatprep.subr.bf16.mxu0 %v1492
        %2116 = vmatpush1.bf16.msra.mxu0 %v1491
        %2117 = vmatprep.subr.bf16.mxu0 %v1496
        %2118 = vmatpush1.bf16.msra.mxu0 %v1495
        %2119 = vmatprep.subr.bf16.mxu0 %v1500
        %2120 = vmatpush1.bf16.msra.mxu0 %v1499
        %2121 = vmatprep.subr.bf16.mxu0 %v1504
        %2122 = vmatpush1.bf16.msra.mxu0 %v1503
        %2123 = vmatprep.subr.bf16.mxu0 %v1508
        %2124 = vmatpush1.bf16.msra.mxu0 %v1507
        %2125 = vmatprep.subr.bf16.mxu0 %v1512
        %2126 = vmatpush1.bf16.msra.mxu0 %v1511
        %2127 = vmatprep.subr.bf16.mxu0 %v1516
        %2128 = vmatpush1.bf16.msra.mxu0 %v1515
        %2129 = vmatprep.subr.bf16.mxu0 %v1520
        %2130 = vmatpush1.bf16.msra.mxu0 %v1519
        %2131 = vmatprep.subr.bf16.mxu0 0
        %2132 = vmatpush1.bf16.msra.mxu0 0
        %2133 = vmatprep.subr.bf16.mxu0 0
        %2134 = vmatpush1.bf16.msra.mxu0 0
        %2135 = vmatprep.subr.bf16.mxu0 0
        %2136 = vmatpush1.bf16.msra.mxu0 0
        %2137 = vmatprep.subr.bf16.mxu0 0
        %2138 = vmatpush1.bf16.msra.mxu0 0
        %2139 = vmatprep.subr.bf16.mxu0 0
        %2140 = vmatpush1.bf16.msra.mxu0 0
        %2141 = vmatprep.subr.bf16.mxu0 0
        %2142 = vmatpush1.bf16.msra.mxu0 0
        %2143 = vmatprep.subr.bf16.mxu0 0
        %2144 = vmatpush1.bf16.msra.mxu0 0
        %2145 = vmatprep.subr.bf16.mxu0 0
        %2146 = vmatpush1.bf16.msra.mxu0 0
        %2147 = vmatprep.mubr.bf16.mxu0 0
        %2148 = vmatmul.mubr.bf16.gmra.mrb[0].mxu0 %v2071
        %v2149 = vpop.f32.mrb[0].mxu0
        %v2150 = vadd.f32 0.0, %v2149
        %v2151 = vpop.f32.mrb[0].mxu0
        %v2152 = vadd.f32 0.0, %v2151
        %v2153 = vpop.f32.mrb[0].mxu0
        %v2154 = vadd.f32 0.0, %v2153
        %v2155 = vpop.f32.mrb[0].mxu0
        %v2156 = vadd.f32 0.0, %v2155
        %2157 = vdwg.mxu0
        %v2158 = vadd.f32 %v2063, %v2107
        %v2159 = vadd.f32 %v2064, %v2109
        %v2160 = vadd.f32 %v2065, %v2150
        %v2161 = vadd.f32 %v2066, %v2152
        %v2162 = vadd.f32 %v2067, %v2111
        %v2163 = vadd.f32 %v2068, %v2113
        %v2164 = vadd.f32 %v2069, %v2154
        %v2165 = vadd.f32 %v2070, %v2156
        %v2166 = vxor.u32 %v2158, 2147483648
        %v2167 = vxor.u32 %v2159, 2147483648
        %v2168 = vxor.u32 %v2160, 2147483648
        %v2169 = vxor.u32 %v2162, 2147483648
        %v2170 = vxor.u32 %v2163, 2147483648
        %v2171 = vxor.u32 %v2164, 2147483648
        %v2172 = vmul.f32 %v2166, 1.442695
        %v2173 = vpow.pop %v2172
        %v2174 = vmul.f32 %v2167, 1.442695
        %v2175 = vpow.pop %v2174
        %v2176 = vmul.f32 %v2168, 1.442695
        %v2177 = vpow.pop %v2176
        %v2178 = vmul.f32 %v2169, 1.442695
        %v2179 = vpow.pop %v2178
        %v2180 = vmul.f32 %v2170, 1.442695
        %v2181 = vpow.pop %v2180
        %v2182 = vmul.f32 %v2171, 1.442695
        %v2183 = vpow.pop %v2182
        %v2184 = vadd.f32 %v2173, 1.0
        %v2185 = vadd.f32 %v2175, 1.0
        %v2186 = vadd.f32 %v2177, 1.0
        %v2187 = vadd.f32 %v2179, 1.0
        %v2188 = vadd.f32 %v2181, 1.0
        %v2189 = vadd.f32 %v2183, 1.0
        %v2190 = vrcp.pop %v2184
        %v2191 = vmul.f32 1.0, %v2190
        %v2192 = vrcp.pop %v2185
        %v2193 = vmul.f32 1.0, %v2192
        %v2194 = vrcp.pop %v2186
        %v2195 = vmul.f32 1.0, %v2194
        %v2196 = vrcp.pop %v2187
        %v2197 = vmul.f32 1.0, %v2196
        %v2198 = vrcp.pop %v2188
        %v2199 = vmul.f32 1.0, %v2198
        %v2200 = vrcp.pop %v2189
        %v2201 = vmul.f32 1.0, %v2200
        %v2202 = vtanh.pop %v2161
        %v2203 = vtanh.pop %v2165
        %v2204 = vmul.f32 %v2193, %v2035
        %v2205 = vmul.f32 %v2199, %v2036
        %v2206 = vmul.f32 %v2191, %v2202
        %v2207 = vmul.f32 %v2197, %v2203
        %v2208 = vadd.f32 %v2204, %v2206
        %v2209 = vadd.f32 %v2205, %v2207
        %v2210 = vtanh.pop %v2208
        %v2211 = vtanh.pop %v2209
        %v2212 = vmul.f32 %v2195, %v2210
        %v2213 = vmul.f32 %v2201, %v2211
        %s2214 = smul.addr %s2052, 8
        %s2215 = scalar_lea.vmem [#allocation2], %s2214
        %v2216 = vld [vmem:[%s2215] sm:$0xff]
        %v2217 = vld [vmem:[%s2215 + $0x8] sm:$0xff]
        %v2218 = vld [vmem:[%s2215 + $0x10] sm:$0xff]
        %v2219 = vld [vmem:[%s2215 + $0x18] sm:$0xff]
        %v2220 = vld [vmem:[%s2215 + $0x20] sm:$0xff]
        %v2221 = vld [vmem:[%s2215 + $0x28] sm:$0xff]
        %v2222 = vld [vmem:[%s2215 + $0x30] sm:$0xff]
        %v2223 = vld [vmem:[%s2215 + $0x38] sm:$0xff]
        %s2224 = smul.addr %s2041, 8
        %s2225 = scalar_lea.vmem [#allocation3], %s2224
        %v2226 = vld [vmem:[%s2225] sm:$0xff]
        %v2227 = vld [vmem:[%s2225 + $0x8] sm:$0xff]
        %v2228 = vld [vmem:[%s2225 + $0x10] sm:$0xff]
        %v2229 = vld [vmem:[%s2225 + $0x18] sm:$0xff]
        %v2230 = vld [vmem:[%s2225 + $0x20] sm:$0xff]
        %v2231 = vld [vmem:[%s2225 + $0x28] sm:$0xff]
        %v2232 = vld [vmem:[%s2225 + $0x30] sm:$0xff]
        %v2233 = vld [vmem:[%s2225 + $0x38] sm:$0xff]
        %v2234 = vadd.f32 %v2216, %v2226
        %v2235 = vadd.f32 %v2217, %v2227
        %v2236 = vadd.f32 %v2218, %v2228
        %v2237 = vadd.f32 %v2219, %v2229
        %v2238 = vadd.f32 %v2220, %v2230
        %v2239 = vadd.f32 %v2221, %v2231
        %v2240 = vadd.f32 %v2222, %v2232
        %v2241 = vadd.f32 %v2223, %v2233
        %v2242 = vpack.c.bf16 %v2213, %v2212
        %2243 = vmatprep.subr.bf16.mxu0 %v1490
        %2244 = vmatpush1.bf16.msra.mxu0 %v1489
        %2245 = vmatprep.subr.bf16.mxu0 %v1494
        %2246 = vmatpush1.bf16.msra.mxu0 %v1493
        %2247 = vmatprep.subr.bf16.mxu0 %v1498
        %2248 = vmatpush1.bf16.msra.mxu0 %v1497
        %2249 = vmatprep.subr.bf16.mxu0 %v1502
        %2250 = vmatpush1.bf16.msra.mxu0 %v1501
        %2251 = vmatprep.subr.bf16.mxu0 %v1506
        %2252 = vmatpush1.bf16.msra.mxu0 %v1505
        %2253 = vmatprep.subr.bf16.mxu0 %v1510
        %2254 = vmatpush1.bf16.msra.mxu0 %v1509
        %2255 = vmatprep.subr.bf16.mxu0 %v1514
        %2256 = vmatpush1.bf16.msra.mxu0 %v1513
        %2257 = vmatprep.subr.bf16.mxu0 %v1518
        %2258 = vmatpush1.bf16.msra.mxu0 %v1517
        %2259 = vmatprep.subr.bf16.mxu0 0
        %2260 = vmatpush1.bf16.msra.mxu0 0
        %2261 = vmatprep.subr.bf16.mxu0 0
        %2262 = vmatpush1.bf16.msra.mxu0 0
        %2263 = vmatprep.subr.bf16.mxu0 0
        %2264 = vmatpush1.bf16.msra.mxu0 0
        %2265 = vmatprep.subr.bf16.mxu0 0
        %2266 = vmatpush1.bf16.msra.mxu0 0
        %2267 = vmatprep.subr.bf16.mxu0 0
        %2268 = vmatpush1.bf16.msra.mxu0 0
        %2269 = vmatprep.subr.bf16.mxu0 0
        %2270 = vmatpush1.bf16.msra.mxu0 0
        %2271 = vmatprep.subr.bf16.mxu0 0
        %2272 = vmatpush1.bf16.msra.mxu0 0
        %2273 = vmatprep.subr.bf16.mxu0 0
        %2274 = vmatpush1.bf16.msra.mxu0 0
        %2275 = vmatprep.mubr.bf16.mxu0 0
        %2276 = vmatmul.mubr.bf16.gmra.mrb[0].mxu0 %v2242
        %v2277 = vpop.f32.mrb[0].mxu0
        %v2278 = vadd.f32 0.0, %v2277
        %v2279 = vpop.f32.mrb[0].mxu0
        %v2280 = vadd.f32 0.0, %v2279
        %v2281 = vpop.f32.mrb[0].mxu0
        %v2282 = vadd.f32 0.0, %v2281
        %v2283 = vpop.f32.mrb[0].mxu0
        %v2284 = vadd.f32 0.0, %v2283
        %2285 = vdwg.mxu0
        %2286 = vmatprep.subr.bf16.mxu0 %v1492
        %2287 = vmatpush1.bf16.msra.mxu0 %v1491
        %2288 = vmatprep.subr.bf16.mxu0 %v1496
        %2289 = vmatpush1.bf16.msra.mxu0 %v1495
        %2290 = vmatprep.subr.bf16.mxu0 %v1500
        %2291 = vmatpush1.bf16.msra.mxu0 %v1499
        %2292 = vmatprep.subr.bf16.mxu0 %v1504
        %2293 = vmatpush1.bf16.msra.mxu0 %v1503
        %2294 = vmatprep.subr.bf16.mxu0 %v1508
        %2295 = vmatpush1.bf16.msra.mxu0 %v1507
        %2296 = vmatprep.subr.bf16.mxu0 %v1512
        %2297 = vmatpush1.bf16.msra.mxu0 %v1511
        %2298 = vmatprep.subr.bf16.mxu0 %v1516
        %2299 = vmatpush1.bf16.msra.mxu0 %v1515
        %2300 = vmatprep.subr.bf16.mxu0 %v1520
        %2301 = vmatpush1.bf16.msra.mxu0 %v1519
        %2302 = vmatprep.subr.bf16.mxu0 0
        %2303 = vmatpush1.bf16.msra.mxu0 0
        %2304 = vmatprep.subr.bf16.mxu0 0
        %2305 = vmatpush1.bf16.msra.mxu0 0
        %2306 = vmatprep.subr.bf16.mxu0 0
        %2307 = vmatpush1.bf16.msra.mxu0 0
        %2308 = vmatprep.subr.bf16.mxu0 0
        %2309 = vmatpush1.bf16.msra.mxu0 0
        %2310 = vmatprep.subr.bf16.mxu0 0
        %2311 = vmatpush1.bf16.msra.mxu0 0
        %2312 = vmatprep.subr.bf16.mxu0 0
        %2313 = vmatpush1.bf16.msra.mxu0 0
        %2314 = vmatprep.subr.bf16.mxu0 0
        %2315 = vmatpush1.bf16.msra.mxu0 0
        %2316 = vmatprep.subr.bf16.mxu0 0
        %2317 = vmatpush1.bf16.msra.mxu0 0
        %2318 = vmatprep.mubr.bf16.mxu0 0
        %2319 = vmatmul.mubr.bf16.gmra.mrb[0].mxu0 %v2242
        %v2320 = vpop.f32.mrb[0].mxu0
        %v2321 = vadd.f32 0.0, %v2320
        %v2322 = vpop.f32.mrb[0].mxu0
        %v2323 = vadd.f32 0.0, %v2322
        %v2324 = vpop.f32.mrb[0].mxu0
        %v2325 = vadd.f32 0.0, %v2324
        %v2326 = vpop.f32.mrb[0].mxu0
        %v2327 = vadd.f32 0.0, %v2326
        %2328 = vdwg.mxu0
        %v2329 = vadd.f32 %v2234, %v2278
        %v2330 = vadd.f32 %v2235, %v2280
        %v2331 = vadd.f32 %v2236, %v2321
        %v2332 = vadd.f32 %v2237, %v2323
        %v2333 = vadd.f32 %v2238, %v2282
        %v2334 = vadd.f32 %v2239, %v2284
        %v2335 = vadd.f32 %v2240, %v2325
        %v2336 = vadd.f32 %v2241, %v2327
        %v2337 = vxor.u32 %v2329, 2147483648
        %v2338 = vxor.u32 %v2330, 2147483648
        %v2339 = vxor.u32 %v2331, 2147483648
        %v2340 = vxor.u32 %v2333, 2147483648
        %v2341 = vxor.u32 %v2334, 2147483648
        %v2342 = vxor.u32 %v2335, 2147483648
        %v2343 = vmul.f32 %v2337, 1.442695
        %v2344 = vpow.pop %v2343
        %v2345 = vmul.f32 %v2338, 1.442695
        %v2346 = vpow.pop %v2345
        %v2347 = vmul.f32 %v2339, 1.442695
        %v2348 = vpow.pop %v2347
        %v2349 = vmul.f32 %v2340, 1.442695
        %v2350 = vpow.pop %v2349
        %v2351 = vmul.f32 %v2341, 1.442695
        %v2352 = vpow.pop %v2351
        %v2353 = vmul.f32 %v2342, 1.442695
        %v2354 = vpow.pop %v2353
        %v2355 = vadd.f32 %v2344, 1.0
        %v2356 = vadd.f32 %v2346, 1.0
        %v2357 = vadd.f32 %v2348, 1.0
        %v2358 = vadd.f32 %v2350, 1.0
        %v2359 = vadd.f32 %v2352, 1.0
        %v2360 = vadd.f32 %v2354, 1.0
        %v2361 = vrcp.pop %v2355
        %v2362 = vmul.f32 1.0, %v2361
        %v2363 = vrcp.pop %v2356
        %v2364 = vmul.f32 1.0, %v2363
        %v2365 = vrcp.pop %v2357
        %v2366 = vmul.f32 1.0, %v2365
        %v2367 = vrcp.pop %v2358
        %v2368 = vmul.f32 1.0, %v2367
        %v2369 = vrcp.pop %v2359
        %v2370 = vmul.f32 1.0, %v2369
        %v2371 = vrcp.pop %v2360
        %v2372 = vmul.f32 1.0, %v2371
        %v2373 = vtanh.pop %v2332
        %v2374 = vtanh.pop %v2336
        %v2375 = vmul.f32 %v2364, %v2208
        %v2376 = vmul.f32 %v2370, %v2209
        %v2377 = vmul.f32 %v2362, %v2373
        %v2378 = vmul.f32 %v2368, %v2374
        %v2379 = vadd.f32 %v2375, %v2377
        %v2380 = vadd.f32 %v2376, %v2378
        %v2381 = vtanh.pop %v2379
        %v2382 = vtanh.pop %v2380
        %v2383 = vmul.f32 %v2366, %v2381
        %v2384 = vmul.f32 %v2372, %v2382
        %s2385 = smul.addr %s1879, 8
        %s2386 = scalar_lea.vmem [#allocation2], %s2385
        %v2387 = vld [vmem:[%s2386] sm:$0xff]
        %v2388 = vld [vmem:[%s2386 + $0x8] sm:$0xff]
        %v2389 = vld [vmem:[%s2386 + $0x10] sm:$0xff]
        %v2390 = vld [vmem:[%s2386 + $0x18] sm:$0xff]
        %v2391 = vld [vmem:[%s2386 + $0x20] sm:$0xff]
        %v2392 = vld [vmem:[%s2386 + $0x28] sm:$0xff]
        %v2393 = vld [vmem:[%s2386 + $0x30] sm:$0xff]
        %v2394 = vld [vmem:[%s2386 + $0x38] sm:$0xff]
        %s2395 = smul.addr %s1868, 8
        %s2396 = scalar_lea.vmem [#allocation3], %s2395
        %v2397 = vld [vmem:[%s2396] sm:$0xff]
        %v2398 = vld [vmem:[%s2396 + $0x8] sm:$0xff]
        %v2399 = vld [vmem:[%s2396 + $0x10] sm:$0xff]
        %v2400 = vld [vmem:[%s2396 + $0x18] sm:$0xff]
        %v2401 = vld [vmem:[%s2396 + $0x20] sm:$0xff]
        %v2402 = vld [vmem:[%s2396 + $0x28] sm:$0xff]
        %v2403 = vld [vmem:[%s2396 + $0x30] sm:$0xff]
        %v2404 = vld [vmem:[%s2396 + $0x38] sm:$0xff]
        %v2405 = vadd.f32 %v2387, %v2397
        %v2406 = vadd.f32 %v2388, %v2398
        %v2407 = vadd.f32 %v2389, %v2399
        %v2408 = vadd.f32 %v2390, %v2400
        %v2409 = vadd.f32 %v2391, %v2401
        %v2410 = vadd.f32 %v2392, %v2402
        %v2411 = vadd.f32 %v2393, %v2403
        %v2412 = vadd.f32 %v2394, %v2404
        %v2413 = vpack.c.bf16 %v2384, %v2383
        %2414 = vmatprep.subr.bf16.mxu0 %v1490
        %2415 = vmatpush1.bf16.msra.mxu0 %v1489
        %2416 = vmatprep.subr.bf16.mxu0 %v1494
        %2417 = vmatpush1.bf16.msra.mxu0 %v1493
        %2418 = vmatprep.subr.bf16.mxu0 %v1498
        %2419 = vmatpush1.bf16.msra.mxu0 %v1497
        %2420 = vmatprep.subr.bf16.mxu0 %v1502
        %2421 = vmatpush1.bf16.msra.mxu0 %v1501
        %2422 = vmatprep.subr.bf16.mxu0 %v1506
        %2423 = vmatpush1.bf16.msra.mxu0 %v1505
        %2424 = vmatprep.subr.bf16.mxu0 %v1510
        %2425 = vmatpush1.bf16.msra.mxu0 %v1509
        %2426 = vmatprep.subr.bf16.mxu0 %v1514
        %2427 = vmatpush1.bf16.msra.mxu0 %v1513
        %2428 = vmatprep.subr.bf16.mxu0 %v1518
        %2429 = vmatpush1.bf16.msra.mxu0 %v1517
        %2430 = vmatprep.subr.bf16.mxu0 0
        %2431 = vmatpush1.bf16.msra.mxu0 0
        %2432 = vmatprep.subr.bf16.mxu0 0
        %2433 = vmatpush1.bf16.msra.mxu0 0
        %2434 = vmatprep.subr.bf16.mxu0 0
        %2435 = vmatpush1.bf16.msra.mxu0 0
        %2436 = vmatprep.subr.bf16.mxu0 0
        %2437 = vmatpush1.bf16.msra.mxu0 0
        %2438 = vmatprep.subr.bf16.mxu0 0
        %2439 = vmatpush1.bf16.msra.mxu0 0
        %2440 = vmatprep.subr.bf16.mxu0 0
        %2441 = vmatpush1.bf16.msra.mxu0 0
        %2442 = vmatprep.subr.bf16.mxu0 0
        %2443 = vmatpush1.bf16.msra.mxu0 0
        %2444 = vmatprep.subr.bf16.mxu0 0
        %2445 = vmatpush1.bf16.msra.mxu0 0
        %2446 = vmatprep.mubr.bf16.mxu0 0
        %2447 = vmatmul.mubr.bf16.gmra.mrb[0].mxu0 %v2413
        %v2448 = vpop.f32.mrb[0].mxu0
        %v2449 = vadd.f32 0.0, %v2448
        %v2450 = vpop.f32.mrb[0].mxu0
        %v2451 = vadd.f32 0.0, %v2450
        %v2452 = vpop.f32.mrb[0].mxu0
        %v2453 = vadd.f32 0.0, %v2452
        %v2454 = vpop.f32.mrb[0].mxu0
        %v2455 = vadd.f32 0.0, %v2454
        %2456 = vdwg.mxu0
        %2457 = vmatprep.subr.bf16.mxu0 %v1492
        %2458 = vmatpush1.bf16.msra.mxu0 %v1491
        %2459 = vmatprep.subr.bf16.mxu0 %v1496
        %2460 = vmatpush1.bf16.msra.mxu0 %v1495
        %2461 = vmatprep.subr.bf16.mxu0 %v1500
        %2462 = vmatpush1.bf16.msra.mxu0 %v1499
        %2463 = vmatprep.subr.bf16.mxu0 %v1504
        %2464 = vmatpush1.bf16.msra.mxu0 %v1503
        %2465 = vmatprep.subr.bf16.mxu0 %v1508
        %2466 = vmatpush1.bf16.msra.mxu0 %v1507
        %2467 = vmatprep.subr.bf16.mxu0 %v1512
        %2468 = vmatpush1.bf16.msra.mxu0 %v1511
        %2469 = vmatprep.subr.bf16.mxu0 %v1516
        %2470 = vmatpush1.bf16.msra.mxu0 %v1515
        %2471 = vmatprep.subr.bf16.mxu0 %v1520
        %2472 = vmatpush1.bf16.msra.mxu0 %v1519
        %2473 = vmatprep.subr.bf16.mxu0 0
        %2474 = vmatpush1.bf16.msra.mxu0 0
        %2475 = vmatprep.subr.bf16.mxu0 0
        %2476 = vmatpush1.bf16.msra.mxu0 0
        %2477 = vmatprep.subr.bf16.mxu0 0
        %2478 = vmatpush1.bf16.msra.mxu0 0
        %2479 = vmatprep.subr.bf16.mxu0 0
        %2480 = vmatpush1.bf16.msra.mxu0 0
        %2481 = vmatprep.subr.bf16.mxu0 0
        %2482 = vmatpush1.bf16.msra.mxu0 0
        %2483 = vmatprep.subr.bf16.mxu0 0
        %2484 = vmatpush1.bf16.msra.mxu0 0
        %2485 = vmatprep.subr.bf16.mxu0 0
        %2486 = vmatpush1.bf16.msra.mxu0 0
        %2487 = vmatprep.subr.bf16.mxu0 0
        %2488 = vmatpush1.bf16.msra.mxu0 0
        %2489 = vmatprep.mubr.bf16.mxu0 0
        %2490 = vmatmul.mubr.bf16.gmra.mrb[0].mxu0 %v2413
        %v2491 = vpop.f32.mrb[0].mxu0
        %v2492 = vadd.f32 0.0, %v2491
        %v2493 = vpop.f32.mrb[0].mxu0
        %v2494 = vadd.f32 0.0, %v2493
        %v2495 = vpop.f32.mrb[0].mxu0
        %v2496 = vadd.f32 0.0, %v2495
        %v2497 = vpop.f32.mrb[0].mxu0
        %v2498 = vadd.f32 0.0, %v2497
        %2499 = vdwg.mxu0
        %v2500 = vadd.f32 %v2405, %v2449
        %v2501 = vadd.f32 %v2406, %v2451
        %v2502 = vadd.f32 %v2407, %v2492
        %v2503 = vadd.f32 %v2408, %v2494
        %v2504 = vadd.f32 %v2409, %v2453
        %v2505 = vadd.f32 %v2410, %v2455
        %v2506 = vadd.f32 %v2411, %v2496
        %v2507 = vadd.f32 %v2412, %v2498
        %v2508 = vxor.u32 %v2500, 2147483648
        %v2509 = vxor.u32 %v2501, 2147483648
        %v2510 = vxor.u32 %v2502, 2147483648
        %v2511 = vxor.u32 %v2504, 2147483648
        %v2512 = vxor.u32 %v2505, 2147483648
        %v2513 = vxor.u32 %v2506, 2147483648
        %v2514 = vmul.f32 %v2508, 1.442695
        %v2515 = vpow.pop %v2514
        %v2516 = vmul.f32 %v2509, 1.442695
        %v2517 = vpow.pop %v2516
        %v2518 = vmul.f32 %v2510, 1.442695
        %v2519 = vpow.pop %v2518
        %v2520 = vmul.f32 %v2511, 1.442695
        %v2521 = vpow.pop %v2520
        %v2522 = vmul.f32 %v2512, 1.442695
        %v2523 = vpow.pop %v2522
        %v2524 = vmul.f32 %v2513, 1.442695
        %v2525 = vpow.pop %v2524
        %v2526 = vadd.f32 %v2515, 1.0
        %v2527 = vadd.f32 %v2517, 1.0
        %v2528 = vadd.f32 %v2519, 1.0
        %v2529 = vadd.f32 %v2521, 1.0
        %v2530 = vadd.f32 %v2523, 1.0
        %v2531 = vadd.f32 %v2525, 1.0
        %v2532 = vrcp.pop %v2526
        %v2533 = vmul.f32 1.0, %v2532
        %v2534 = vrcp.pop %v2527
        %v2535 = vmul.f32 1.0, %v2534
        %v2536 = vrcp.pop %v2528
        %v2537 = vmul.f32 1.0, %v2536
        %v2538 = vrcp.pop %v2529
        %v2539 = vmul.f32 1.0, %v2538
        %v2540 = vrcp.pop %v2530
        %v2541 = vmul.f32 1.0, %v2540
        %v2542 = vrcp.pop %v2531
        %v2543 = vmul.f32 1.0, %v2542
        %v2544 = vtanh.pop %v2503
        %v2545 = vtanh.pop %v2507
        %v2546 = vmul.f32 %v2535, %v2379
        %v2547 = vmul.f32 %v2541, %v2380
        %v2548 = vmul.f32 %v2533, %v2544
        %v2549 = vmul.f32 %v2539, %v2545
        %v2550 = vadd.f32 %v2546, %v2548
        %v2551 = vadd.f32 %v2547, %v2549
        %v2552 = vtanh.pop %v2550
        %v2553 = vtanh.pop %v2551
        %v2554 = vmul.f32 %v2537, %v2552
        %v2555 = vmul.f32 %v2543, %v2553
        %s2556 = smul.addr %s1706, 8
        %s2557 = scalar_lea.vmem [#allocation2], %s2556
        %v2558 = vld [vmem:[%s2557] sm:$0xff]
        %v2559 = vld [vmem:[%s2557 + $0x8] sm:$0xff]
        %v2560 = vld [vmem:[%s2557 + $0x10] sm:$0xff]
        %v2561 = vld [vmem:[%s2557 + $0x18] sm:$0xff]
        %v2562 = vld [vmem:[%s2557 + $0x20] sm:$0xff]
        %v2563 = vld [vmem:[%s2557 + $0x28] sm:$0xff]
        %v2564 = vld [vmem:[%s2557 + $0x30] sm:$0xff]
        %v2565 = vld [vmem:[%s2557 + $0x38] sm:$0xff]
        %s2566 = smul.addr %s1695, 8
        %s2567 = scalar_lea.vmem [#allocation3], %s2566
        %v2568 = vld [vmem:[%s2567] sm:$0xff]
        %v2569 = vld [vmem:[%s2567 + $0x8] sm:$0xff]
        %v2570 = vld [vmem:[%s2567 + $0x10] sm:$0xff]
        %v2571 = vld [vmem:[%s2567 + $0x18] sm:$0xff]
        %v2572 = vld [vmem:[%s2567 + $0x20] sm:$0xff]
        %v2573 = vld [vmem:[%s2567 + $0x28] sm:$0xff]
        %v2574 = vld [vmem:[%s2567 + $0x30] sm:$0xff]
        %v2575 = vld [vmem:[%s2567 + $0x38] sm:$0xff]
        %v2576 = vadd.f32 %v2558, %v2568
        %v2577 = vadd.f32 %v2559, %v2569
        %v2578 = vadd.f32 %v2560, %v2570
        %v2579 = vadd.f32 %v2561, %v2571
        %v2580 = vadd.f32 %v2562, %v2572
        %v2581 = vadd.f32 %v2563, %v2573
        %v2582 = vadd.f32 %v2564, %v2574
        %v2583 = vadd.f32 %v2565, %v2575
        %v2584 = vpack.c.bf16 %v2555, %v2554
        %2585 = vmatprep.subr.bf16.mxu0 %v1490
        %2586 = vmatpush1.bf16.msra.mxu0 %v1489
        %2587 = vmatprep.subr.bf16.mxu0 %v1494
        %2588 = vmatpush1.bf16.msra.mxu0 %v1493
        %2589 = vmatprep.subr.bf16.mxu0 %v1498
        %2590 = vmatpush1.bf16.msra.mxu0 %v1497
        %2591 = vmatprep.subr.bf16.mxu0 %v1502
        %2592 = vmatpush1.bf16.msra.mxu0 %v1501
        %2593 = vmatprep.subr.bf16.mxu0 %v1506
        %2594 = vmatpush1.bf16.msra.mxu0 %v1505
        %2595 = vmatprep.subr.bf16.mxu0 %v1510
        %2596 = vmatpush1.bf16.msra.mxu0 %v1509
        %2597 = vmatprep.subr.bf16.mxu0 %v1514
        %2598 = vmatpush1.bf16.msra.mxu0 %v1513
        %2599 = vmatprep.subr.bf16.mxu0 %v1518
        %2600 = vmatpush1.bf16.msra.mxu0 %v1517
        %2601 = vmatprep.subr.bf16.mxu0 0
        %2602 = vmatpush1.bf16.msra.mxu0 0
        %2603 = vmatprep.subr.bf16.mxu0 0
        %2604 = vmatpush1.bf16.msra.mxu0 0
        %2605 = vmatprep.subr.bf16.mxu0 0
        %2606 = vmatpush1.bf16.msra.mxu0 0
        %2607 = vmatprep.subr.bf16.mxu0 0
        %2608 = vmatpush1.bf16.msra.mxu0 0
        %2609 = vmatprep.subr.bf16.mxu0 0
        %2610 = vmatpush1.bf16.msra.mxu0 0
        %2611 = vmatprep.subr.bf16.mxu0 0
        %2612 = vmatpush1.bf16.msra.mxu0 0
        %2613 = vmatprep.subr.bf16.mxu0 0
        %2614 = vmatpush1.bf16.msra.mxu0 0
        %2615 = vmatprep.subr.bf16.mxu0 0
        %2616 = vmatpush1.bf16.msra.mxu0 0
        %2617 = vmatprep.mubr.bf16.mxu0 0
        %2618 = vmatmul.mubr.bf16.gmra.mrb[0].mxu0 %v2584
        %v2619 = vpop.f32.mrb[0].mxu0
        %v2620 = vadd.f32 0.0, %v2619
        %v2621 = vpop.f32.mrb[0].mxu0
        %v2622 = vadd.f32 0.0, %v2621
        %v2623 = vpop.f32.mrb[0].mxu0
        %v2624 = vadd.f32 0.0, %v2623
        %v2625 = vpop.f32.mrb[0].mxu0
        %v2626 = vadd.f32 0.0, %v2625
        %2627 = vdwg.mxu0
        %2628 = vmatprep.subr.bf16.mxu0 %v1492
        %2629 = vmatpush1.bf16.msra.mxu0 %v1491
        %2630 = vmatprep.subr.bf16.mxu0 %v1496
        %2631 = vmatpush1.bf16.msra.mxu0 %v1495
        %2632 = vmatprep.subr.bf16.mxu0 %v1500
        %2633 = vmatpush1.bf16.msra.mxu0 %v1499
        %2634 = vmatprep.subr.bf16.mxu0 %v1504
        %2635 = vmatpush1.bf16.msra.mxu0 %v1503
        %2636 = vmatprep.subr.bf16.mxu0 %v1508
        %2637 = vmatpush1.bf16.msra.mxu0 %v1507
        %2638 = vmatprep.subr.bf16.mxu0 %v1512
        %2639 = vmatpush1.bf16.msra.mxu0 %v1511
        %2640 = vmatprep.subr.bf16.mxu0 %v1516
        %2641 = vmatpush1.bf16.msra.mxu0 %v1515
        %2642 = vmatprep.subr.bf16.mxu0 %v1520
        %2643 = vmatpush1.bf16.msra.mxu0 %v1519
        %2644 = vmatprep.subr.bf16.mxu0 0
        %2645 = vmatpush1.bf16.msra.mxu0 0
        %2646 = vmatprep.subr.bf16.mxu0 0
        %2647 = vmatpush1.bf16.msra.mxu0 0
        %2648 = vmatprep.subr.bf16.mxu0 0
        %2649 = vmatpush1.bf16.msra.mxu0 0
        %2650 = vmatprep.subr.bf16.mxu0 0
        %2651 = vmatpush1.bf16.msra.mxu0 0
        %2652 = vmatprep.subr.bf16.mxu0 0
        %2653 = vmatpush1.bf16.msra.mxu0 0
        %2654 = vmatprep.subr.bf16.mxu0 0
        %2655 = vmatpush1.bf16.msra.mxu0 0
        %2656 = vmatprep.subr.bf16.mxu0 0
        %2657 = vmatpush1.bf16.msra.mxu0 0
        %2658 = vmatprep.subr.bf16.mxu0 0
        %2659 = vmatpush1.bf16.msra.mxu0 0
        %2660 = vmatprep.mubr.bf16.mxu0 0
        %2661 = vmatmul.mubr.bf16.gmra.mrb[0].mxu0 %v2584
        %v2662 = vpop.f32.mrb[0].mxu0
        %v2663 = vadd.f32 0.0, %v2662
        %v2664 = vpop.f32.mrb[0].mxu0
        %v2665 = vadd.f32 0.0, %v2664
        %v2666 = vpop.f32.mrb[0].mxu0
        %v2667 = vadd.f32 0.0, %v2666
        %v2668 = vpop.f32.mrb[0].mxu0
        %v2669 = vadd.f32 0.0, %v2668
        %2670 = vdwg.mxu0
        %v2671 = vadd.f32 %v2576, %v2620
        %v2672 = vadd.f32 %v2577, %v2622
        %v2673 = vadd.f32 %v2578, %v2663
        %v2674 = vadd.f32 %v2579, %v2665
        %v2675 = vadd.f32 %v2580, %v2624
        %v2676 = vadd.f32 %v2581, %v2626
        %v2677 = vadd.f32 %v2582, %v2667
        %v2678 = vadd.f32 %v2583, %v2669
        %v2679 = vxor.u32 %v2671, 2147483648
        %v2680 = vxor.u32 %v2672, 2147483648
        %v2681 = vxor.u32 %v2673, 2147483648
        %v2682 = vxor.u32 %v2675, 2147483648
        %v2683 = vxor.u32 %v2676, 2147483648
        %v2684 = vxor.u32 %v2677, 2147483648
        %v2685 = vmul.f32 %v2679, 1.442695
        %v2686 = vpow.pop %v2685
        %v2687 = vmul.f32 %v2680, 1.442695
        %v2688 = vpow.pop %v2687
        %v2689 = vmul.f32 %v2681, 1.442695
        %v2690 = vpow.pop %v2689
        %v2691 = vmul.f32 %v2682, 1.442695
        %v2692 = vpow.pop %v2691
        %v2693 = vmul.f32 %v2683, 1.442695
        %v2694 = vpow.pop %v2693
        %v2695 = vmul.f32 %v2684, 1.442695
        %v2696 = vpow.pop %v2695
        %v2697 = vadd.f32 %v2686, 1.0
        %v2698 = vadd.f32 %v2688, 1.0
        %v2699 = vadd.f32 %v2690, 1.0
        %v2700 = vadd.f32 %v2692, 1.0
        %v2701 = vadd.f32 %v2694, 1.0
        %v2702 = vadd.f32 %v2696, 1.0
        %v2703 = vrcp.pop %v2697
        %v2704 = vmul.f32 1.0, %v2703
        %v2705 = vrcp.pop %v2698
        %v2706 = vmul.f32 1.0, %v2705
        %v2707 = vrcp.pop %v2699
        %v2708 = vmul.f32 1.0, %v2707
        %v2709 = vrcp.pop %v2700
        %v2710 = vmul.f32 1.0, %v2709
        %v2711 = vrcp.pop %v2701
        %v2712 = vmul.f32 1.0, %v2711
        %v2713 = vrcp.pop %v2702
        %v2714 = vmul.f32 1.0, %v2713
        %v2715 = vtanh.pop %v2674
        %v2716 = vtanh.pop %v2678
        %v2717 = vmul.f32 %v2706, %v2550
        %v2718 = vmul.f32 %v2712, %v2551
        %v2719 = vmul.f32 %v2704, %v2715
        %v2720 = vmul.f32 %v2710, %v2716
        %v2721 = vadd.f32 %v2717, %v2719
        %v2722 = vadd.f32 %v2718, %v2720
        %v2723 = vtanh.pop %v2721
        %v2724 = vtanh.pop %v2722
        %v2725 = vmul.f32 %v2708, %v2723
        %v2726 = vmul.f32 %v2714, %v2724
        %s2727 = smul.addr %s1373, 8
        %s2728 = scalar_lea.vmem [#allocation2], %s2727
        %v2729 = vld [vmem:[%s2728] sm:$0xff]
        %v2730 = vld [vmem:[%s2728 + $0x8] sm:$0xff]
        %v2731 = vld [vmem:[%s2728 + $0x10] sm:$0xff]
        %v2732 = vld [vmem:[%s2728 + $0x18] sm:$0xff]
        %v2733 = vld [vmem:[%s2728 + $0x20] sm:$0xff]
        %v2734 = vld [vmem:[%s2728 + $0x28] sm:$0xff]
        %v2735 = vld [vmem:[%s2728 + $0x30] sm:$0xff]
        %v2736 = vld [vmem:[%s2728 + $0x38] sm:$0xff]
        %s2737 = smul.addr %s1362, 8
        %s2738 = scalar_lea.vmem [#allocation3], %s2737
        %v2739 = vld [vmem:[%s2738] sm:$0xff]
        %v2740 = vld [vmem:[%s2738 + $0x8] sm:$0xff]
        %v2741 = vld [vmem:[%s2738 + $0x10] sm:$0xff]
        %v2742 = vld [vmem:[%s2738 + $0x18] sm:$0xff]
        %v2743 = vld [vmem:[%s2738 + $0x20] sm:$0xff]
        %v2744 = vld [vmem:[%s2738 + $0x28] sm:$0xff]
        %v2745 = vld [vmem:[%s2738 + $0x30] sm:$0xff]
        %v2746 = vld [vmem:[%s2738 + $0x38] sm:$0xff]
        %v2747 = vadd.f32 %v2729, %v2739
        %v2748 = vadd.f32 %v2730, %v2740
        %v2749 = vadd.f32 %v2731, %v2741
        %v2750 = vadd.f32 %v2732, %v2742
        %v2751 = vadd.f32 %v2733, %v2743
        %v2752 = vadd.f32 %v2734, %v2744
        %v2753 = vadd.f32 %v2735, %v2745
        %v2754 = vadd.f32 %v2736, %v2746
        %v2755 = vpack.c.bf16 %v2726, %v2725
        %2756 = vmatprep.subr.bf16.mxu0 %v1490
        %2757 = vmatpush1.bf16.msra.mxu0 %v1489
        %2758 = vmatprep.subr.bf16.mxu0 %v1494
        %2759 = vmatpush1.bf16.msra.mxu0 %v1493
        %2760 = vmatprep.subr.bf16.mxu0 %v1498
        %2761 = vmatpush1.bf16.msra.mxu0 %v1497
        %2762 = vmatprep.subr.bf16.mxu0 %v1502
        %2763 = vmatpush1.bf16.msra.mxu0 %v1501
        %2764 = vmatprep.subr.bf16.mxu0 %v1506
        %2765 = vmatpush1.bf16.msra.mxu0 %v1505
        %2766 = vmatprep.subr.bf16.mxu0 %v1510
        %2767 = vmatpush1.bf16.msra.mxu0 %v1509
        %2768 = vmatprep.subr.bf16.mxu0 %v1514
        %2769 = vmatpush1.bf16.msra.mxu0 %v1513
        %2770 = vmatprep.subr.bf16.mxu0 %v1518
        %2771 = vmatpush1.bf16.msra.mxu0 %v1517
        %2772 = vmatprep.subr.bf16.mxu0 0
        %2773 = vmatpush1.bf16.msra.mxu0 0
        %2774 = vmatprep.subr.bf16.mxu0 0
        %2775 = vmatpush1.bf16.msra.mxu0 0
        %2776 = vmatprep.subr.bf16.mxu0 0
        %2777 = vmatpush1.bf16.msra.mxu0 0
        %2778 = vmatprep.subr.bf16.mxu0 0
        %2779 = vmatpush1.bf16.msra.mxu0 0
        %2780 = vmatprep.subr.bf16.mxu0 0
        %2781 = vmatpush1.bf16.msra.mxu0 0
        %2782 = vmatprep.subr.bf16.mxu0 0
        %2783 = vmatpush1.bf16.msra.mxu0 0
        %2784 = vmatprep.subr.bf16.mxu0 0
        %2785 = vmatpush1.bf16.msra.mxu0 0
        %2786 = vmatprep.subr.bf16.mxu0 0
        %2787 = vmatpush1.bf16.msra.mxu0 0
        %2788 = vmatprep.mubr.bf16.mxu0 0
        %2789 = vmatmul.mubr.bf16.gmra.mrb[0].mxu0 %v2755
        %v2790 = vpop.f32.mrb[0].mxu0
        %v2791 = vadd.f32 0.0, %v2790
        %v2792 = vpop.f32.mrb[0].mxu0
        %v2793 = vadd.f32 0.0, %v2792
        %v2794 = vpop.f32.mrb[0].mxu0
        %v2795 = vadd.f32 0.0, %v2794
        %v2796 = vpop.f32.mrb[0].mxu0
        %v2797 = vadd.f32 0.0, %v2796
        %2798 = vdwg.mxu0
        %2799 = vmatprep.subr.bf16.mxu0 %v1492
        %2800 = vmatpush1.bf16.msra.mxu0 %v1491
        %2801 = vmatprep.subr.bf16.mxu0 %v1496
        %2802 = vmatpush1.bf16.msra.mxu0 %v1495
        %2803 = vmatprep.subr.bf16.mxu0 %v1500
        %2804 = vmatpush1.bf16.msra.mxu0 %v1499
        %2805 = vmatprep.subr.bf16.mxu0 %v1504
        %2806 = vmatpush1.bf16.msra.mxu0 %v1503
        %2807 = vmatprep.subr.bf16.mxu0 %v1508
        %2808 = vmatpush1.bf16.msra.mxu0 %v1507
        %2809 = vmatprep.subr.bf16.mxu0 %v1512
        %2810 = vmatpush1.bf16.msra.mxu0 %v1511
        %2811 = vmatprep.subr.bf16.mxu0 %v1516
        %2812 = vmatpush1.bf16.msra.mxu0 %v1515
        %2813 = vmatprep.subr.bf16.mxu0 %v1520
        %2814 = vmatpush1.bf16.msra.mxu0 %v1519
        %2815 = vmatprep.subr.bf16.mxu0 0
        %2816 = vmatpush1.bf16.msra.mxu0 0
        %2817 = vmatprep.subr.bf16.mxu0 0
        %2818 = vmatpush1.bf16.msra.mxu0 0
        %2819 = vmatprep.subr.bf16.mxu0 0
        %2820 = vmatpush1.bf16.msra.mxu0 0
        %2821 = vmatprep.subr.bf16.mxu0 0
        %2822 = vmatpush1.bf16.msra.mxu0 0
        %2823 = vmatprep.subr.bf16.mxu0 0
        %2824 = vmatpush1.bf16.msra.mxu0 0
        %2825 = vmatprep.subr.bf16.mxu0 0
        %2826 = vmatpush1.bf16.msra.mxu0 0
        %2827 = vmatprep.subr.bf16.mxu0 0
        %2828 = vmatpush1.bf16.msra.mxu0 0
        %2829 = vmatprep.subr.bf16.mxu0 0
        %2830 = vmatpush1.bf16.msra.mxu0 0
        %2831 = vmatprep.mubr.bf16.mxu0 0
        %2832 = vmatmul.mubr.bf16.gmra.mrb[0].mxu0 %v2755
        %v2833 = vpop.f32.mrb[0].mxu0
        %v2834 = vadd.f32 0.0, %v2833
        %v2835 = vpop.f32.mrb[0].mxu0
        %v2836 = vadd.f32 0.0, %v2835
        %v2837 = vpop.f32.mrb[0].mxu0
        %v2838 = vadd.f32 0.0, %v2837
        %v2839 = vpop.f32.mrb[0].mxu0
        %v2840 = vadd.f32 0.0, %v2839
        %2841 = vdwg.mxu0
        %v2842 = vadd.f32 %v2747, %v2791
        %v2843 = vadd.f32 %v2748, %v2793
        %v2844 = vadd.f32 %v2749, %v2834
        %v2845 = vadd.f32 %v2750, %v2836
        %v2846 = vadd.f32 %v2751, %v2795
        %v2847 = vadd.f32 %v2752, %v2797
        %v2848 = vadd.f32 %v2753, %v2838
        %v2849 = vadd.f32 %v2754, %v2840
        %v2850 = vxor.u32 %v2842, 2147483648
        %v2851 = vxor.u32 %v2843, 2147483648
        %v2852 = vxor.u32 %v2844, 2147483648
        %v2853 = vxor.u32 %v2846, 2147483648
        %v2854 = vxor.u32 %v2847, 2147483648
        %v2855 = vxor.u32 %v2848, 2147483648
        %v2856 = vmul.f32 %v2850, 1.442695
        %v2857 = vpow.pop %v2856
        %v2858 = vmul.f32 %v2851, 1.442695
        %v2859 = vpow.pop %v2858
        %v2860 = vmul.f32 %v2852, 1.442695
        %v2861 = vpow.pop %v2860
        %v2862 = vmul.f32 %v2853, 1.442695
        %v2863 = vpow.pop %v2862
        %v2864 = vmul.f32 %v2854, 1.442695
        %v2865 = vpow.pop %v2864
        %v2866 = vmul.f32 %v2855, 1.442695
        %v2867 = vpow.pop %v2866
        %v2868 = vadd.f32 %v2857, 1.0
        %v2869 = vadd.f32 %v2859, 1.0
        %v2870 = vadd.f32 %v2861, 1.0
        %v2871 = vadd.f32 %v2863, 1.0
        %v2872 = vadd.f32 %v2865, 1.0
        %v2873 = vadd.f32 %v2867, 1.0
        %v2874 = vrcp.pop %v2868
        %v2875 = vmul.f32 1.0, %v2874
        %v2876 = vrcp.pop %v2869
        %v2877 = vmul.f32 1.0, %v2876
        %v2878 = vrcp.pop %v2870
        %v2879 = vmul.f32 1.0, %v2878
        %v2880 = vrcp.pop %v2871
        %v2881 = vmul.f32 1.0, %v2880
        %v2882 = vrcp.pop %v2872
        %v2883 = vmul.f32 1.0, %v2882
        %v2884 = vrcp.pop %v2873
        %v2885 = vmul.f32 1.0, %v2884
        %v2886 = vtanh.pop %v2845
        %v2887 = vtanh.pop %v2849
        %v2888 = vmul.f32 %v2877, %v2721
        %v2889 = vmul.f32 %v2883, %v2722
        %v2890 = vmul.f32 %v2875, %v2886
        %v2891 = vmul.f32 %v2881, %v2887
        %v2892 = vadd.f32 %v2888, %v2890
        %v2893 = vadd.f32 %v2889, %v2891
        %v2894 = vtanh.pop %v2892
        %v2895 = vtanh.pop %v2893
        %v2896 = vmul.f32 %v2879, %v2894
        %v2897 = vmul.f32 %v2885, %v2895
        %2898 = vst [vmem:[#allocation4] sm:$0xff] %v2896
        %2899 = vst [vmem:[#allocation4 + $0x8] sm:$0xff] %v2897
        %2900 = vst [vmem:[#allocation5] sm:$0xff] %v2892
        %2901 = vst [vmem:[#allocation5 + $0x8] sm:$0xff] %v2893
        %p2902 = scmp.eq.s32.totalorder %s25, 1
        // Predicated region
        $region131: #{tpu_custom_call.1} parent=117 // pred_check
          %p2903 = pneg %p2902
        $region132: #{tpu_custom_call.1} parent=117 // pred_check_branch
          %2905 = sbr.rel (%p2903) target = $region134
        $region133: #{tpu_custom_call.1} parent=117 // pred_region
          %2906 = vst [vmem:[%s498] sm:$0xff] %v2896
          %2907 = vst [vmem:[%s498 + $0x8] sm:$0xff] %v2897
        $region134: #{tpu_custom_call.1} parent=117 // pred_fallthru
          _
        %s2908 = sand.u32 %s182, 1
        %s2909 = scalar_lea.sflag [#allocation9], %s2908
        %s2910 = sand.u32 %s182, 1
        %s2911 = smul.addr %s2910, 16
        %s2912 = scalar_lea.vmem [#allocation8], %s2911
        // Predicated region
        $region135: #{tpu_custom_call.1} parent=117 // pred_check
          %p2913 = pneg %p192
        $region136: #{tpu_custom_call.1} parent=117 // pred_check_branch
          %2915 = sbr.rel (%p2913) target = $region138
        $region137: #{tpu_custom_call.1} parent=117 // pred_region
          %s2916 = smul.u32 2, %s24
          %s2918 = ssub.s32 256, 256
          %2919 = vsyncadd %s2909, %s2918
          %s2920 = smul.addr %s2916, 128
          %s2921 = scalar_lea.hbm %s6, %s2920
          %s2922 = sshll.u32 %s2912, 4
          %s2923 = int_to_ptr.vmem [resolvable:$true] %s2922
          %2928 = dma.vmem_to_hbm [thread:$0]  %s2923, 256, %s2921, %s2909, 128, 128, 8
        $region138: #{tpu_custom_call.1} parent=117 // pred_fallthru
          _
      $region118: #{tpu_custom_call.1} parent=5 // pred_fallthru
        _
      %p2929 = scmp.le.s32.totalorder 2, %s15
      // Predicated region
      $region139: #{tpu_custom_call.1} parent=5 // pred_check
        %p2930 = pneg %p2929
      $region140: #{tpu_custom_call.1} parent=5 // pred_check_branch
        %2932 = sbr.rel (%p2930) target = $region142
      $region141: #{tpu_custom_call.1} parent=5 // pred_region
        %s2933 = ssub.s32 %s15, 2
        // Predicated region
        $region143: #{tpu_custom_call.1} parent=141 // pred_check
          %p2934 = pneg %p198
        $region144: #{tpu_custom_call.1} parent=141 // pred_check_branch
          %2936 = sbr.rel (%p2934) target = $region146
        $region145: #{tpu_custom_call.1} parent=141 // pred_region
          %s2937 = sand.u32 %s183, 1
          %s2938 = scalar_lea.sflag [#allocation9], %s2937
          %s2939 = sand.u32 %s183, 1
          %s2940 = smul.addr %s2939, 16
          %s2941 = scalar_lea.vmem [#allocation8], %s2940
          %2942 = dma.done %s2938, 256
        $region146: #{tpu_custom_call.1} parent=141 // pred_fallthru
          _
      $region142: #{tpu_custom_call.1} parent=5 // pred_fallthru
        _
    $region6: #{tpu_custom_call.1} parent=1 // loop_footer
      %s19 = sadd.s32 1, %s15
    $region7: #{tpu_custom_call.1} parent=1 // loop_footer_branch
      %14 = sbr.rel target = $region3
    $region8: #{tpu_custom_call.1} parent=1 // loop_exit
      _
    %2943 = vsyncpa [#allocation9], 1
    %s2944 = scalar_lea.sflag [#allocation9], 1
    %2945 = vsyncpa %s2944, 1

</llo_original>
